<compile_context>
chip_gen: v7x
topology: tpu7x:2x2x1
jax: 0.10.0
libtpu: 0.0.40
codegen_flags: <defaults>
</compile_context>

<pallas_src>
import jax
import jax.numpy as jnp
from jax.experimental import pallas as pl
from jax.experimental.pallas import tpu as pltpu

_LANE = 128


def _round_up(x, m):
    return (x + m - 1) // m * m


def _vmem_estimate(TH, W, Wp, Cin_p, TCo, dmax, taps_per_pack, itemsize):
    """Approximate per-step VMEM residency of the kernel (bytes)."""
    w_block = 2 * 9 * Cin_p * TCo * itemsize            # double-buffered
    b_block = 2 * TCo * 4
    o_block = 2 * TH * W * TCo * itemsize                # double-buffered
    x_slab = (TH + 2 * dmax) * Wp * Cin_p * itemsize     # manual DMA, 1 buffer
    lhs = TH * W * taps_per_pack * Cin_p * itemsize
    acc = TH * W * TCo * 4
    return w_block + b_block + o_block + x_slab + lhs + acc


def _make_kernel(W, Cin_p, TH, TCo, S, dmax, taps_per_pack, precision,
                 out_dtype):
    """Builds the kernel body. Grid = (N, H//TH, Cout_p//TCo, S)."""

    def kernel(dil_ref, x_hbm, w_ref, b_ref, o_ref,
               x_slab, dma_sem, lhs_ref, acc_ref):
        # dil_ref : SMEM (S,) int32              per-stage dilation
        # x_hbm   : HBM  (N, Hp, Wp, Cin_p)      zero-padded NHWC input
        # w_ref   : VMEM (1, 9*Cin_p, TCo)       this stage's im2col weights
        # b_ref   : VMEM (1, TCo) f32            sum of all stage biases
        # o_ref   : VMEM (1, TH, W, TCo)         output row-tile
        # x_slab  : VMEM (TH+2*dmax, Wp, Cin_p)  manually DMA'd input row slab
        # lhs_ref : VMEM (TH, W, KP*Cin_p)       im2col pack buffer
        # acc_ref : VMEM (TH, W, TCo) f32        stage accumulator
        n = pl.program_id(0)
        h = pl.program_id(1)
        s = pl.program_id(3)

        # New (n, h[, co]) tile: fetch the input row slab (with dmax halo) and
        # zero the accumulator.  Issued at every stage==0 so it stays correct
        # even if megacore shards the co axis; Cout_p//TCo is 1 for typical
        # ASPP so the re-fetch is not redundant in practice.
        @pl.when(s == 0)
        def _():
            cp = pltpu.make_async_copy(
                x_hbm.at[n, pl.ds(h * TH, TH + 2 * dmax)], x_slab, dma_sem)
            cp.start()
            cp.wait()
            acc_ref[...] = jnp.zeros_like(acc_ref)

        d = dil_ref[s]                       # this stage's dilation (runtime)

        def pack_tap(ky, kx, slot):
            # Output (r, c) reads padded input (r + dmax + (ky-1)*d,
            # c + dmax + (kx-1)*d); relative to the slab start that is a
            # (TH, W) window at the offsets below.
            y0 = dmax + (ky - 1) * d
            x0 = dmax + (kx - 1) * d
            # TODO(synk): aligned load + pltpu.roll along W would avoid the
            # sublane-misaligned slice (matters most on v5e's 1 store port).
            lhs_ref[:, :, slot * Cin_p:(slot + 1) * Cin_p] = (
                x_slab[pl.ds(y0, TH), pl.ds(x0, W), :])

        def contract(rhs):
            acc_ref[...] += jax.lax.dot_general(
                lhs_ref[...], rhs,
                dimension_numbers=(((2,), (0,)), ((), ())),
                preferred_element_type=jnp.float32,
                precision=precision)

        if taps_per_pack == 9:
            # One wide MXU matmul per stage: K = 9*Cin_p.
            for ky in range(3):
                for kx in range(3):
                    pack_tap(ky, kx, ky * 3 + kx)
            contract(w_ref[0])
        else:
            # One ky row at a time: K = 3*Cin_p, 3x smaller im2col scratch.
            for ky in range(3):
                for kx in range(3):
                    pack_tap(ky, kx, kx)
                contract(w_ref[0, ky * 3 * Cin_p:(ky + 1) * 3 * Cin_p, :])

        @pl.when(s == S - 1)
        def _():
            o_ref[0] = (acc_ref[...]
                        + b_ref[...].astype(jnp.float32)).astype(out_dtype)

    return kernel


def aspp_forward(x_nchw, weights_oihw, biases, dilations, *,
                 th=None, taps_per_pack=None, tco=None,
                 vmem_budget_bytes=None, precision=None):
    """ASPP forward.  x_nchw: (N, Cin, H, W); weights: list of (Cout, Cin, 3, 3).

    `precision` is forwarded to the MXU dots (pass jax.lax.Precision.HIGHEST
    for f32-faithful results; the MXU default is bf16-class for f32 inputs).
    """
    N, Cin, H, W = x_nchw.shape
    Cout = weights_oihw[0].shape[0]
    S = len(dilations)
    dmax = max(dilations)
    dtype = x_nchw.dtype
    itemsize = jnp.dtype(dtype).itemsize

    Cin_p = _round_up(Cin, _LANE)
    Cout_p = _round_up(Cout, _LANE)
    Wp = W + 2 * dmax

    # --- Tiling selection from a VMEM budget (generation-aware when possible).
    if vmem_budget_bytes is None:
        try:
            cap = int(pltpu.get_tpu_info().vmem_capacity_bytes)
        except Exception:
            cap = 64 << 20                   # conservative (v7x-sized) default
        vmem_budget_bytes = int(cap * 0.7)

    if tco is None:
        # Prefer one Cout tile so the im2col buffer is not rebuilt per co tile.
        if 2 * 9 * Cin_p * Cout_p * itemsize <= max(vmem_budget_bytes // 3,
                                                    8 << 20):
            tco = Cout_p
        elif Cout_p % 256 == 0:
            tco = 256
        else:
            tco = _LANE
    TCo = tco

    th_candidates = ([t for t in range(H, 0, -1) if H % t == 0]
                     if th is None else [th])
    kp_candidates = [9, 3] if taps_per_pack is None else [taps_per_pack]
    TH, KP = th_candidates[-1], kp_candidates[-1]
    for t in th_candidates:                  # prefer large row tiles, wide K
        fits = [kp for kp in kp_candidates
                if _vmem_estimate(t, W, Wp, Cin_p, TCo, dmax, kp,
                                  itemsize) <= vmem_budget_bytes]
        if fits:
            TH, KP = t, fits[0]
            break
    assert H % TH == 0 and Cout_p % TCo == 0

    est = _vmem_estimate(TH, W, Wp, Cin_p, TCo, dmax, KP, itemsize)
    vmem_limit = int(max(32 << 20, min(100 << 20, est + (8 << 20))))

    # --- Layout plumbing (wrapper-side, done once).
    # NCHW -> NHWC, single fused pad: zero spatial halo (PyTorch's default
    # padding_mode='zeros') + channel pad to a lane multiple.
    x_nhwc = jnp.transpose(x_nchw, (0, 2, 3, 1))
    x_pad = jnp.pad(x_nhwc,
                    ((0, 0), (dmax, dmax), (dmax, dmax), (0, Cin_p - Cin)))

    # Weights OIHW -> (ky, kx, Cin, Cout), pad channels, flatten the 9 taps
    # into the contraction dim -> (S, 9*Cin_p, Cout_p).  Row order (ky, kx,
    # cin) matches the kernel's im2col packing order.
    w_hwio = jnp.stack([jnp.transpose(w, (2, 3, 1, 0)) for w in weights_oihw],
                       axis=0)
    w_hwio = jnp.pad(w_hwio, ((0, 0), (0, 0), (0, 0),
                              (0, Cin_p - Cin), (0, Cout_p - Cout)))
    w_stack = w_hwio.reshape(S, 9 * Cin_p, Cout_p).astype(dtype)

    # Bias work hoisted: all stages share one bias add, so pre-sum it.
    b_sum = jnp.sum(jnp.stack(biases, axis=0).astype(jnp.float32), axis=0)
    b_sum = jnp.pad(b_sum, (0, Cout_p - Cout)).reshape(1, Cout_p)

    dil_arr = jnp.asarray(dilations, dtype=jnp.int32)

    kernel = _make_kernel(W, Cin_p, TH, TCo, S, dmax, KP, precision, dtype)

    out_nhwc = pl.pallas_call(
        kernel,
        out_shape=jax.ShapeDtypeStruct((N, H, W, Cout_p), dtype),
        grid_spec=pltpu.PrefetchScalarGridSpec(
            num_scalar_prefetch=1,
            grid=(N, H // TH, Cout_p // TCo, S),
            in_specs=[
                pl.BlockSpec(memory_space=pl.ANY),   # padded x stays in HBM
                pl.BlockSpec((1, 9 * Cin_p, TCo),
                             lambda n, h, co, s, dil: (s, 0, co)),
                pl.BlockSpec((1, TCo), lambda n, h, co, s, dil: (0, co)),
            ],
            out_specs=pl.BlockSpec((1, TH, W, TCo),
                                   lambda n, h, co, s, dil: (n, h, 0, co)),
            scratch_shapes=[
                pltpu.VMEM((TH + 2 * dmax, Wp, Cin_p), dtype),   # x row slab
                pltpu.SemaphoreType.DMA(()),
                pltpu.VMEM((TH, W, KP * Cin_p), dtype),          # im2col pack
                pltpu.VMEM((TH, W, TCo), jnp.float32),           # accumulator
            ],
        ),
        compiler_params=pltpu.CompilerParams(
            dimension_semantics=("parallel", "parallel", "parallel",
                                 "arbitrary"),
            vmem_limit_bytes=vmem_limit,
        ),
    )(dil_arr, x_pad, w_stack, b_sum)

    # TODO(synk): skip this NHWC->NCHW transpose + pad strip (a full-output
    # HBM round trip) when the consumer accepts NHWC / lane-padded Cout.
    return jnp.transpose(out_nhwc[..., :Cout], (0, 3, 1, 2))


def aspp_reference(x_nchw, weights_oihw, biases, dilations):
    """Pure-JAX reference (lax.conv_general_dilated), NCHW like PyTorch."""
    out = None
    for w, b, d in zip(weights_oihw, biases, dilations):
        y = jax.lax.conv_general_dilated(
            x_nchw.astype(jnp.float32), w.astype(jnp.float32),
            window_strides=(1, 1), padding=[(d, d), (d, d)],
            rhs_dilation=(d, d),
            dimension_numbers=("NCHW", "OIHW", "NCHW"),
        ) + b.astype(jnp.float32)[None, :, None, None]
        out = y if out is None else out + y
    return out.astype(x_nchw.dtype)


def _bf16_grid(a):
    # Round test inputs to bf16-representable f32 values so the MXU's
    # bf16-class default-precision passes are exact and the correctness check
    # is independent of matmul precision (see review's precision concern).
    return a.astype(jnp.bfloat16).astype(jnp.float32)


if __name__ == "__main__":
    # Small, module-consistent shapes.
    N, Cin, H, W = 2, 4, 16, 16
    Cout = 8
    pyramids = [1, 2, 4]          # dilation == padding, as in _ASPPModule

    key = jax.random.PRNGKey(0)
    kx, kb, *kws = jax.random.split(key, 2 + len(pyramids))

    x = _bf16_grid(jax.random.normal(kx, (N, Cin, H, W), dtype=jnp.float32))
    # Module init: weight ~ N(0, 0.01^2), bias = 0.  Small nonzero biases are
    # used here so the bias path is exercised (forward semantics identical).
    weights = [
        _bf16_grid(0.01 * jax.random.normal(k, (Cout, Cin, 3, 3), jnp.float32))
        for k in kws
    ]
    bkeys = jax.random.split(kb, len(pyramids))
    biases = [
        _bf16_grid(0.01 * jax.random.normal(k, (Cout,), jnp.float32))
        for k in bkeys
    ]

    ref = aspp_reference(x, weights, biases, pyramids)

    # Default tiling: whole-H row tile, 9-tap wide-K pack at these shapes.
    out = jax.block_until_ready(aspp_forward(x, weights, biases, pyramids))
    assert out.shape == (N, Cout, H, W)
    assert jnp.allclose(out, ref, rtol=1e-4, atol=1e-5), (
        float(jnp.max(jnp.abs(out - ref))))

    # Also exercise the H-tiled + 3-tap-pack path (what VMEM-tight shapes,
    # e.g. production ASPP on v7x, would select).
    out2 = jax.block_until_ready(
        aspp_forward(x, weights, biases, pyramids, th=8, taps_per_pack=3))
    assert jnp.allclose(out2, ref, rtol=1e-4, atol=1e-5), (
        float(jnp.max(jnp.abs(out2 - ref))))

    print("KERNEL_OK")
</pallas_src>

<mosaic_0001>
module attributes {stable_mosaic.version = 11 : i64} {
  func.func @kernel(%arg0: i32, %arg1: i32, %arg2: i32, %arg3: i32, %arg4: memref<3xi32, #tpu.memory_space<smem>>, %arg5: memref<2x24x24x128xf32, #tpu.memory_space<any>>, %arg6: memref<1x1152x128xf32, #tpu.memory_space<vmem>>, %arg7: memref<1x128xf32, #tpu.memory_space<vmem>>, %arg8: memref<1x16x16x128xf32, #tpu.memory_space<vmem>>, %arg9: memref<24x24x128xf32, #tpu.memory_space<vmem>>, %arg10: memref<!tpu.dma_semaphore, #tpu.memory_space<semaphore_mem>>, %arg11: memref<16x16x1152xf32, #tpu.memory_space<vmem>>, %arg12: memref<16x16x128xf32, #tpu.memory_space<vmem>>) attributes {dimension_semantics = [#tpu.dimension_semantics<parallel>, #tpu.dimension_semantics<parallel>, #tpu.dimension_semantics<parallel>, #tpu.dimension_semantics<arbitrary>], iteration_bounds = array<i64: 2, 1, 1, 3>, scalar_prefetch = 1 : i64, scratch_operands = 4 : i64, tpu.core_type = #tpu.core_type<tc>, window_params = [{}, {transform_indices = @transform_1, window_bounds = array<i64: 1, 1152, 128>}, {transform_indices = @transform_2, window_bounds = array<i64: 1, 128>}, {transform_indices = @transform_3, window_bounds = array<i64: 1, 16, 16, 128>}]} {
    %c0_i32 = arith.constant 0 : i32
    %0 = arith.cmpi eq, %arg3, %c0_i32 : i32
    %1 = arith.extui %0 : i1 to i32
    %c0_i32_0 = arith.constant 0 : i32
    %2 = arith.cmpi ne, %1, %c0_i32_0 : i32
    scf.if %2 {
      %c16_i32 = arith.constant 16 : i32
      %87 = arith.muli %arg1, %c16_i32 : i32
      %c0_i32_74 = arith.constant 0 : i32
      %c0_i32_75 = arith.constant 0 : i32
      %88 = tpu.memref_slice %arg5[%arg0, %87, %c0_i32_74, %c0_i32_75] : memref<2x24x24x128xf32, #tpu.memory_space<any>> -> memref<1x24x24x128xf32, #tpu.memory_space<any>>
      %89 = tpu.memref_squeeze %88 : memref<1x24x24x128xf32, #tpu.memory_space<any>> -> memref<24x24x128xf32, #tpu.memory_space<any>>
      tpu.enqueue_dma source(%89 : memref<24x24x128xf32, #tpu.memory_space<any>>) target(%arg9 : memref<24x24x128xf32, #tpu.memory_space<vmem>>) target_semaphore(%arg10 : memref<!tpu.dma_semaphore, #tpu.memory_space<semaphore_mem>>)
      %c0_i32_76 = arith.constant 0 : i32
      %c0_i32_77 = arith.constant 0 : i32
      %90 = tpu.memref_slice %arg5[%arg0, %87, %c0_i32_76, %c0_i32_77] : memref<2x24x24x128xf32, #tpu.memory_space<any>> -> memref<1x24x24x128xf32, #tpu.memory_space<any>>
      %91 = tpu.memref_squeeze %90 : memref<1x24x24x128xf32, #tpu.memory_space<any>> -> memref<24x24x128xf32, #tpu.memory_space<any>>
      tpu.wait_dma2 semaphore(%arg10 : memref<!tpu.dma_semaphore, #tpu.memory_space<semaphore_mem>>) src(%91 : memref<24x24x128xf32, #tpu.memory_space<any>>) dst(%arg9 : memref<24x24x128xf32, #tpu.memory_space<vmem>>)
      %cst_78 = arith.constant 0.000000e+00 : f32
      %92 = vector.broadcast %cst_78 : f32 to vector<16x16x128xf32>
      %c0_79 = arith.constant 0 : index
      %c0_80 = arith.constant 0 : index
      %c0_81 = arith.constant 0 : index
      %93 = vector.load %arg12[%c0_79, %c0_80, %c0_81] : memref<16x16x128xf32, #tpu.memory_space<vmem>>, vector<16x16x128xf32>
      tpu.vector_store %arg12[%c0_79, %c0_80, %c0_81], %92 {strides = array<i32>} : memref<16x16x128xf32, #tpu.memory_space<vmem>>, vector<16x16x128xf32>,
    } else {
    }
    %3 = arith.index_cast %arg3 : i32 to index
    %4 = memref.load %arg4[%3] : memref<3xi32, #tpu.memory_space<smem>>
    %c-1_i32 = arith.constant -1 : i32
    %5 = arith.muli %c-1_i32, %4 : i32
    %c4_i32 = arith.constant 4 : i32
    %6 = arith.addi %c4_i32, %5 : i32
    %c-1_i32_1 = arith.constant -1 : i32
    %7 = arith.muli %c-1_i32_1, %4 : i32
    %c4_i32_2 = arith.constant 4 : i32
    %8 = arith.addi %c4_i32_2, %7 : i32
    %9 = arith.index_cast %6 : i32 to index
    %10 = arith.index_cast %8 : i32 to index
    %c0 = arith.constant 0 : index
    %11 = vector.load %arg9[%9, %10, %c0] : memref<24x24x128xf32, #tpu.memory_space<vmem>>, vector<16x16x128xf32>
    %c0_3 = arith.constant 0 : index
    %c0_4 = arith.constant 0 : index
    %c0_5 = arith.constant 0 : index
    %12 = vector.load %arg11[%c0_3, %c0_4, %c0_5] : memref<16x16x1152xf32, #tpu.memory_space<vmem>>, vector<16x16x128xf32>
    tpu.vector_store %arg11[%c0_3, %c0_4, %c0_5], %11 {strides = array<i32>} : memref<16x16x1152xf32, #tpu.memory_space<vmem>>, vector<16x16x128xf32>,
    %c-1_i32_6 = arith.constant -1 : i32
    %13 = arith.muli %c-1_i32_6, %4 : i32
    %c4_i32_7 = arith.constant 4 : i32
    %14 = arith.addi %c4_i32_7, %13 : i32
    %c0_i32_8 = arith.constant 0 : i32
    %15 = arith.muli %c0_i32_8, %4 : i32
    %c4_i32_9 = arith.constant 4 : i32
    %16 = arith.addi %c4_i32_9, %15 : i32
    %17 = arith.index_cast %14 : i32 to index
    %18 = arith.index_cast %16 : i32 to index
    %c0_10 = arith.constant 0 : index
    %19 = vector.load %arg9[%17, %18, %c0_10] : memref<24x24x128xf32, #tpu.memory_space<vmem>>, vector<16x16x128xf32>
    %c0_11 = arith.constant 0 : index
    %c0_12 = arith.constant 0 : index
    %c128 = arith.constant 128 : index
    %20 = vector.load %arg11[%c0_11, %c0_12, %c128] : memref<16x16x1152xf32, #tpu.memory_space<vmem>>, vector<16x16x128xf32>
    tpu.vector_store %arg11[%c0_11, %c0_12, %c128], %19 {strides = array<i32>} : memref<16x16x1152xf32, #tpu.memory_space<vmem>>, vector<16x16x128xf32>,
    %c-1_i32_13 = arith.constant -1 : i32
    %21 = arith.muli %c-1_i32_13, %4 : i32
    %c4_i32_14 = arith.constant 4 : i32
    %22 = arith.addi %c4_i32_14, %21 : i32
    %c1_i32 = arith.constant 1 : i32
    %23 = arith.muli %c1_i32, %4 : i32
    %c4_i32_15 = arith.constant 4 : i32
    %24 = arith.addi %c4_i32_15, %23 : i32
    %25 = arith.index_cast %22 : i32 to index
    %26 = arith.index_cast %24 : i32 to index
    %c0_16 = arith.constant 0 : index
    %27 = vector.load %arg9[%25, %26, %c0_16] : memref<24x24x128xf32, #tpu.memory_space<vmem>>, vector<16x16x128xf32>
    %c0_17 = arith.constant 0 : index
    %c0_18 = arith.constant 0 : index
    %c256 = arith.constant 256 : index
    %28 = vector.load %arg11[%c0_17, %c0_18, %c256] : memref<16x16x1152xf32, #tpu.memory_space<vmem>>, vector<16x16x128xf32>
    tpu.vector_store %arg11[%c0_17, %c0_18, %c256], %27 {strides = array<i32>} : memref<16x16x1152xf32, #tpu.memory_space<vmem>>, vector<16x16x128xf32>,
    %c0_i32_19 = arith.constant 0 : i32
    %29 = arith.muli %c0_i32_19, %4 : i32
    %c4_i32_20 = arith.constant 4 : i32
    %30 = arith.addi %c4_i32_20, %29 : i32
    %c-1_i32_21 = arith.constant -1 : i32
    %31 = arith.muli %c-1_i32_21, %4 : i32
    %c4_i32_22 = arith.constant 4 : i32
    %32 = arith.addi %c4_i32_22, %31 : i32
    %33 = arith.index_cast %30 : i32 to index
    %34 = arith.index_cast %32 : i32 to index
    %c0_23 = arith.constant 0 : index
    %35 = vector.load %arg9[%33, %34, %c0_23] : memref<24x24x128xf32, #tpu.memory_space<vmem>>, vector<16x16x128xf32>
    %c0_24 = arith.constant 0 : index
    %c0_25 = arith.constant 0 : index
    %c384 = arith.constant 384 : index
    %36 = vector.load %arg11[%c0_24, %c0_25, %c384] : memref<16x16x1152xf32, #tpu.memory_space<vmem>>, vector<16x16x128xf32>
    tpu.vector_store %arg11[%c0_24, %c0_25, %c384], %35 {strides = array<i32>} : memref<16x16x1152xf32, #tpu.memory_space<vmem>>, vector<16x16x128xf32>,
    %c0_i32_26 = arith.constant 0 : i32
    %37 = arith.muli %c0_i32_26, %4 : i32
    %c4_i32_27 = arith.constant 4 : i32
    %38 = arith.addi %c4_i32_27, %37 : i32
    %c0_i32_28 = arith.constant 0 : i32
    %39 = arith.muli %c0_i32_28, %4 : i32
    %c4_i32_29 = arith.constant 4 : i32
    %40 = arith.addi %c4_i32_29, %39 : i32
    %41 = arith.index_cast %38 : i32 to index
    %42 = arith.index_cast %40 : i32 to index
    %c0_30 = arith.constant 0 : index
    %43 = vector.load %arg9[%41, %42, %c0_30] : memref<24x24x128xf32, #tpu.memory_space<vmem>>, vector<16x16x128xf32>
    %c0_31 = arith.constant 0 : index
    %c0_32 = arith.constant 0 : index
    %c512 = arith.constant 512 : index
    %44 = vector.load %arg11[%c0_31, %c0_32, %c512] : memref<16x16x1152xf32, #tpu.memory_space<vmem>>, vector<16x16x128xf32>
    tpu.vector_store %arg11[%c0_31, %c0_32, %c512], %43 {strides = array<i32>} : memref<16x16x1152xf32, #tpu.memory_space<vmem>>, vector<16x16x128xf32>,
    %c0_i32_33 = arith.constant 0 : i32
    %45 = arith.muli %c0_i32_33, %4 : i32
    %c4_i32_34 = arith.constant 4 : i32
    %46 = arith.addi %c4_i32_34, %45 : i32
    %c1_i32_35 = arith.constant 1 : i32
    %47 = arith.muli %c1_i32_35, %4 : i32
    %c4_i32_36 = arith.constant 4 : i32
    %48 = arith.addi %c4_i32_36, %47 : i32
    %49 = arith.index_cast %46 : i32 to index
    %50 = arith.index_cast %48 : i32 to index
    %c0_37 = arith.constant 0 : index
    %51 = vector.load %arg9[%49, %50, %c0_37] : memref<24x24x128xf32, #tpu.memory_space<vmem>>, vector<16x16x128xf32>
    %c0_38 = arith.constant 0 : index
    %c0_39 = arith.constant 0 : index
    %c640 = arith.constant 640 : index
    %52 = vector.load %arg11[%c0_38, %c0_39, %c640] : memref<16x16x1152xf32, #tpu.memory_space<vmem>>, vector<16x16x128xf32>
    tpu.vector_store %arg11[%c0_38, %c0_39, %c640], %51 {strides = array<i32>} : memref<16x16x1152xf32, #tpu.memory_space<vmem>>, vector<16x16x128xf32>,
    %c1_i32_40 = arith.constant 1 : i32
    %53 = arith.muli %c1_i32_40, %4 : i32
    %c4_i32_41 = arith.constant 4 : i32
    %54 = arith.addi %c4_i32_41, %53 : i32
    %c-1_i32_42 = arith.constant -1 : i32
    %55 = arith.muli %c-1_i32_42, %4 : i32
    %c4_i32_43 = arith.constant 4 : i32
    %56 = arith.addi %c4_i32_43, %55 : i32
    %57 = arith.index_cast %54 : i32 to index
    %58 = arith.index_cast %56 : i32 to index
    %c0_44 = arith.constant 0 : index
    %59 = vector.load %arg9[%57, %58, %c0_44] : memref<24x24x128xf32, #tpu.memory_space<vmem>>, vector<16x16x128xf32>
    %c0_45 = arith.constant 0 : index
    %c0_46 = arith.constant 0 : index
    %c768 = arith.constant 768 : index
    %60 = vector.load %arg11[%c0_45, %c0_46, %c768] : memref<16x16x1152xf32, #tpu.memory_space<vmem>>, vector<16x16x128xf32>
    tpu.vector_store %arg11[%c0_45, %c0_46, %c768], %59 {strides = array<i32>} : memref<16x16x1152xf32, #tpu.memory_space<vmem>>, vector<16x16x128xf32>,
    %c1_i32_47 = arith.constant 1 : i32
    %61 = arith.muli %c1_i32_47, %4 : i32
    %c4_i32_48 = arith.constant 4 : i32
    %62 = arith.addi %c4_i32_48, %61 : i32
    %c0_i32_49 = arith.constant 0 : i32
    %63 = arith.muli %c0_i32_49, %4 : i32
    %c4_i32_50 = arith.constant 4 : i32
    %64 = arith.addi %c4_i32_50, %63 : i32
    %65 = arith.index_cast %62 : i32 to index
    %66 = arith.index_cast %64 : i32 to index
    %c0_51 = arith.constant 0 : index
    %67 = vector.load %arg9[%65, %66, %c0_51] : memref<24x24x128xf32, #tpu.memory_space<vmem>>, vector<16x16x128xf32>
    %c0_52 = arith.constant 0 : index
    %c0_53 = arith.constant 0 : index
    %c896 = arith.constant 896 : index
    %68 = vector.load %arg11[%c0_52, %c0_53, %c896] : memref<16x16x1152xf32, #tpu.memory_space<vmem>>, vector<16x16x128xf32>
    tpu.vector_store %arg11[%c0_52, %c0_53, %c896], %67 {strides = array<i32>} : memref<16x16x1152xf32, #tpu.memory_space<vmem>>, vector<16x16x128xf32>,
    %c1_i32_54 = arith.constant 1 : i32
    %69 = arith.muli %c1_i32_54, %4 : i32
    %c4_i32_55 = arith.constant 4 : i32
    %70 = arith.addi %c4_i32_55, %69 : i32
    %c1_i32_56 = arith.constant 1 : i32
    %71 = arith.muli %c1_i32_56, %4 : i32
    %c4_i32_57 = arith.constant 4 : i32
    %72 = arith.addi %c4_i32_57, %71 : i32
    %73 = arith.index_cast %70 : i32 to index
    %74 = arith.index_cast %72 : i32 to index
    %c0_58 = arith.constant 0 : index
    %75 = vector.load %arg9[%73, %74, %c0_58] : memref<24x24x128xf32, #tpu.memory_space<vmem>>, vector<16x16x128xf32>
    %c0_59 = arith.constant 0 : index
    %c0_60 = arith.constant 0 : index
    %c1024 = arith.constant 1024 : index
    %76 = vector.load %arg11[%c0_59, %c0_60, %c1024] : memref<16x16x1152xf32, #tpu.memory_space<vmem>>, vector<16x16x128xf32>
    tpu.vector_store %arg11[%c0_59, %c0_60, %c1024], %75 {strides = array<i32>} : memref<16x16x1152xf32, #tpu.memory_space<vmem>>, vector<16x16x128xf32>,
    %c0_61 = arith.constant 0 : index
    %c0_62 = arith.constant 0 : index
    %c0_63 = arith.constant 0 : index
    %77 = vector.load %arg6[%c0_61, %c0_62, %c0_63] : memref<1x1152x128xf32, #tpu.memory_space<vmem>>, vector<1x1152x128xf32>
    %78 = vector.shape_cast %77 : vector<1x1152x128xf32> to vector<1152x128xf32>
    %c0_64 = arith.constant 0 : index
    %c0_65 = arith.constant 0 : index
    %c0_66 = arith.constant 0 : index
    %79 = vector.load %arg12[%c0_64, %c0_65, %c0_66] : memref<16x16x128xf32, #tpu.memory_space<vmem>>, vector<16x16x128xf32>
    %c0_67 = arith.constant 0 : index
    %c0_68 = arith.constant 0 : index
    %c0_69 = arith.constant 0 : index
    %80 = vector.load %arg11[%c0_67, %c0_68, %c0_69] : memref<16x16x1152xf32, #tpu.memory_space<vmem>>, vector<16x16x1152xf32>
    %cst = arith.constant dense<0.000000e+00> : vector<16x16x128xf32>
    %81 = tpu.matmul %80, %78, %cst {dimension_numbers = #tpu.dot_dimension_numbers<[2], [0], [0, 1], [1], [0, 0, 0, 1, 1, 1], [], []>} : vector<16x16x1152xf32>, vector<1152x128xf32>, vector<16x16x128xf32> -> vector<16x16x128xf32>
    %82 = arith.addf %79, %81 : vector<16x16x128xf32>
    %c0_70 = arith.constant 0 : index
    %c0_71 = arith.constant 0 : index
    %c0_72 = arith.constant 0 : index
    %83 = vector.load %arg12[%c0_70, %c0_71, %c0_72] : memref<16x16x128xf32, #tpu.memory_space<vmem>>, vector<16x16x128xf32>
    tpu.vector_store %arg12[%c0_70, %c0_71, %c0_72], %82 {strides = array<i32>} : memref<16x16x128xf32, #tpu.memory_space<vmem>>, vector<16x16x128xf32>,
    %c2_i32 = arith.constant 2 : i32
    %84 = arith.cmpi eq, %arg3, %c2_i32 : i32
    %85 = arith.extui %84 : i1 to i32
    %c0_i32_73 = arith.constant 0 : i32
    %86 = arith.cmpi ne, %85, %c0_i32_73 : i32
    scf.if %86 {
      %c0_74 = arith.constant 0 : index
      %c0_75 = arith.constant 0 : index
      %c0_76 = arith.constant 0 : index
      %87 = vector.load %arg12[%c0_74, %c0_75, %c0_76] : memref<16x16x128xf32, #tpu.memory_space<vmem>>, vector<16x16x128xf32>
      %c0_77 = arith.constant 0 : index
      %c0_78 = arith.constant 0 : index
      %88 = vector.load %arg7[%c0_77, %c0_78] : memref<1x128xf32, #tpu.memory_space<vmem>>, vector<1x128xf32>
      %89 = vector.shape_cast %88 : vector<1x128xf32> to vector<1x1x128xf32>
      %90 = vector.broadcast %89 : vector<1x1x128xf32> to vector<16x16x128xf32>
      %91 = arith.addf %87, %90 : vector<16x16x128xf32>
      %c0_79 = arith.constant 0 : index
      %c0_80 = arith.constant 0 : index
      %c0_81 = arith.constant 0 : index
      %c0_82 = arith.constant 0 : index
      %92 = vector.load %arg8[%c0_79, %c0_80, %c0_81, %c0_82] : memref<1x16x16x128xf32, #tpu.memory_space<vmem>>, vector<1x16x16x128xf32>
      %93 = vector.shape_cast %92 : vector<1x16x16x128xf32> to vector<16x16x128xf32>
      %94 = vector.shape_cast %91 : vector<16x16x128xf32> to vector<1x16x16x128xf32>
      tpu.vector_store %arg8[%c0_79, %c0_80, %c0_81, %c0_82], %94 {strides = array<i32>} : memref<1x16x16x128xf32, #tpu.memory_space<vmem>>, vector<1x16x16x128xf32>,
    } else {
    }
    return
  }
  func.func @transform_1(%arg0: i32, %arg1: i32, %arg2: i32, %arg3: i32, %arg4: memref<3xi32, #tpu.memory_space<smem>>) -> (i32, i32, i32) {
    %c0_i32 = arith.constant 0 : i32
    %c0_i32_0 = arith.constant 0 : i32
    return %arg3, %c0_i32, %arg2 : i32, i32, i32
  }
  func.func @transform_2(%arg0: i32, %arg1: i32, %arg2: i32, %arg3: i32, %arg4: memref<3xi32, #tpu.memory_space<smem>>) -> (i32, i32) {
    %c0_i32 = arith.constant 0 : i32
    %c0_i32_0 = arith.constant 0 : i32
    return %c0_i32, %arg2 : i32, i32
  }
  func.func @transform_3(%arg0: i32, %arg1: i32, %arg2: i32, %arg3: i32, %arg4: memref<3xi32, #tpu.memory_space<smem>>) -> (i32, i32, i32, i32) {
    %c0_i32 = arith.constant 0 : i32
    %c0_i32_0 = arith.constant 0 : i32
    return %arg0, %arg1, %c0_i32, %arg2 : i32, i32, i32, i32
  }
}

</mosaic_0001>

<llo_original>
// kernel: tpu_custom_call.1
$region0: #{tpu_custom_call.1}
  #allocation0 [shape = 'u32[]', space=smem, size = 0x4, offset = 0x4, fixed_abs, tag = 'smem constant byte address 0x4 - core index']
  #allocation1 [shape = 'u32[144,128]{1,0:T(1,128)}', space=vmem, size = 0x12000, scoped, tag = 'internal scratch']
  #allocation2 [shape = 'f32[24,24,128]{2,1,0:T(8,128)}', space=vmem, size = 0x48000, scoped, tag = 'scratch operand']
  #allocation3 [shape = 's32[1]{0}', space=sflag, size = 0x4, scoped, tag = 'scratch operand']
  #allocation4 [shape = 'f32[16,16,1152]{2,1,0:T(8,128)}', space=vmem, size = 0x120000, scoped, tag = 'scratch operand']
  #allocation5 [shape = 'f32[16,16,128]{2,1,0:T(8,128)}', space=vmem, size = 0x20000, scoped, tag = 'scratch operand']
  #allocation6 [shape = 's32[1]{0}', space=sflag, size = 0x4, scoped, tag = 'scoped memory for tpu_custom_call.1']
  #allocation7 [shape = 'u8[512]{0}', space=smem, size = 0x200, scoped, tag = 'prefetched SMEM operand 0']
  #allocation14 [shape = 's32[]', space=sflag, size = 0x4, offset = 0, fixed_abs, tag = 'sflag constant byte address 0x0 - dummy sync flag']
  #allocation15 [shape = 's32[]', space=sflag, size = 0x4, offset = 0, fixed_abs, tag = 'sflag constant byte address 0x0 - dummy sync flag']
  #allocation16 [shape = 'u32[]', space=smem, size = 0x4, offset = 0x44, fixed_abs, tag = 'smem constant byte address 0x44 - assertion arg 0']
  #allocation17 [shape = 'u32[]', space=smem, size = 0x4, offset = 0x48, fixed_abs, tag = 'smem constant byte address 0x48 - assertion arg 1']
  %s0 = inlined_call_operand.hbm [shape: s32[3], index: 0, kind: input, shape index: {}]
  %s1 = inlined_call_operand.hbm [shape: f32[2,24,24,128], index: 1, kind: input, shape index: {}]
  %s2 = inlined_call_operand.hbm [shape: f32[3,1152,128], index: 2, kind: input, shape index: {}]
  %s3 = inlined_call_operand.hbm [shape: f32[1,128], index: 3, kind: input, shape index: {}]
  %s4 = inlined_call_operand.hbm [shape: f32[2,16,16,128], index: 4, kind: output, shape index: {}]
  %s5 = sld [smem:[#allocation0]]
  $region61: #{tpu_custom_call.1} parent=0
    _
  %s7 = ssub.s32 1, %s5
  %s8 = scalar_select 0, %s7, %s5
  %10 = dma.hbm_to_smem %s0, 16, [#allocation7], [#allocation6]
  %11 = dma.done [#allocation6], 16
  %12 = sfence
  $region1: #{tpu_custom_call.1} parent=0
    #allocation8 [shape = 'u8[1179648]{0}', space=vmem, size = 0x120000, scoped, tag = 'input window, operand 2']
    #allocation9 [shape = 's32[2]{0}', space=sflag, size = 0x8, scoped, tag = 'scoped memory for tpu_custom_call.1']
    #allocation10 [shape = 's32[2]{0}', space=sflag, size = 0x8, scoped, tag = 'scoped memory for tpu_custom_call.1']
    #allocation11 [shape = 'u8[512]{0}', space=vmem, size = 0x400, scoped, tag = 'input window, operand 3, single buffered']
    #allocation12 [shape = 's32[1]{0}', space=sflag, size = 0x4, scoped, tag = 'scoped memory for tpu_custom_call.1']
    #allocation13 [shape = 'u8[262144]{0}', space=vmem, size = 0x40000, scoped, tag = 'output window, operand 0']
    %13 = vsyncpa [#allocation9], 0
    %s14 = scalar_lea.sflag [#allocation9], 1
    %15 = vsyncpa %s14, 0
    %16 = vsyncpa [#allocation12], 0
    %17 = vsyncpa [#allocation10], 0
    %s18 = scalar_lea.sflag [#allocation10], 1
    %19 = vsyncpa %s18, 0
    loop: start=0, step=1, limit=8
    $region2: #{tpu_custom_call.1} parent=1 // loop_pre_header
      _
    $region3: #{tpu_custom_call.1} parent=1 // loop_header
      %s21 = sphi 0, %s25
      %p22 = scmp.ge.s32.totalorder %s21, 8
      %s28 = sphi 0, %s54
      %s29 = sphi 0, %s50
      %s30 = sphi 0, %s46
      %s31 = sphi 0, %s42
      %s32 = sphi 0, %s28
      %s33 = sphi 0, %s29
      %s34 = sphi 0, %s30
      %s35 = sphi 0, %s31
      %s36 = sphi 0, %s32
      %s37 = sphi 0, %s33
      %s38 = sphi 0, %s34
      %s39 = sphi 0, %s35
      %s59 = sphi 0, %s61
      %s62 = sphi 0, %s59
      %s63 = sphi 0, %s62
      %s79 = sphi 0, %s63
      %s85 = sphi 0, %s87
      %s88 = sphi 0, %s85
      %s89 = sphi 0, %s88
      %s105 = sphi 0, %s89
      %s115 = sphi 0, %s117
      %s118 = sphi 0, %s115
      %s119 = sphi 0, %s118
      %s135 = sphi 0, %s119
    $region4: #{tpu_custom_call.1} parent=1 // loop_header_branch
      %24 = sbr.rel (%p22) target = $region8
    $region5: #{tpu_custom_call.1} parent=1 // loop_body
      %s26 = ssub.s32 %s21, 1
      %s27 = ssub.s32 %s21, 2
      %s40 = sadd.s32 1, %s31
      %p41 = scmp.ge.s32.totalorder %s40, 3
      %s42 = scalar_select %p41, 0, %s40
      %s43 = sadd.s32 1, %s30
      %s44 = scalar_select %p41, %s43, %s30
      %p45 = scmp.ge.s32.totalorder %s44, 1
      %s46 = scalar_select %p45, 0, %s44
      %s47 = sadd.s32 1, %s29
      %s48 = scalar_select %p45, %s47, %s29
      %p49 = scmp.ge.s32.totalorder %s48, 1
      %s50 = scalar_select %p49, 0, %s48
      %s51 = sadd.s32 1, %s28
      %s52 = scalar_select %p49, %s51, %s28
      %p53 = scmp.ge.s32.totalorder %s52, 2
      %s54 = scalar_select %p53, 0, %s52
      %s55 = ssub.s32 %s31, %s42
      %s56 = ssub.s32 %s30, %s46
      %s57 = sor.u32 %s55, %s56
      %p58 = scmp.eq.s32.totalorder %s57, 0
      %s60 = sadd.s32 %s59, 1
      %s61 = scalar_select %p58, %s59, %s60
      %p64 = pneg %p58
      %p65 = scmp.eq.s32.totalorder %s21, 5
      %p66 = por %p64, %p65
      %p67 = scmp.ne.s32.totalorder %s59, %s62
      %p68 = scmp.eq.s32.totalorder %s21, 0
      %p69 = por %p67, %p68
      %p70 = scmp.ne.s32.totalorder %s59, %s62
      %p71 = scmp.eq.s32.totalorder %s26, 5
      %p72 = por %p70, %p71
      %p73 = scmp.ne.s32.totalorder %s62, %s63
      %p74 = scmp.eq.s32.totalorder %s26, 0
      %p75 = por %p73, %p74
      %p76 = scmp.ne.s32.totalorder %s62, %s63
      %p77 = scmp.eq.s32.totalorder %s27, 5
      %p78 = por %p76, %p77
      %p80 = scmp.ne.s32.totalorder %s63, %s79
      %p81 = scmp.eq.s32.totalorder %s27, 0
      %p82 = por %p80, %p81
      %s83 = ssub.s32 %s30, %s46
      %p84 = scmp.eq.s32.totalorder %s83, 0
      %s86 = sadd.s32 %s85, 1
      %s87 = scalar_select %p84, %s85, %s86
      %p90 = pneg %p84
      %p91 = scmp.eq.s32.totalorder %s21, 5
      %p92 = por %p90, %p91
      %p93 = scmp.ne.s32.totalorder %s85, %s88
      %p94 = scmp.eq.s32.totalorder %s21, 0
      %p95 = por %p93, %p94
      %p96 = scmp.ne.s32.totalorder %s85, %s88
      %p97 = scmp.eq.s32.totalorder %s26, 5
      %p98 = por %p96, %p97
      %p99 = scmp.ne.s32.totalorder %s88, %s89
      %p100 = scmp.eq.s32.totalorder %s26, 0
      %p101 = por %p99, %p100
      %p102 = scmp.ne.s32.totalorder %s88, %s89
      %p103 = scmp.eq.s32.totalorder %s27, 5
      %p104 = por %p102, %p103
      %p106 = scmp.ne.s32.totalorder %s89, %s105
      %p107 = scmp.eq.s32.totalorder %s27, 0
      %p108 = por %p106, %p107
      %s109 = ssub.s32 %s28, %s54
      %s110 = ssub.s32 %s29, %s50
      %s111 = sor.u32 %s109, %s110
      %s112 = ssub.s32 %s30, %s46
      %s113 = sor.u32 %s111, %s112
      %p114 = scmp.eq.s32.totalorder %s113, 0
      %s116 = sadd.s32 %s115, 1
      %s117 = scalar_select %p114, %s115, %s116
      %p120 = pneg %p114
      %p121 = scmp.eq.s32.totalorder %s21, 5
      %p122 = por %p120, %p121
      %p123 = scmp.ne.s32.totalorder %s115, %s118
      %p124 = scmp.eq.s32.totalorder %s21, 0
      %p125 = por %p123, %p124
      %p126 = scmp.ne.s32.totalorder %s115, %s118
      %p127 = scmp.eq.s32.totalorder %s26, 5
      %p128 = por %p126, %p127
      %p129 = scmp.ne.s32.totalorder %s118, %s119
      %p130 = scmp.eq.s32.totalorder %s26, 0
      %p131 = por %p129, %p130
      %p132 = scmp.ne.s32.totalorder %s118, %s119
      %p133 = scmp.eq.s32.totalorder %s27, 5
      %p134 = por %p132, %p133
      %p136 = scmp.ne.s32.totalorder %s119, %s135
      %p137 = scmp.eq.s32.totalorder %s27, 0
      %p138 = por %p136, %p137
      %p139 = scmp.le.s32.totalorder 1, %s21
      %p140 = scmp.lt.s32.totalorder %s21, 7
      %p141 = pnand %p139, %p140
      %p142 = pneg %p141
      // Predicated region
      $region9: #{tpu_custom_call.1} parent=5 // pred_check
        _
      $region10: #{tpu_custom_call.1} parent=5 // pred_check_branch
        %144 = sbr.rel (%p141) target = $region12
      $region11: #{tpu_custom_call.1} parent=5 // pred_region
        %s145 = ssub.s32 %s21, 1
        // Predicated region
        $region13: #{tpu_custom_call.1} parent=11 // pred_check
          %p146 = pneg %p101
        $region14: #{tpu_custom_call.1} parent=11 // pred_check_branch
          %148 = sbr.rel (%p146) target = $region16
        $region15: #{tpu_custom_call.1} parent=11 // pred_region
          %s150 = ssub.s32 16, 16
          %151 = vsyncadd [#allocation12], %s150
          %s152 = smul.addr %s34, 16
          %s153 = scalar_lea.hbm %s3, %s152
          %s155 = sshll.u32 [#allocation11], 4
          %s156 = int_to_ptr.vmem [resolvable:$true] %s155
          %158 = dma.hbm_to_vmem [thread:$0]  %s153, 16, %s156, [#allocation12]
        $region16: #{tpu_custom_call.1} parent=11 // pred_fallthru
          _
      $region12: #{tpu_custom_call.1} parent=5 // pred_fallthru
        _
      %p159 = scmp.lt.s32.totalorder %s21, 6
      // Predicated region
      $region17: #{tpu_custom_call.1} parent=5 // pred_check
        %p160 = pneg %p159
      $region18: #{tpu_custom_call.1} parent=5 // pred_check_branch
        %162 = sbr.rel (%p160) target = $region20
      $region19: #{tpu_custom_call.1} parent=5 // pred_region
        // Predicated region
        $region21: #{tpu_custom_call.1} parent=19 // pred_check
          %p163 = pneg %p69
        $region22: #{tpu_custom_call.1} parent=19 // pred_check_branch
          %165 = sbr.rel (%p163) target = $region24
        $region23: #{tpu_custom_call.1} parent=19 // pred_region
          %s166 = sand.u32 %s59, 1
          %s167 = scalar_lea.sflag [#allocation9], %s166
          %s168 = sand.u32 %s59, 1
          %s169 = smul.addr %s168, 1152
          %s170 = scalar_lea.vmem [#allocation8], %s169
          %s172 = ssub.s32 18432, 18432
          %173 = vsyncadd %s167, %s172
          %s174 = smul.addr %s31, 144
          %s175 = sadd.s32 %s30, %s174
          %s176 = smul.addr %s175, 128
          %s177 = scalar_lea.hbm %s2, %s176
          %s178 = sshll.u32 %s170, 4
          %s179 = int_to_ptr.vmem [resolvable:$true] %s178
          %184 = dma.hbm_to_vmem [thread:$0]  %s177, 18432, %s179, %s167, 128, 128, 8
        $region24: #{tpu_custom_call.1} parent=19 // pred_fallthru
          _
      $region20: #{tpu_custom_call.1} parent=5 // pred_fallthru
        _
      %p185 = scmp.le.s32.totalorder 1, %s21
      %p186 = scmp.lt.s32.totalorder %s21, 7
      %p187 = pnand %p185, %p186
      %p188 = pneg %p187
      // Predicated region
      $region25: #{tpu_custom_call.1} parent=5 // pred_check
        _
      $region26: #{tpu_custom_call.1} parent=5 // pred_check_branch
        %190 = sbr.rel (%p187) target = $region28
      $region27: #{tpu_custom_call.1} parent=5 // pred_region
        %s191 = ssub.s32 %s21, 1
        %s192 = sand.u32 %s62, 1
        %s193 = scalar_lea.sflag [#allocation9], %s192
        %s194 = sand.u32 %s62, 1
        %s195 = smul.addr %s194, 1152
        %s196 = scalar_lea.vmem [#allocation8], %s195
        // Predicated region
        $region29: #{tpu_custom_call.1} parent=27 // pred_check
          %p197 = pneg %p75
        $region30: #{tpu_custom_call.1} parent=27 // pred_check_branch
          %199 = sbr.rel (%p197) target = $region32
        $region31: #{tpu_custom_call.1} parent=27 // pred_region
          %200 = dma.done %s193, 18432
        $region32: #{tpu_custom_call.1} parent=27 // pred_fallthru
          _
        // Predicated region
        $region33: #{tpu_custom_call.1} parent=27 // pred_check
          %p201 = pneg %p101
        $region34: #{tpu_custom_call.1} parent=27 // pred_check_branch
          %203 = sbr.rel (%p201) target = $region36
        $region35: #{tpu_custom_call.1} parent=27 // pred_region
          %204 = dma.done [#allocation12], 16
        $region36: #{tpu_custom_call.1} parent=27 // pred_fallthru
          _
        %s205 = sand.u32 %s62, 1
        %s206 = scalar_lea.sflag [#allocation9], %s205
        %s207 = sand.u32 %s62, 1
        %s208 = smul.addr %s207, 1152
        %s209 = scalar_lea.vmem [#allocation8], %s208
        %p210 = pneg %p75
        %p211 = pneg %p72
        %p212 = pneg %p101
        %p213 = pneg %p98
        %p214 = pneg %p131
        %p215 = pneg %p128
        %s216 = sand.u32 %s118, 1
        %s217 = scalar_lea.sflag [#allocation10], %s216
        %s218 = sand.u32 %s118, 1
        %s219 = smul.addr %s218, 256
        %s220 = scalar_lea.vmem [#allocation13], %s219
        %s221 = smul.u32 16, %s33
        %p222 = scmp.eq.s32.totalorder %s35, 0
        // Predicated region
        $region37: #{tpu_custom_call.1} parent=27 // pred_check
          %p223 = pneg %p222
        $region38: #{tpu_custom_call.1} parent=27 // pred_check_branch
          %225 = sbr.rel (%p223) target = $region40
        $region39: #{tpu_custom_call.1} parent=27 // pred_region
          %s226 = smul.u32 %s33, 16
          %s227 = smul.u32 %s226, 24
          %s228 = smul.u32 %s32, 576
          %s229 = sadd.s32 %s227, %s228
          %s230 = smul.addr %s229, 16
          %s231 = scalar_lea.hbm %s1, %s230
          // Predicated region
          $region41: #{tpu_custom_call.1} parent=39 // pred_check
            _
          $region42: #{tpu_custom_call.1} parent=39 // pred_check_branch
            %233 = sbr.rel target = $region44
          $region43: #{tpu_custom_call.1} parent=39 // pred_region
            %234 = sst [smem:[#allocation16]] [#allocation15]
            %235 = sst [smem:[#allocation17]] [#allocation14]
          $region44: #{tpu_custom_call.1} parent=39 // pred_fallthru
            _
          %237 = shalt.err (0)
          %s239 = sshll.u32 [#allocation2], 4
          %s240 = int_to_ptr.vmem [resolvable:$true] %s239
          %242 = dma.hbm_to_vmem [thread:$0]  %s231, 9216, %s240, [#allocation3]
          %s243 = smul.u32 24, 24
          %s244 = smul.u32 %s243, 1
          %s245 = sshll.u32 %s244, 4
          %246 = dma.done [#allocation3], %s245
          %247 = vst [vmem:[#allocation5] sm:$0xff] 0.0
          %248 = vst [vmem:[#allocation5 + $0x8] sm:$0xff] 0.0
          %249 = vst [vmem:[#allocation5 + $0x10] sm:$0xff] 0.0
          %250 = vst [vmem:[#allocation5 + $0x18] sm:$0xff] 0.0
          %251 = vst [vmem:[#allocation5 + $0x20] sm:$0xff] 0.0
          %252 = vst [vmem:[#allocation5 + $0x28] sm:$0xff] 0.0
          %253 = vst [vmem:[#allocation5 + $0x30] sm:$0xff] 0.0
          %254 = vst [vmem:[#allocation5 + $0x38] sm:$0xff] 0.0
          %255 = vst [vmem:[#allocation5 + $0x40] sm:$0xff] 0.0
          %256 = vst [vmem:[#allocation5 + $0x48] sm:$0xff] 0.0
          %257 = vst [vmem:[#allocation5 + $0x50] sm:$0xff] 0.0
          %258 = vst [vmem:[#allocation5 + $0x58] sm:$0xff] 0.0
          %259 = vst [vmem:[#allocation5 + $0x60] sm:$0xff] 0.0
          %260 = vst [vmem:[#allocation5 + $0x68] sm:$0xff] 0.0
          %261 = vst [vmem:[#allocation5 + $0x70] sm:$0xff] 0.0
          %262 = vst [vmem:[#allocation5 + $0x78] sm:$0xff] 0.0
          %263 = vst [vmem:[#allocation5 + $0x80] sm:$0xff] 0.0
          %264 = vst [vmem:[#allocation5 + $0x88] sm:$0xff] 0.0
          %265 = vst [vmem:[#allocation5 + $0x90] sm:$0xff] 0.0
          %266 = vst [vmem:[#allocation5 + $0x98] sm:$0xff] 0.0
          %267 = vst [vmem:[#allocation5 + $0xa0] sm:$0xff] 0.0
          %268 = vst [vmem:[#allocation5 + $0xa8] sm:$0xff] 0.0
          %269 = vst [vmem:[#allocation5 + $0xb0] sm:$0xff] 0.0
          %270 = vst [vmem:[#allocation5 + $0xb8] sm:$0xff] 0.0
          %271 = vst [vmem:[#allocation5 + $0xc0] sm:$0xff] 0.0
          %272 = vst [vmem:[#allocation5 + $0xc8] sm:$0xff] 0.0
          %273 = vst [vmem:[#allocation5 + $0xd0] sm:$0xff] 0.0
          %274 = vst [vmem:[#allocation5 + $0xd8] sm:$0xff] 0.0
          %275 = vst [vmem:[#allocation5 + $0xe0] sm:$0xff] 0.0
          %276 = vst [vmem:[#allocation5 + $0xe8] sm:$0xff] 0.0
          %277 = vst [vmem:[#allocation5 + $0xf0] sm:$0xff] 0.0
          %278 = vst [vmem:[#allocation5 + $0xf8] sm:$0xff] 0.0
        $region40: #{tpu_custom_call.1} parent=27 // pred_fallthru
          _
        %s279 = sld [smem:[#allocation7 + %s35]]
        %s280 = ssub.s32 4, %s279
        %s281 = smul.u32 %s280, 24
        %s282 = sadd.s32 %s280, %s281
        %s283 = scalar_lea.vmem [#allocation2], %s282
        %v284 = vld [vmem:[%s283] sm:$0xff]
        %v285 = vld [vmem:[%s283 + $0x8] sm:$0xff]
        %v286 = vld [vmem:[%s283 + $0x18] sm:$0xff]
        %v287 = vld [vmem:[%s283 + $0x20] sm:$0xff]
        %v288 = vld [vmem:[%s283 + $0x30] sm:$0xff]
        %v289 = vld [vmem:[%s283 + $0x38] sm:$0xff]
        %v290 = vld [vmem:[%s283 + $0x48] sm:$0xff]
        %v291 = vld [vmem:[%s283 + $0x50] sm:$0xff]
        %v292 = vld [vmem:[%s283 + $0x60] sm:$0xff]
        %v293 = vld [vmem:[%s283 + $0x68] sm:$0xff]
        %v294 = vld [vmem:[%s283 + $0x78] sm:$0xff]
        %v295 = vld [vmem:[%s283 + $0x80] sm:$0xff]
        %v296 = vld [vmem:[%s283 + $0x90] sm:$0xff]
        %v297 = vld [vmem:[%s283 + $0x98] sm:$0xff]
        %v298 = vld [vmem:[%s283 + $0xa8] sm:$0xff]
        %v299 = vld [vmem:[%s283 + $0xb0] sm:$0xff]
        %v300 = vld [vmem:[%s283 + $0xc0] sm:$0xff]
        %v301 = vld [vmem:[%s283 + $0xc8] sm:$0xff]
        %v302 = vld [vmem:[%s283 + $0xd8] sm:$0xff]
        %v303 = vld [vmem:[%s283 + $0xe0] sm:$0xff]
        %v304 = vld [vmem:[%s283 + $0xf0] sm:$0xff]
        %v305 = vld [vmem:[%s283 + $0xf8] sm:$0xff]
        %v306 = vld [vmem:[%s283 + $0x108] sm:$0xff]
        %v307 = vld [vmem:[%s283 + $0x110] sm:$0xff]
        %v308 = vld [vmem:[%s283 + $0x120] sm:$0xff]
        %v309 = vld [vmem:[%s283 + $0x128] sm:$0xff]
        %v310 = vld [vmem:[%s283 + $0x138] sm:$0xff]
        %v311 = vld [vmem:[%s283 + $0x140] sm:$0xff]
        %v312 = vld [vmem:[%s283 + $0x150] sm:$0xff]
        %v313 = vld [vmem:[%s283 + $0x158] sm:$0xff]
        %v314 = vld [vmem:[%s283 + $0x168] sm:$0xff]
        %v315 = vld [vmem:[%s283 + $0x170] sm:$0xff]
        %316 = vst [vmem:[#allocation4] sm:$0xff] %v284
        %317 = vst [vmem:[#allocation4 + $0x48] sm:$0xff] %v285
        %318 = vst [vmem:[#allocation4 + $0x90] sm:$0xff] %v286
        %319 = vst [vmem:[#allocation4 + $0xd8] sm:$0xff] %v287
        %320 = vst [vmem:[#allocation4 + $0x120] sm:$0xff] %v288
        %321 = vst [vmem:[#allocation4 + $0x168] sm:$0xff] %v289
        %322 = vst [vmem:[#allocation4 + $0x1b0] sm:$0xff] %v290
        %323 = vst [vmem:[#allocation4 + $0x1f8] sm:$0xff] %v291
        %324 = vst [vmem:[#allocation4 + $0x240] sm:$0xff] %v292
        %325 = vst [vmem:[#allocation4 + $0x288] sm:$0xff] %v293
        %326 = vst [vmem:[#allocation4 + $0x2d0] sm:$0xff] %v294
        %327 = vst [vmem:[#allocation4 + $0x318] sm:$0xff] %v295
        %328 = vst [vmem:[#allocation4 + $0x360] sm:$0xff] %v296
        %329 = vst [vmem:[#allocation4 + $0x3a8] sm:$0xff] %v297
        %330 = vst [vmem:[#allocation4 + $0x3f0] sm:$0xff] %v298
        %331 = vst [vmem:[#allocation4 + $0x438] sm:$0xff] %v299
        %332 = vst [vmem:[#allocation4 + $0x480] sm:$0xff] %v300
        %333 = vst [vmem:[#allocation4 + $0x4c8] sm:$0xff] %v301
        %334 = vst [vmem:[#allocation4 + $0x510] sm:$0xff] %v302
        %335 = vst [vmem:[#allocation4 + $0x558] sm:$0xff] %v303
        %336 = vst [vmem:[#allocation4 + $0x5a0] sm:$0xff] %v304
        %337 = vst [vmem:[#allocation4 + $0x5e8] sm:$0xff] %v305
        %338 = vst [vmem:[#allocation4 + $0x630] sm:$0xff] %v306
        %339 = vst [vmem:[#allocation4 + $0x678] sm:$0xff] %v307
        %340 = vst [vmem:[#allocation4 + $0x6c0] sm:$0xff] %v308
        %341 = vst [vmem:[#allocation4 + $0x708] sm:$0xff] %v309
        %342 = vst [vmem:[#allocation4 + $0x750] sm:$0xff] %v310
        %343 = vst [vmem:[#allocation4 + $0x798] sm:$0xff] %v311
        %344 = vst [vmem:[#allocation4 + $0x7e0] sm:$0xff] %v312
        %345 = vst [vmem:[#allocation4 + $0x828] sm:$0xff] %v313
        %346 = vst [vmem:[#allocation4 + $0x870] sm:$0xff] %v314
        %347 = vst [vmem:[#allocation4 + $0x8b8] sm:$0xff] %v315
        %s348 = scalar_lea.vmem [#allocation2], %s281
        %v349 = vld [vmem:[%s348 + $0x4] sm:$0xff]
        %v350 = vld [vmem:[%s348 + $0xc] sm:$0xff]
        %v351 = vld [vmem:[%s348 + $0x1c] sm:$0xff]
        %v352 = vld [vmem:[%s348 + $0x24] sm:$0xff]
        %v353 = vld [vmem:[%s348 + $0x34] sm:$0xff]
        %v354 = vld [vmem:[%s348 + $0x3c] sm:$0xff]
        %v355 = vld [vmem:[%s348 + $0x4c] sm:$0xff]
        %v356 = vld [vmem:[%s348 + $0x54] sm:$0xff]
        %v357 = vld [vmem:[%s348 + $0x64] sm:$0xff]
        %v358 = vld [vmem:[%s348 + $0x6c] sm:$0xff]
        %v359 = vld [vmem:[%s348 + $0x7c] sm:$0xff]
        %v360 = vld [vmem:[%s348 + $0x84] sm:$0xff]
        %v361 = vld [vmem:[%s348 + $0x94] sm:$0xff]
        %v362 = vld [vmem:[%s348 + $0x9c] sm:$0xff]
        %v363 = vld [vmem:[%s348 + $0xac] sm:$0xff]
        %v364 = vld [vmem:[%s348 + $0xb4] sm:$0xff]
        %v365 = vld [vmem:[%s348 + $0xc4] sm:$0xff]
        %v366 = vld [vmem:[%s348 + $0xcc] sm:$0xff]
        %v367 = vld [vmem:[%s348 + $0xdc] sm:$0xff]
        %v368 = vld [vmem:[%s348 + $0xe4] sm:$0xff]
        %v369 = vld [vmem:[%s348 + $0xf4] sm:$0xff]
        %v370 = vld [vmem:[%s348 + $0xfc] sm:$0xff]
        %v371 = vld [vmem:[%s348 + $0x10c] sm:$0xff]
        %v372 = vld [vmem:[%s348 + $0x114] sm:$0xff]
        %v373 = vld [vmem:[%s348 + $0x124] sm:$0xff]
        %v374 = vld [vmem:[%s348 + $0x12c] sm:$0xff]
        %v375 = vld [vmem:[%s348 + $0x13c] sm:$0xff]
        %v376 = vld [vmem:[%s348 + $0x144] sm:$0xff]
        %v377 = vld [vmem:[%s348 + $0x154] sm:$0xff]
        %v378 = vld [vmem:[%s348 + $0x15c] sm:$0xff]
        %v379 = vld [vmem:[%s348 + $0x16c] sm:$0xff]
        %v380 = vld [vmem:[%s348 + $0x174] sm:$0xff]
        %381 = vst [vmem:[#allocation4 + $0x8] sm:$0xff] %v349
        %382 = vst [vmem:[#allocation4 + $0x50] sm:$0xff] %v350
        %383 = vst [vmem:[#allocation4 + $0x98] sm:$0xff] %v351
        %384 = vst [vmem:[#allocation4 + $0xe0] sm:$0xff] %v352
        %385 = vst [vmem:[#allocation4 + $0x128] sm:$0xff] %v353
        %386 = vst [vmem:[#allocation4 + $0x170] sm:$0xff] %v354
        %387 = vst [vmem:[#allocation4 + $0x1b8] sm:$0xff] %v355
        %388 = vst [vmem:[#allocation4 + $0x200] sm:$0xff] %v356
        %389 = vst [vmem:[#allocation4 + $0x248] sm:$0xff] %v357
        %390 = vst [vmem:[#allocation4 + $0x290] sm:$0xff] %v358
        %391 = vst [vmem:[#allocation4 + $0x2d8] sm:$0xff] %v359
        %392 = vst [vmem:[#allocation4 + $0x320] sm:$0xff] %v360
        %393 = vst [vmem:[#allocation4 + $0x368] sm:$0xff] %v361
        %394 = vst [vmem:[#allocation4 + $0x3b0] sm:$0xff] %v362
        %395 = vst [vmem:[#allocation4 + $0x3f8] sm:$0xff] %v363
        %396 = vst [vmem:[#allocation4 + $0x440] sm:$0xff] %v364
        %397 = vst [vmem:[#allocation4 + $0x488] sm:$0xff] %v365
        %398 = vst [vmem:[#allocation4 + $0x4d0] sm:$0xff] %v366
        %399 = vst [vmem:[#allocation4 + $0x518] sm:$0xff] %v367
        %400 = vst [vmem:[#allocation4 + $0x560] sm:$0xff] %v368
        %401 = vst [vmem:[#allocation4 + $0x5a8] sm:$0xff] %v369
        %402 = vst [vmem:[#allocation4 + $0x5f0] sm:$0xff] %v370
        %403 = vst [vmem:[#allocation4 + $0x638] sm:$0xff] %v371
        %404 = vst [vmem:[#allocation4 + $0x680] sm:$0xff] %v372
        %405 = vst [vmem:[#allocation4 + $0x6c8] sm:$0xff] %v373
        %406 = vst [vmem:[#allocation4 + $0x710] sm:$0xff] %v374
        %407 = vst [vmem:[#allocation4 + $0x758] sm:$0xff] %v375
        %408 = vst [vmem:[#allocation4 + $0x7a0] sm:$0xff] %v376
        %409 = vst [vmem:[#allocation4 + $0x7e8] sm:$0xff] %v377
        %410 = vst [vmem:[#allocation4 + $0x830] sm:$0xff] %v378
        %411 = vst [vmem:[#allocation4 + $0x878] sm:$0xff] %v379
        %412 = vst [vmem:[#allocation4 + $0x8c0] sm:$0xff] %v380
        %s413 = sadd.s32 %s279, 4
        %s414 = sadd.s32 %s413, %s281
        %s415 = scalar_lea.vmem [#allocation2], %s414
        %v416 = vld [vmem:[%s415] sm:$0xff]
        %v417 = vld [vmem:[%s415 + $0x8] sm:$0xff]
        %v418 = vld [vmem:[%s415 + $0x18] sm:$0xff]
        %v419 = vld [vmem:[%s415 + $0x20] sm:$0xff]
        %v420 = vld [vmem:[%s415 + $0x30] sm:$0xff]
        %v421 = vld [vmem:[%s415 + $0x38] sm:$0xff]
        %v422 = vld [vmem:[%s415 + $0x48] sm:$0xff]
        %v423 = vld [vmem:[%s415 + $0x50] sm:$0xff]
        %v424 = vld [vmem:[%s415 + $0x60] sm:$0xff]
        %v425 = vld [vmem:[%s415 + $0x68] sm:$0xff]
        %v426 = vld [vmem:[%s415 + $0x78] sm:$0xff]
        %v427 = vld [vmem:[%s415 + $0x80] sm:$0xff]
        %v428 = vld [vmem:[%s415 + $0x90] sm:$0xff]
        %v429 = vld [vmem:[%s415 + $0x98] sm:$0xff]
        %v430 = vld [vmem:[%s415 + $0xa8] sm:$0xff]
        %v431 = vld [vmem:[%s415 + $0xb0] sm:$0xff]
        %v432 = vld [vmem:[%s415 + $0xc0] sm:$0xff]
        %v433 = vld [vmem:[%s415 + $0xc8] sm:$0xff]
        %v434 = vld [vmem:[%s415 + $0xd8] sm:$0xff]
        %v435 = vld [vmem:[%s415 + $0xe0] sm:$0xff]
        %v436 = vld [vmem:[%s415 + $0xf0] sm:$0xff]
        %v437 = vld [vmem:[%s415 + $0xf8] sm:$0xff]
        %v438 = vld [vmem:[%s415 + $0x108] sm:$0xff]
        %v439 = vld [vmem:[%s415 + $0x110] sm:$0xff]
        %v440 = vld [vmem:[%s415 + $0x120] sm:$0xff]
        %v441 = vld [vmem:[%s415 + $0x128] sm:$0xff]
        %v442 = vld [vmem:[%s415 + $0x138] sm:$0xff]
        %v443 = vld [vmem:[%s415 + $0x140] sm:$0xff]
        %v444 = vld [vmem:[%s415 + $0x150] sm:$0xff]
        %v445 = vld [vmem:[%s415 + $0x158] sm:$0xff]
        %v446 = vld [vmem:[%s415 + $0x168] sm:$0xff]
        %v447 = vld [vmem:[%s415 + $0x170] sm:$0xff]
        %448 = vst [vmem:[#allocation4 + $0x10] sm:$0xff] %v416
        %449 = vst [vmem:[#allocation4 + $0x58] sm:$0xff] %v417
        %450 = vst [vmem:[#allocation4 + $0xa0] sm:$0xff] %v418
        %451 = vst [vmem:[#allocation4 + $0xe8] sm:$0xff] %v419
        %452 = vst [vmem:[#allocation4 + $0x130] sm:$0xff] %v420
        %453 = vst [vmem:[#allocation4 + $0x178] sm:$0xff] %v421
        %454 = vst [vmem:[#allocation4 + $0x1c0] sm:$0xff] %v422
        %455 = vst [vmem:[#allocation4 + $0x208] sm:$0xff] %v423
        %456 = vst [vmem:[#allocation4 + $0x250] sm:$0xff] %v424
        %457 = vst [vmem:[#allocation4 + $0x298] sm:$0xff] %v425
        %458 = vst [vmem:[#allocation4 + $0x2e0] sm:$0xff] %v426
        %459 = vst [vmem:[#allocation4 + $0x328] sm:$0xff] %v427
        %460 = vst [vmem:[#allocation4 + $0x370] sm:$0xff] %v428
        %461 = vst [vmem:[#allocation4 + $0x3b8] sm:$0xff] %v429
        %462 = vst [vmem:[#allocation4 + $0x400] sm:$0xff] %v430
        %463 = vst [vmem:[#allocation4 + $0x448] sm:$0xff] %v431
        %464 = vst [vmem:[#allocation4 + $0x490] sm:$0xff] %v432
        %465 = vst [vmem:[#allocation4 + $0x4d8] sm:$0xff] %v433
        %466 = vst [vmem:[#allocation4 + $0x520] sm:$0xff] %v434
        %467 = vst [vmem:[#allocation4 + $0x568] sm:$0xff] %v435
        %468 = vst [vmem:[#allocation4 + $0x5b0] sm:$0xff] %v436
        %469 = vst [vmem:[#allocation4 + $0x5f8] sm:$0xff] %v437
        %470 = vst [vmem:[#allocation4 + $0x640] sm:$0xff] %v438
        %471 = vst [vmem:[#allocation4 + $0x688] sm:$0xff] %v439
        %472 = vst [vmem:[#allocation4 + $0x6d0] sm:$0xff] %v440
        %473 = vst [vmem:[#allocation4 + $0x718] sm:$0xff] %v441
        %474 = vst [vmem:[#allocation4 + $0x760] sm:$0xff] %v442
        %475 = vst [vmem:[#allocation4 + $0x7a8] sm:$0xff] %v443
        %476 = vst [vmem:[#allocation4 + $0x7f0] sm:$0xff] %v444
        %477 = vst [vmem:[#allocation4 + $0x838] sm:$0xff] %v445
        %478 = vst [vmem:[#allocation4 + $0x880] sm:$0xff] %v446
        %479 = vst [vmem:[#allocation4 + $0x8c8] sm:$0xff] %v447
        %s480 = sadd.s32 %s280, 96
        %s481 = scalar_lea.vmem [#allocation2], %s480
        %v482 = vld [vmem:[%s481] sm:$0xff]
        %v483 = vld [vmem:[%s481 + $0x8] sm:$0xff]
        %v484 = vld [vmem:[%s481 + $0x18] sm:$0xff]
        %v485 = vld [vmem:[%s481 + $0x20] sm:$0xff]
        %v486 = vld [vmem:[%s481 + $0x30] sm:$0xff]
        %v487 = vld [vmem:[%s481 + $0x38] sm:$0xff]
        %v488 = vld [vmem:[%s481 + $0x48] sm:$0xff]
        %v489 = vld [vmem:[%s481 + $0x50] sm:$0xff]
        %v490 = vld [vmem:[%s481 + $0x60] sm:$0xff]
        %v491 = vld [vmem:[%s481 + $0x68] sm:$0xff]
        %v492 = vld [vmem:[%s481 + $0x78] sm:$0xff]
        %v493 = vld [vmem:[%s481 + $0x80] sm:$0xff]
        %v494 = vld [vmem:[%s481 + $0x90] sm:$0xff]
        %v495 = vld [vmem:[%s481 + $0x98] sm:$0xff]
        %v496 = vld [vmem:[%s481 + $0xa8] sm:$0xff]
        %v497 = vld [vmem:[%s481 + $0xb0] sm:$0xff]
        %v498 = vld [vmem:[%s481 + $0xc0] sm:$0xff]
        %v499 = vld [vmem:[%s481 + $0xc8] sm:$0xff]
        %v500 = vld [vmem:[%s481 + $0xd8] sm:$0xff]
        %v501 = vld [vmem:[%s481 + $0xe0] sm:$0xff]
        %v502 = vld [vmem:[%s481 + $0xf0] sm:$0xff]
        %v503 = vld [vmem:[%s481 + $0xf8] sm:$0xff]
        %v504 = vld [vmem:[%s481 + $0x108] sm:$0xff]
        %v505 = vld [vmem:[%s481 + $0x110] sm:$0xff]
        %v506 = vld [vmem:[%s481 + $0x120] sm:$0xff]
        %v507 = vld [vmem:[%s481 + $0x128] sm:$0xff]
        %v508 = vld [vmem:[%s481 + $0x138] sm:$0xff]
        %v509 = vld [vmem:[%s481 + $0x140] sm:$0xff]
        %v510 = vld [vmem:[%s481 + $0x150] sm:$0xff]
        %v511 = vld [vmem:[%s481 + $0x158] sm:$0xff]
        %v512 = vld [vmem:[%s481 + $0x168] sm:$0xff]
        %v513 = vld [vmem:[%s481 + $0x170] sm:$0xff]
        %514 = vst [vmem:[#allocation4 + $0x18] sm:$0xff] %v482
        %515 = vst [vmem:[#allocation4 + $0x60] sm:$0xff] %v483
        %516 = vst [vmem:[#allocation4 + $0xa8] sm:$0xff] %v484
        %517 = vst [vmem:[#allocation4 + $0xf0] sm:$0xff] %v485
        %518 = vst [vmem:[#allocation4 + $0x138] sm:$0xff] %v486
        %519 = vst [vmem:[#allocation4 + $0x180] sm:$0xff] %v487
        %520 = vst [vmem:[#allocation4 + $0x1c8] sm:$0xff] %v488
        %521 = vst [vmem:[#allocation4 + $0x210] sm:$0xff] %v489
        %522 = vst [vmem:[#allocation4 + $0x258] sm:$0xff] %v490
        %523 = vst [vmem:[#allocation4 + $0x2a0] sm:$0xff] %v491
        %524 = vst [vmem:[#allocation4 + $0x2e8] sm:$0xff] %v492
        %525 = vst [vmem:[#allocation4 + $0x330] sm:$0xff] %v493
        %526 = vst [vmem:[#allocation4 + $0x378] sm:$0xff] %v494
        %527 = vst [vmem:[#allocation4 + $0x3c0] sm:$0xff] %v495
        %528 = vst [vmem:[#allocation4 + $0x408] sm:$0xff] %v496
        %529 = vst [vmem:[#allocation4 + $0x450] sm:$0xff] %v497
        %530 = vst [vmem:[#allocation4 + $0x498] sm:$0xff] %v498
        %531 = vst [vmem:[#allocation4 + $0x4e0] sm:$0xff] %v499
        %532 = vst [vmem:[#allocation4 + $0x528] sm:$0xff] %v500
        %533 = vst [vmem:[#allocation4 + $0x570] sm:$0xff] %v501
        %534 = vst [vmem:[#allocation4 + $0x5b8] sm:$0xff] %v502
        %535 = vst [vmem:[#allocation4 + $0x600] sm:$0xff] %v503
        %536 = vst [vmem:[#allocation4 + $0x648] sm:$0xff] %v504
        %537 = vst [vmem:[#allocation4 + $0x690] sm:$0xff] %v505
        %538 = vst [vmem:[#allocation4 + $0x6d8] sm:$0xff] %v506
        %539 = vst [vmem:[#allocation4 + $0x720] sm:$0xff] %v507
        %540 = vst [vmem:[#allocation4 + $0x768] sm:$0xff] %v508
        %541 = vst [vmem:[#allocation4 + $0x7b0] sm:$0xff] %v509
        %542 = vst [vmem:[#allocation4 + $0x7f8] sm:$0xff] %v510
        %543 = vst [vmem:[#allocation4 + $0x840] sm:$0xff] %v511
        %544 = vst [vmem:[#allocation4 + $0x888] sm:$0xff] %v512
        %545 = vst [vmem:[#allocation4 + $0x8d0] sm:$0xff] %v513
        %s546 = scalar_lea.vmem [#allocation2], 96
        %v547 = vld [vmem:[%s546 + $0x4] sm:$0xff]
        %v548 = vld [vmem:[%s546 + $0xc] sm:$0xff]
        %v549 = vld [vmem:[%s546 + $0x1c] sm:$0xff]
        %v550 = vld [vmem:[%s546 + $0x24] sm:$0xff]
        %v551 = vld [vmem:[%s546 + $0x34] sm:$0xff]
        %v552 = vld [vmem:[%s546 + $0x3c] sm:$0xff]
        %v553 = vld [vmem:[%s546 + $0x4c] sm:$0xff]
        %v554 = vld [vmem:[%s546 + $0x54] sm:$0xff]
        %v555 = vld [vmem:[%s546 + $0x64] sm:$0xff]
        %v556 = vld [vmem:[%s546 + $0x6c] sm:$0xff]
        %v557 = vld [vmem:[%s546 + $0x7c] sm:$0xff]
        %v558 = vld [vmem:[%s546 + $0x84] sm:$0xff]
        %v559 = vld [vmem:[%s546 + $0x94] sm:$0xff]
        %v560 = vld [vmem:[%s546 + $0x9c] sm:$0xff]
        %v561 = vld [vmem:[%s546 + $0xac] sm:$0xff]
        %v562 = vld [vmem:[%s546 + $0xb4] sm:$0xff]
        %v563 = vld [vmem:[%s546 + $0xc4] sm:$0xff]
        %v564 = vld [vmem:[%s546 + $0xcc] sm:$0xff]
        %v565 = vld [vmem:[%s546 + $0xdc] sm:$0xff]
        %v566 = vld [vmem:[%s546 + $0xe4] sm:$0xff]
        %v567 = vld [vmem:[%s546 + $0xf4] sm:$0xff]
        %v568 = vld [vmem:[%s546 + $0xfc] sm:$0xff]
        %v569 = vld [vmem:[%s546 + $0x10c] sm:$0xff]
        %v570 = vld [vmem:[%s546 + $0x114] sm:$0xff]
        %v571 = vld [vmem:[%s546 + $0x124] sm:$0xff]
        %v572 = vld [vmem:[%s546 + $0x12c] sm:$0xff]
        %v573 = vld [vmem:[%s546 + $0x13c] sm:$0xff]
        %v574 = vld [vmem:[%s546 + $0x144] sm:$0xff]
        %v575 = vld [vmem:[%s546 + $0x154] sm:$0xff]
        %v576 = vld [vmem:[%s546 + $0x15c] sm:$0xff]
        %v577 = vld [vmem:[%s546 + $0x16c] sm:$0xff]
        %v578 = vld [vmem:[%s546 + $0x174] sm:$0xff]
        %579 = vst [vmem:[#allocation4 + $0x20] sm:$0xff] %v547
        %580 = vst [vmem:[#allocation4 + $0x68] sm:$0xff] %v548
        %581 = vst [vmem:[#allocation4 + $0xb0] sm:$0xff] %v549
        %582 = vst [vmem:[#allocation4 + $0xf8] sm:$0xff] %v550
        %583 = vst [vmem:[#allocation4 + $0x140] sm:$0xff] %v551
        %584 = vst [vmem:[#allocation4 + $0x188] sm:$0xff] %v552
        %585 = vst [vmem:[#allocation4 + $0x1d0] sm:$0xff] %v553
        %586 = vst [vmem:[#allocation4 + $0x218] sm:$0xff] %v554
        %587 = vst [vmem:[#allocation4 + $0x260] sm:$0xff] %v555
        %588 = vst [vmem:[#allocation4 + $0x2a8] sm:$0xff] %v556
        %589 = vst [vmem:[#allocation4 + $0x2f0] sm:$0xff] %v557
        %590 = vst [vmem:[#allocation4 + $0x338] sm:$0xff] %v558
        %591 = vst [vmem:[#allocation4 + $0x380] sm:$0xff] %v559
        %592 = vst [vmem:[#allocation4 + $0x3c8] sm:$0xff] %v560
        %593 = vst [vmem:[#allocation4 + $0x410] sm:$0xff] %v561
        %594 = vst [vmem:[#allocation4 + $0x458] sm:$0xff] %v562
        %595 = vst [vmem:[#allocation4 + $0x4a0] sm:$0xff] %v563
        %596 = vst [vmem:[#allocation4 + $0x4e8] sm:$0xff] %v564
        %597 = vst [vmem:[#allocation4 + $0x530] sm:$0xff] %v565
        %598 = vst [vmem:[#allocation4 + $0x578] sm:$0xff] %v566
        %599 = vst [vmem:[#allocation4 + $0x5c0] sm:$0xff] %v567
        %600 = vst [vmem:[#allocation4 + $0x608] sm:$0xff] %v568
        %601 = vst [vmem:[#allocation4 + $0x650] sm:$0xff] %v569
        %602 = vst [vmem:[#allocation4 + $0x698] sm:$0xff] %v570
        %603 = vst [vmem:[#allocation4 + $0x6e0] sm:$0xff] %v571
        %604 = vst [vmem:[#allocation4 + $0x728] sm:$0xff] %v572
        %605 = vst [vmem:[#allocation4 + $0x770] sm:$0xff] %v573
        %606 = vst [vmem:[#allocation4 + $0x7b8] sm:$0xff] %v574
        %607 = vst [vmem:[#allocation4 + $0x800] sm:$0xff] %v575
        %608 = vst [vmem:[#allocation4 + $0x848] sm:$0xff] %v576
        %609 = vst [vmem:[#allocation4 + $0x890] sm:$0xff] %v577
        %610 = vst [vmem:[#allocation4 + $0x8d8] sm:$0xff] %v578
        %s611 = sadd.s32 %s413, 96
        %s612 = scalar_lea.vmem [#allocation2], %s611
        %v613 = vld [vmem:[%s612] sm:$0xff]
        %v614 = vld [vmem:[%s612 + $0x8] sm:$0xff]
        %v615 = vld [vmem:[%s612 + $0x18] sm:$0xff]
        %v616 = vld [vmem:[%s612 + $0x20] sm:$0xff]
        %v617 = vld [vmem:[%s612 + $0x30] sm:$0xff]
        %v618 = vld [vmem:[%s612 + $0x38] sm:$0xff]
        %v619 = vld [vmem:[%s612 + $0x48] sm:$0xff]
        %v620 = vld [vmem:[%s612 + $0x50] sm:$0xff]
        %v621 = vld [vmem:[%s612 + $0x60] sm:$0xff]
        %v622 = vld [vmem:[%s612 + $0x68] sm:$0xff]
        %v623 = vld [vmem:[%s612 + $0x78] sm:$0xff]
        %v624 = vld [vmem:[%s612 + $0x80] sm:$0xff]
        %v625 = vld [vmem:[%s612 + $0x90] sm:$0xff]
        %v626 = vld [vmem:[%s612 + $0x98] sm:$0xff]
        %v627 = vld [vmem:[%s612 + $0xa8] sm:$0xff]
        %v628 = vld [vmem:[%s612 + $0xb0] sm:$0xff]
        %v629 = vld [vmem:[%s612 + $0xc0] sm:$0xff]
        %v630 = vld [vmem:[%s612 + $0xc8] sm:$0xff]
        %v631 = vld [vmem:[%s612 + $0xd8] sm:$0xff]
        %v632 = vld [vmem:[%s612 + $0xe0] sm:$0xff]
        %v633 = vld [vmem:[%s612 + $0xf0] sm:$0xff]
        %v634 = vld [vmem:[%s612 + $0xf8] sm:$0xff]
        %v635 = vld [vmem:[%s612 + $0x108] sm:$0xff]
        %v636 = vld [vmem:[%s612 + $0x110] sm:$0xff]
        %v637 = vld [vmem:[%s612 + $0x120] sm:$0xff]
        %v638 = vld [vmem:[%s612 + $0x128] sm:$0xff]
        %v639 = vld [vmem:[%s612 + $0x138] sm:$0xff]
        %v640 = vld [vmem:[%s612 + $0x140] sm:$0xff]
        %v641 = vld [vmem:[%s612 + $0x150] sm:$0xff]
        %v642 = vld [vmem:[%s612 + $0x158] sm:$0xff]
        %v643 = vld [vmem:[%s612 + $0x168] sm:$0xff]
        %v644 = vld [vmem:[%s612 + $0x170] sm:$0xff]
        %645 = vst [vmem:[#allocation4 + $0x28] sm:$0xff] %v613
        %646 = vst [vmem:[#allocation4 + $0x70] sm:$0xff] %v614
        %647 = vst [vmem:[#allocation4 + $0xb8] sm:$0xff] %v615
        %648 = vst [vmem:[#allocation4 + $0x100] sm:$0xff] %v616
        %649 = vst [vmem:[#allocation4 + $0x148] sm:$0xff] %v617
        %650 = vst [vmem:[#allocation4 + $0x190] sm:$0xff] %v618
        %651 = vst [vmem:[#allocation4 + $0x1d8] sm:$0xff] %v619
        %652 = vst [vmem:[#allocation4 + $0x220] sm:$0xff] %v620
        %653 = vst [vmem:[#allocation4 + $0x268] sm:$0xff] %v621
        %654 = vst [vmem:[#allocation4 + $0x2b0] sm:$0xff] %v622
        %655 = vst [vmem:[#allocation4 + $0x2f8] sm:$0xff] %v623
        %656 = vst [vmem:[#allocation4 + $0x340] sm:$0xff] %v624
        %657 = vst [vmem:[#allocation4 + $0x388] sm:$0xff] %v625
        %658 = vst [vmem:[#allocation4 + $0x3d0] sm:$0xff] %v626
        %659 = vst [vmem:[#allocation4 + $0x418] sm:$0xff] %v627
        %660 = vst [vmem:[#allocation4 + $0x460] sm:$0xff] %v628
        %661 = vst [vmem:[#allocation4 + $0x4a8] sm:$0xff] %v629
        %662 = vst [vmem:[#allocation4 + $0x4f0] sm:$0xff] %v630
        %663 = vst [vmem:[#allocation4 + $0x538] sm:$0xff] %v631
        %664 = vst [vmem:[#allocation4 + $0x580] sm:$0xff] %v632
        %665 = vst [vmem:[#allocation4 + $0x5c8] sm:$0xff] %v633
        %666 = vst [vmem:[#allocation4 + $0x610] sm:$0xff] %v634
        %667 = vst [vmem:[#allocation4 + $0x658] sm:$0xff] %v635
        %668 = vst [vmem:[#allocation4 + $0x6a0] sm:$0xff] %v636
        %669 = vst [vmem:[#allocation4 + $0x6e8] sm:$0xff] %v637
        %670 = vst [vmem:[#allocation4 + $0x730] sm:$0xff] %v638
        %671 = vst [vmem:[#allocation4 + $0x778] sm:$0xff] %v639
        %672 = vst [vmem:[#allocation4 + $0x7c0] sm:$0xff] %v640
        %673 = vst [vmem:[#allocation4 + $0x808] sm:$0xff] %v641
        %674 = vst [vmem:[#allocation4 + $0x850] sm:$0xff] %v642
        %675 = vst [vmem:[#allocation4 + $0x898] sm:$0xff] %v643
        %676 = vst [vmem:[#allocation4 + $0x8e0] sm:$0xff] %v644
        %s677 = smul.u32 %s413, 24
        %s678 = sadd.s32 %s280, %s677
        %s679 = scalar_lea.vmem [#allocation2], %s678
        %v680 = vld [vmem:[%s679] sm:$0xff]
        %v681 = vld [vmem:[%s679 + $0x8] sm:$0xff]
        %v682 = vld [vmem:[%s679 + $0x18] sm:$0xff]
        %v683 = vld [vmem:[%s679 + $0x20] sm:$0xff]
        %v684 = vld [vmem:[%s679 + $0x30] sm:$0xff]
        %v685 = vld [vmem:[%s679 + $0x38] sm:$0xff]
        %v686 = vld [vmem:[%s679 + $0x48] sm:$0xff]
        %v687 = vld [vmem:[%s679 + $0x50] sm:$0xff]
        %v688 = vld [vmem:[%s679 + $0x60] sm:$0xff]
        %v689 = vld [vmem:[%s679 + $0x68] sm:$0xff]
        %v690 = vld [vmem:[%s679 + $0x78] sm:$0xff]
        %v691 = vld [vmem:[%s679 + $0x80] sm:$0xff]
        %v692 = vld [vmem:[%s679 + $0x90] sm:$0xff]
        %v693 = vld [vmem:[%s679 + $0x98] sm:$0xff]
        %v694 = vld [vmem:[%s679 + $0xa8] sm:$0xff]
        %v695 = vld [vmem:[%s679 + $0xb0] sm:$0xff]
        %v696 = vld [vmem:[%s679 + $0xc0] sm:$0xff]
        %v697 = vld [vmem:[%s679 + $0xc8] sm:$0xff]
        %v698 = vld [vmem:[%s679 + $0xd8] sm:$0xff]
        %v699 = vld [vmem:[%s679 + $0xe0] sm:$0xff]
        %v700 = vld [vmem:[%s679 + $0xf0] sm:$0xff]
        %v701 = vld [vmem:[%s679 + $0xf8] sm:$0xff]
        %v702 = vld [vmem:[%s679 + $0x108] sm:$0xff]
        %v703 = vld [vmem:[%s679 + $0x110] sm:$0xff]
        %v704 = vld [vmem:[%s679 + $0x120] sm:$0xff]
        %v705 = vld [vmem:[%s679 + $0x128] sm:$0xff]
        %v706 = vld [vmem:[%s679 + $0x138] sm:$0xff]
        %v707 = vld [vmem:[%s679 + $0x140] sm:$0xff]
        %v708 = vld [vmem:[%s679 + $0x150] sm:$0xff]
        %v709 = vld [vmem:[%s679 + $0x158] sm:$0xff]
        %v710 = vld [vmem:[%s679 + $0x168] sm:$0xff]
        %v711 = vld [vmem:[%s679 + $0x170] sm:$0xff]
        %712 = vst [vmem:[#allocation4 + $0x30] sm:$0xff] %v680
        %713 = vst [vmem:[#allocation4 + $0x78] sm:$0xff] %v681
        %714 = vst [vmem:[#allocation4 + $0xc0] sm:$0xff] %v682
        %715 = vst [vmem:[#allocation4 + $0x108] sm:$0xff] %v683
        %716 = vst [vmem:[#allocation4 + $0x150] sm:$0xff] %v684
        %717 = vst [vmem:[#allocation4 + $0x198] sm:$0xff] %v685
        %718 = vst [vmem:[#allocation4 + $0x1e0] sm:$0xff] %v686
        %719 = vst [vmem:[#allocation4 + $0x228] sm:$0xff] %v687
        %720 = vst [vmem:[#allocation4 + $0x270] sm:$0xff] %v688
        %721 = vst [vmem:[#allocation4 + $0x2b8] sm:$0xff] %v689
        %722 = vst [vmem:[#allocation4 + $0x300] sm:$0xff] %v690
        %723 = vst [vmem:[#allocation4 + $0x348] sm:$0xff] %v691
        %724 = vst [vmem:[#allocation4 + $0x390] sm:$0xff] %v692
        %725 = vst [vmem:[#allocation4 + $0x3d8] sm:$0xff] %v693
        %726 = vst [vmem:[#allocation4 + $0x420] sm:$0xff] %v694
        %727 = vst [vmem:[#allocation4 + $0x468] sm:$0xff] %v695
        %728 = vst [vmem:[#allocation4 + $0x4b0] sm:$0xff] %v696
        %729 = vst [vmem:[#allocation4 + $0x4f8] sm:$0xff] %v697
        %730 = vst [vmem:[#allocation4 + $0x540] sm:$0xff] %v698
        %731 = vst [vmem:[#allocation4 + $0x588] sm:$0xff] %v699
        %732 = vst [vmem:[#allocation4 + $0x5d0] sm:$0xff] %v700
        %733 = vst [vmem:[#allocation4 + $0x618] sm:$0xff] %v701
        %734 = vst [vmem:[#allocation4 + $0x660] sm:$0xff] %v702
        %735 = vst [vmem:[#allocation4 + $0x6a8] sm:$0xff] %v703
        %736 = vst [vmem:[#allocation4 + $0x6f0] sm:$0xff] %v704
        %737 = vst [vmem:[#allocation4 + $0x738] sm:$0xff] %v705
        %738 = vst [vmem:[#allocation4 + $0x780] sm:$0xff] %v706
        %739 = vst [vmem:[#allocation4 + $0x7c8] sm:$0xff] %v707
        %740 = vst [vmem:[#allocation4 + $0x810] sm:$0xff] %v708
        %741 = vst [vmem:[#allocation4 + $0x858] sm:$0xff] %v709
        %742 = vst [vmem:[#allocation4 + $0x8a0] sm:$0xff] %v710
        %743 = vst [vmem:[#allocation4 + $0x8e8] sm:$0xff] %v711
        %s744 = scalar_lea.vmem [#allocation2], %s677
        %v745 = vld [vmem:[%s744 + $0x4] sm:$0xff]
        %v746 = vld [vmem:[%s744 + $0xc] sm:$0xff]
        %v747 = vld [vmem:[%s744 + $0x1c] sm:$0xff]
        %v748 = vld [vmem:[%s744 + $0x24] sm:$0xff]
        %v749 = vld [vmem:[%s744 + $0x34] sm:$0xff]
        %v750 = vld [vmem:[%s744 + $0x3c] sm:$0xff]
        %v751 = vld [vmem:[%s744 + $0x4c] sm:$0xff]
        %v752 = vld [vmem:[%s744 + $0x54] sm:$0xff]
        %v753 = vld [vmem:[%s744 + $0x64] sm:$0xff]
        %v754 = vld [vmem:[%s744 + $0x6c] sm:$0xff]
        %v755 = vld [vmem:[%s744 + $0x7c] sm:$0xff]
        %v756 = vld [vmem:[%s744 + $0x84] sm:$0xff]
        %v757 = vld [vmem:[%s744 + $0x94] sm:$0xff]
        %v758 = vld [vmem:[%s744 + $0x9c] sm:$0xff]
        %v759 = vld [vmem:[%s744 + $0xac] sm:$0xff]
        %v760 = vld [vmem:[%s744 + $0xb4] sm:$0xff]
        %v761 = vld [vmem:[%s744 + $0xc4] sm:$0xff]
        %v762 = vld [vmem:[%s744 + $0xcc] sm:$0xff]
        %v763 = vld [vmem:[%s744 + $0xdc] sm:$0xff]
        %v764 = vld [vmem:[%s744 + $0xe4] sm:$0xff]
        %v765 = vld [vmem:[%s744 + $0xf4] sm:$0xff]
        %v766 = vld [vmem:[%s744 + $0xfc] sm:$0xff]
        %v767 = vld [vmem:[%s744 + $0x10c] sm:$0xff]
        %v768 = vld [vmem:[%s744 + $0x114] sm:$0xff]
        %v769 = vld [vmem:[%s744 + $0x124] sm:$0xff]
        %v770 = vld [vmem:[%s744 + $0x12c] sm:$0xff]
        %v771 = vld [vmem:[%s744 + $0x13c] sm:$0xff]
        %v772 = vld [vmem:[%s744 + $0x144] sm:$0xff]
        %v773 = vld [vmem:[%s744 + $0x154] sm:$0xff]
        %v774 = vld [vmem:[%s744 + $0x15c] sm:$0xff]
        %v775 = vld [vmem:[%s744 + $0x16c] sm:$0xff]
        %v776 = vld [vmem:[%s744 + $0x174] sm:$0xff]
        %777 = vst [vmem:[#allocation4 + $0x38] sm:$0xff] %v745
        %778 = vst [vmem:[#allocation4 + $0x80] sm:$0xff] %v746
        %779 = vst [vmem:[#allocation4 + $0xc8] sm:$0xff] %v747
        %780 = vst [vmem:[#allocation4 + $0x110] sm:$0xff] %v748
        %781 = vst [vmem:[#allocation4 + $0x158] sm:$0xff] %v749
        %782 = vst [vmem:[#allocation4 + $0x1a0] sm:$0xff] %v750
        %783 = vst [vmem:[#allocation4 + $0x1e8] sm:$0xff] %v751
        %784 = vst [vmem:[#allocation4 + $0x230] sm:$0xff] %v752
        %785 = vst [vmem:[#allocation4 + $0x278] sm:$0xff] %v753
        %786 = vst [vmem:[#allocation4 + $0x2c0] sm:$0xff] %v754
        %787 = vst [vmem:[#allocation4 + $0x308] sm:$0xff] %v755
        %788 = vst [vmem:[#allocation4 + $0x350] sm:$0xff] %v756
        %789 = vst [vmem:[#allocation4 + $0x398] sm:$0xff] %v757
        %790 = vst [vmem:[#allocation4 + $0x3e0] sm:$0xff] %v758
        %791 = vst [vmem:[#allocation4 + $0x428] sm:$0xff] %v759
        %792 = vst [vmem:[#allocation4 + $0x470] sm:$0xff] %v760
        %793 = vst [vmem:[#allocation4 + $0x4b8] sm:$0xff] %v761
        %794 = vst [vmem:[#allocation4 + $0x500] sm:$0xff] %v762
        %795 = vst [vmem:[#allocation4 + $0x548] sm:$0xff] %v763
        %796 = vst [vmem:[#allocation4 + $0x590] sm:$0xff] %v764
        %797 = vst [vmem:[#allocation4 + $0x5d8] sm:$0xff] %v765
        %798 = vst [vmem:[#allocation4 + $0x620] sm:$0xff] %v766
        %799 = vst [vmem:[#allocation4 + $0x668] sm:$0xff] %v767
        %800 = vst [vmem:[#allocation4 + $0x6b0] sm:$0xff] %v768
        %801 = vst [vmem:[#allocation4 + $0x6f8] sm:$0xff] %v769
        %802 = vst [vmem:[#allocation4 + $0x740] sm:$0xff] %v770
        %803 = vst [vmem:[#allocation4 + $0x788] sm:$0xff] %v771
        %804 = vst [vmem:[#allocation4 + $0x7d0] sm:$0xff] %v772
        %805 = vst [vmem:[#allocation4 + $0x818] sm:$0xff] %v773
        %806 = vst [vmem:[#allocation4 + $0x860] sm:$0xff] %v774
        %807 = vst [vmem:[#allocation4 + $0x8a8] sm:$0xff] %v775
        %808 = vst [vmem:[#allocation4 + $0x8f0] sm:$0xff] %v776
        %s809 = sadd.s32 %s413, %s677
        %s810 = scalar_lea.vmem [#allocation2], %s809
        %v811 = vld [vmem:[%s810] sm:$0xff]
        %v812 = vld [vmem:[%s810 + $0x8] sm:$0xff]
        %v813 = vld [vmem:[%s810 + $0x18] sm:$0xff]
        %v814 = vld [vmem:[%s810 + $0x20] sm:$0xff]
        %v815 = vld [vmem:[%s810 + $0x30] sm:$0xff]
        %v816 = vld [vmem:[%s810 + $0x38] sm:$0xff]
        %v817 = vld [vmem:[%s810 + $0x48] sm:$0xff]
        %v818 = vld [vmem:[%s810 + $0x50] sm:$0xff]
        %v819 = vld [vmem:[%s810 + $0x60] sm:$0xff]
        %v820 = vld [vmem:[%s810 + $0x68] sm:$0xff]
        %v821 = vld [vmem:[%s810 + $0x78] sm:$0xff]
        %v822 = vld [vmem:[%s810 + $0x80] sm:$0xff]
        %v823 = vld [vmem:[%s810 + $0x90] sm:$0xff]
        %v824 = vld [vmem:[%s810 + $0x98] sm:$0xff]
        %v825 = vld [vmem:[%s810 + $0xa8] sm:$0xff]
        %v826 = vld [vmem:[%s810 + $0xb0] sm:$0xff]
        %v827 = vld [vmem:[%s810 + $0xc0] sm:$0xff]
        %v828 = vld [vmem:[%s810 + $0xc8] sm:$0xff]
        %v829 = vld [vmem:[%s810 + $0xd8] sm:$0xff]
        %v830 = vld [vmem:[%s810 + $0xe0] sm:$0xff]
        %v831 = vld [vmem:[%s810 + $0xf0] sm:$0xff]
        %v832 = vld [vmem:[%s810 + $0xf8] sm:$0xff]
        %v833 = vld [vmem:[%s810 + $0x108] sm:$0xff]
        %v834 = vld [vmem:[%s810 + $0x110] sm:$0xff]
        %v835 = vld [vmem:[%s810 + $0x120] sm:$0xff]
        %v836 = vld [vmem:[%s810 + $0x128] sm:$0xff]
        %v837 = vld [vmem:[%s810 + $0x138] sm:$0xff]
        %v838 = vld [vmem:[%s810 + $0x140] sm:$0xff]
        %v839 = vld [vmem:[%s810 + $0x150] sm:$0xff]
        %v840 = vld [vmem:[%s810 + $0x158] sm:$0xff]
        %v841 = vld [vmem:[%s810 + $0x168] sm:$0xff]
        %v842 = vld [vmem:[%s810 + $0x170] sm:$0xff]
        %843 = vst [vmem:[#allocation4 + $0x40] sm:$0xff] %v811
        %844 = vst [vmem:[#allocation4 + $0x88] sm:$0xff] %v812
        %845 = vst [vmem:[#allocation4 + $0xd0] sm:$0xff] %v813
        %846 = vst [vmem:[#allocation4 + $0x118] sm:$0xff] %v814
        %847 = vst [vmem:[#allocation4 + $0x160] sm:$0xff] %v815
        %848 = vst [vmem:[#allocation4 + $0x1a8] sm:$0xff] %v816
        %849 = vst [vmem:[#allocation4 + $0x1f0] sm:$0xff] %v817
        %850 = vst [vmem:[#allocation4 + $0x238] sm:$0xff] %v818
        %851 = vst [vmem:[#allocation4 + $0x280] sm:$0xff] %v819
        %852 = vst [vmem:[#allocation4 + $0x2c8] sm:$0xff] %v820
        %853 = vst [vmem:[#allocation4 + $0x310] sm:$0xff] %v821
        %854 = vst [vmem:[#allocation4 + $0x358] sm:$0xff] %v822
        %855 = vst [vmem:[#allocation4 + $0x3a0] sm:$0xff] %v823
        %856 = vst [vmem:[#allocation4 + $0x3e8] sm:$0xff] %v824
        %857 = vst [vmem:[#allocation4 + $0x430] sm:$0xff] %v825
        %858 = vst [vmem:[#allocation4 + $0x478] sm:$0xff] %v826
        %859 = vst [vmem:[#allocation4 + $0x4c0] sm:$0xff] %v827
        %860 = vst [vmem:[#allocation4 + $0x508] sm:$0xff] %v828
        %861 = vst [vmem:[#allocation4 + $0x550] sm:$0xff] %v829
        %862 = vst [vmem:[#allocation4 + $0x598] sm:$0xff] %v830
        %863 = vst [vmem:[#allocation4 + $0x5e0] sm:$0xff] %v831
        %864 = vst [vmem:[#allocation4 + $0x628] sm:$0xff] %v832
        %865 = vst [vmem:[#allocation4 + $0x670] sm:$0xff] %v833
        %866 = vst [vmem:[#allocation4 + $0x6b8] sm:$0xff] %v834
        %867 = vst [vmem:[#allocation4 + $0x700] sm:$0xff] %v835
        %868 = vst [vmem:[#allocation4 + $0x748] sm:$0xff] %v836
        %869 = vst [vmem:[#allocation4 + $0x790] sm:$0xff] %v837
        %870 = vst [vmem:[#allocation4 + $0x7d8] sm:$0xff] %v838
        %871 = vst [vmem:[#allocation4 + $0x820] sm:$0xff] %v839
        %872 = vst [vmem:[#allocation4 + $0x868] sm:$0xff] %v840
        %873 = vst [vmem:[#allocation4 + $0x8b0] sm:$0xff] %v841
        %874 = vst [vmem:[#allocation4 + $0x8f8] sm:$0xff] %v842
        %v875 = vld [vmem:[%s196] sm:$0xff]
        %v876 = vld [vmem:[%s196 + $0x8] sm:$0xff]
        %v877 = vld [vmem:[%s196 + $0x10] sm:$0xff]
        %v878 = vld [vmem:[%s196 + $0x18] sm:$0xff]
        %v879 = vld [vmem:[%s196 + $0x20] sm:$0xff]
        %v880 = vld [vmem:[%s196 + $0x28] sm:$0xff]
        %v881 = vld [vmem:[%s196 + $0x30] sm:$0xff]
        %v882 = vld [vmem:[%s196 + $0x38] sm:$0xff]
        %v883 = vld [vmem:[%s196 + $0x40] sm:$0xff]
        %v884 = vld [vmem:[%s196 + $0x48] sm:$0xff]
        %v885 = vld [vmem:[%s196 + $0x50] sm:$0xff]
        %v886 = vld [vmem:[%s196 + $0x58] sm:$0xff]
        %v887 = vld [vmem:[%s196 + $0x60] sm:$0xff]
        %v888 = vld [vmem:[%s196 + $0x68] sm:$0xff]
        %v889 = vld [vmem:[%s196 + $0x70] sm:$0xff]
        %v890 = vld [vmem:[%s196 + $0x78] sm:$0xff]
        %v891 = vld [vmem:[%s196 + $0x80] sm:$0xff]
        %v892 = vld [vmem:[%s196 + $0x88] sm:$0xff]
        %v893 = vld [vmem:[%s196 + $0x90] sm:$0xff]
        %v894 = vld [vmem:[%s196 + $0x98] sm:$0xff]
        %v895 = vld [vmem:[%s196 + $0xa0] sm:$0xff]
        %v896 = vld [vmem:[%s196 + $0xa8] sm:$0xff]
        %v897 = vld [vmem:[%s196 + $0xb0] sm:$0xff]
        %v898 = vld [vmem:[%s196 + $0xb8] sm:$0xff]
        %v899 = vld [vmem:[%s196 + $0xc0] sm:$0xff]
        %v900 = vld [vmem:[%s196 + $0xc8] sm:$0xff]
        %v901 = vld [vmem:[%s196 + $0xd0] sm:$0xff]
        %v902 = vld [vmem:[%s196 + $0xd8] sm:$0xff]
        %v903 = vld [vmem:[%s196 + $0xe0] sm:$0xff]
        %v904 = vld [vmem:[%s196 + $0xe8] sm:$0xff]
        %v905 = vld [vmem:[%s196 + $0xf0] sm:$0xff]
        %v906 = vld [vmem:[%s196 + $0xf8] sm:$0xff]
        %v907 = vld [vmem:[%s196 + $0x100] sm:$0xff]
        %v908 = vld [vmem:[%s196 + $0x108] sm:$0xff]
        %v909 = vld [vmem:[%s196 + $0x110] sm:$0xff]
        %v910 = vld [vmem:[%s196 + $0x118] sm:$0xff]
        %v911 = vld [vmem:[%s196 + $0x120] sm:$0xff]
        %v912 = vld [vmem:[%s196 + $0x128] sm:$0xff]
        %v913 = vld [vmem:[%s196 + $0x130] sm:$0xff]
        %v914 = vld [vmem:[%s196 + $0x138] sm:$0xff]
        %v915 = vld [vmem:[%s196 + $0x140] sm:$0xff]
        %v916 = vld [vmem:[%s196 + $0x148] sm:$0xff]
        %v917 = vld [vmem:[%s196 + $0x150] sm:$0xff]
        %v918 = vld [vmem:[%s196 + $0x158] sm:$0xff]
        %v919 = vld [vmem:[%s196 + $0x160] sm:$0xff]
        %v920 = vld [vmem:[%s196 + $0x168] sm:$0xff]
        %v921 = vld [vmem:[%s196 + $0x170] sm:$0xff]
        %v922 = vld [vmem:[%s196 + $0x178] sm:$0xff]
        %v923 = vld [vmem:[%s196 + $0x180] sm:$0xff]
        %v924 = vld [vmem:[%s196 + $0x188] sm:$0xff]
        %v925 = vld [vmem:[%s196 + $0x190] sm:$0xff]
        %v926 = vld [vmem:[%s196 + $0x198] sm:$0xff]
        %v927 = vld [vmem:[%s196 + $0x1a0] sm:$0xff]
        %v928 = vld [vmem:[%s196 + $0x1a8] sm:$0xff]
        %v929 = vld [vmem:[%s196 + $0x1b0] sm:$0xff]
        %v930 = vld [vmem:[%s196 + $0x1b8] sm:$0xff]
        %v931 = vld [vmem:[%s196 + $0x1c0] sm:$0xff]
        %v932 = vld [vmem:[%s196 + $0x1c8] sm:$0xff]
        %v933 = vld [vmem:[%s196 + $0x1d0] sm:$0xff]
        %v934 = vld [vmem:[%s196 + $0x1d8] sm:$0xff]
        %v935 = vld [vmem:[%s196 + $0x1e0] sm:$0xff]
        %v936 = vld [vmem:[%s196 + $0x1e8] sm:$0xff]
        %v937 = vld [vmem:[%s196 + $0x1f0] sm:$0xff]
        %v938 = vld [vmem:[%s196 + $0x1f8] sm:$0xff]
        %v939 = vld [vmem:[%s196 + $0x200] sm:$0xff]
        %v940 = vld [vmem:[%s196 + $0x208] sm:$0xff]
        %v941 = vld [vmem:[%s196 + $0x210] sm:$0xff]
        %v942 = vld [vmem:[%s196 + $0x218] sm:$0xff]
        %v943 = vld [vmem:[%s196 + $0x220] sm:$0xff]
        %v944 = vld [vmem:[%s196 + $0x228] sm:$0xff]
        %v945 = vld [vmem:[%s196 + $0x230] sm:$0xff]
        %v946 = vld [vmem:[%s196 + $0x238] sm:$0xff]
        %v947 = vld [vmem:[%s196 + $0x240] sm:$0xff]
        %v948 = vld [vmem:[%s196 + $0x248] sm:$0xff]
        %v949 = vld [vmem:[%s196 + $0x250] sm:$0xff]
        %v950 = vld [vmem:[%s196 + $0x258] sm:$0xff]
        %v951 = vld [vmem:[%s196 + $0x260] sm:$0xff]
        %v952 = vld [vmem:[%s196 + $0x268] sm:$0xff]
        %v953 = vld [vmem:[%s196 + $0x270] sm:$0xff]
        %v954 = vld [vmem:[%s196 + $0x278] sm:$0xff]
        %v955 = vld [vmem:[%s196 + $0x280] sm:$0xff]
        %v956 = vld [vmem:[%s196 + $0x288] sm:$0xff]
        %v957 = vld [vmem:[%s196 + $0x290] sm:$0xff]
        %v958 = vld [vmem:[%s196 + $0x298] sm:$0xff]
        %v959 = vld [vmem:[%s196 + $0x2a0] sm:$0xff]
        %v960 = vld [vmem:[%s196 + $0x2a8] sm:$0xff]
        %v961 = vld [vmem:[%s196 + $0x2b0] sm:$0xff]
        %v962 = vld [vmem:[%s196 + $0x2b8] sm:$0xff]
        %v963 = vld [vmem:[%s196 + $0x2c0] sm:$0xff]
        %v964 = vld [vmem:[%s196 + $0x2c8] sm:$0xff]
        %v965 = vld [vmem:[%s196 + $0x2d0] sm:$0xff]
        %v966 = vld [vmem:[%s196 + $0x2d8] sm:$0xff]
        %v967 = vld [vmem:[%s196 + $0x2e0] sm:$0xff]
        %v968 = vld [vmem:[%s196 + $0x2e8] sm:$0xff]
        %v969 = vld [vmem:[%s196 + $0x2f0] sm:$0xff]
        %v970 = vld [vmem:[%s196 + $0x2f8] sm:$0xff]
        %v971 = vld [vmem:[%s196 + $0x300] sm:$0xff]
        %v972 = vld [vmem:[%s196 + $0x308] sm:$0xff]
        %v973 = vld [vmem:[%s196 + $0x310] sm:$0xff]
        %v974 = vld [vmem:[%s196 + $0x318] sm:$0xff]
        %v975 = vld [vmem:[%s196 + $0x320] sm:$0xff]
        %v976 = vld [vmem:[%s196 + $0x328] sm:$0xff]
        %v977 = vld [vmem:[%s196 + $0x330] sm:$0xff]
        %v978 = vld [vmem:[%s196 + $0x338] sm:$0xff]
        %v979 = vld [vmem:[%s196 + $0x340] sm:$0xff]
        %v980 = vld [vmem:[%s196 + $0x348] sm:$0xff]
        %v981 = vld [vmem:[%s196 + $0x350] sm:$0xff]
        %v982 = vld [vmem:[%s196 + $0x358] sm:$0xff]
        %v983 = vld [vmem:[%s196 + $0x360] sm:$0xff]
        %v984 = vld [vmem:[%s196 + $0x368] sm:$0xff]
        %v985 = vld [vmem:[%s196 + $0x370] sm:$0xff]
        %v986 = vld [vmem:[%s196 + $0x378] sm:$0xff]
        %v987 = vld [vmem:[%s196 + $0x380] sm:$0xff]
        %v988 = vld [vmem:[%s196 + $0x388] sm:$0xff]
        %v989 = vld [vmem:[%s196 + $0x390] sm:$0xff]
        %v990 = vld [vmem:[%s196 + $0x398] sm:$0xff]
        %v991 = vld [vmem:[%s196 + $0x3a0] sm:$0xff]
        %v992 = vld [vmem:[%s196 + $0x3a8] sm:$0xff]
        %v993 = vld [vmem:[%s196 + $0x3b0] sm:$0xff]
        %v994 = vld [vmem:[%s196 + $0x3b8] sm:$0xff]
        %v995 = vld [vmem:[%s196 + $0x3c0] sm:$0xff]
        %v996 = vld [vmem:[%s196 + $0x3c8] sm:$0xff]
        %v997 = vld [vmem:[%s196 + $0x3d0] sm:$0xff]
        %v998 = vld [vmem:[%s196 + $0x3d8] sm:$0xff]
        %v999 = vld [vmem:[%s196 + $0x3e0] sm:$0xff]
        %v1000 = vld [vmem:[%s196 + $0x3e8] sm:$0xff]
        %v1001 = vld [vmem:[%s196 + $0x3f0] sm:$0xff]
        %v1002 = vld [vmem:[%s196 + $0x3f8] sm:$0xff]
        %v1003 = vld [vmem:[%s196 + $0x400] sm:$0xff]
        %v1004 = vld [vmem:[%s196 + $0x408] sm:$0xff]
        %v1005 = vld [vmem:[%s196 + $0x410] sm:$0xff]
        %v1006 = vld [vmem:[%s196 + $0x418] sm:$0xff]
        %v1007 = vld [vmem:[%s196 + $0x420] sm:$0xff]
        %v1008 = vld [vmem:[%s196 + $0x428] sm:$0xff]
        %v1009 = vld [vmem:[%s196 + $0x430] sm:$0xff]
        %v1010 = vld [vmem:[%s196 + $0x438] sm:$0xff]
        %v1011 = vld [vmem:[%s196 + $0x440] sm:$0xff]
        %v1012 = vld [vmem:[%s196 + $0x448] sm:$0xff]
        %v1013 = vld [vmem:[%s196 + $0x450] sm:$0xff]
        %v1014 = vld [vmem:[%s196 + $0x458] sm:$0xff]
        %v1015 = vld [vmem:[%s196 + $0x460] sm:$0xff]
        %v1016 = vld [vmem:[%s196 + $0x468] sm:$0xff]
        %v1017 = vld [vmem:[%s196 + $0x470] sm:$0xff]
        %v1018 = vld [vmem:[%s196 + $0x478] sm:$0xff]
        %v1019 = vld [vmem:[#allocation5] sm:$0xff]
        %v1020 = vld [vmem:[#allocation5 + $0x8] sm:$0xff]
        %v1021 = vld [vmem:[#allocation5 + $0x10] sm:$0xff]
        %v1022 = vld [vmem:[#allocation5 + $0x18] sm:$0xff]
        %v1023 = vld [vmem:[#allocation5 + $0x20] sm:$0xff]
        %v1024 = vld [vmem:[#allocation5 + $0x28] sm:$0xff]
        %v1025 = vld [vmem:[#allocation5 + $0x30] sm:$0xff]
        %v1026 = vld [vmem:[#allocation5 + $0x38] sm:$0xff]
        %v1027 = vld [vmem:[#allocation5 + $0x40] sm:$0xff]
        %v1028 = vld [vmem:[#allocation5 + $0x48] sm:$0xff]
        %v1029 = vld [vmem:[#allocation5 + $0x50] sm:$0xff]
        %v1030 = vld [vmem:[#allocation5 + $0x58] sm:$0xff]
        %v1031 = vld [vmem:[#allocation5 + $0x60] sm:$0xff]
        %v1032 = vld [vmem:[#allocation5 + $0x68] sm:$0xff]
        %v1033 = vld [vmem:[#allocation5 + $0x70] sm:$0xff]
        %v1034 = vld [vmem:[#allocation5 + $0x78] sm:$0xff]
        %v1035 = vld [vmem:[#allocation5 + $0x80] sm:$0xff]
        %v1036 = vld [vmem:[#allocation5 + $0x88] sm:$0xff]
        %v1037 = vld [vmem:[#allocation5 + $0x90] sm:$0xff]
        %v1038 = vld [vmem:[#allocation5 + $0x98] sm:$0xff]
        %v1039 = vld [vmem:[#allocation5 + $0xa0] sm:$0xff]
        %v1040 = vld [vmem:[#allocation5 + $0xa8] sm:$0xff]
        %v1041 = vld [vmem:[#allocation5 + $0xb0] sm:$0xff]
        %v1042 = vld [vmem:[#allocation5 + $0xb8] sm:$0xff]
        %v1043 = vld [vmem:[#allocation5 + $0xc0] sm:$0xff]
        %v1044 = vld [vmem:[#allocation5 + $0xc8] sm:$0xff]
        %v1045 = vld [vmem:[#allocation5 + $0xd0] sm:$0xff]
        %v1046 = vld [vmem:[#allocation5 + $0xd8] sm:$0xff]
        %v1047 = vld [vmem:[#allocation5 + $0xe0] sm:$0xff]
        %v1048 = vld [vmem:[#allocation5 + $0xe8] sm:$0xff]
        %v1049 = vld [vmem:[#allocation5 + $0xf0] sm:$0xff]
        %v1050 = vld [vmem:[#allocation5 + $0xf8] sm:$0xff]
        %v1051 = vld [vmem:[#allocation4] sm:$0xff]
        %v1052 = vld [vmem:[#allocation4 + $0x8] sm:$0xff]
        %v1053 = vld [vmem:[#allocation4 + $0x10] sm:$0xff]
        %v1054 = vld [vmem:[#allocation4 + $0x18] sm:$0xff]
        %v1055 = vld [vmem:[#allocation4 + $0x20] sm:$0xff]
        %v1056 = vld [vmem:[#allocation4 + $0x28] sm:$0xff]
        %v1057 = vld [vmem:[#allocation4 + $0x30] sm:$0xff]
        %v1058 = vld [vmem:[#allocation4 + $0x38] sm:$0xff]
        %v1059 = vld [vmem:[#allocation4 + $0x40] sm:$0xff]
        %v1060 = vld [vmem:[#allocation4 + $0x48] sm:$0xff]
        %v1061 = vld [vmem:[#allocation4 + $0x50] sm:$0xff]
        %v1062 = vld [vmem:[#allocation4 + $0x58] sm:$0xff]
        %v1063 = vld [vmem:[#allocation4 + $0x60] sm:$0xff]
        %v1064 = vld [vmem:[#allocation4 + $0x68] sm:$0xff]
        %v1065 = vld [vmem:[#allocation4 + $0x70] sm:$0xff]
        %v1066 = vld [vmem:[#allocation4 + $0x78] sm:$0xff]
        %v1067 = vld [vmem:[#allocation4 + $0x80] sm:$0xff]
        %v1068 = vld [vmem:[#allocation4 + $0x88] sm:$0xff]
        %v1069 = vld [vmem:[#allocation4 + $0x90] sm:$0xff]
        %v1070 = vld [vmem:[#allocation4 + $0x98] sm:$0xff]
        %v1071 = vld [vmem:[#allocation4 + $0xa0] sm:$0xff]
        %v1072 = vld [vmem:[#allocation4 + $0xa8] sm:$0xff]
        %v1073 = vld [vmem:[#allocation4 + $0xb0] sm:$0xff]
        %v1074 = vld [vmem:[#allocation4 + $0xb8] sm:$0xff]
        %v1075 = vld [vmem:[#allocation4 + $0xc0] sm:$0xff]
        %v1076 = vld [vmem:[#allocation4 + $0xc8] sm:$0xff]
        %v1077 = vld [vmem:[#allocation4 + $0xd0] sm:$0xff]
        %v1078 = vld [vmem:[#allocation4 + $0xd8] sm:$0xff]
        %v1079 = vld [vmem:[#allocation4 + $0xe0] sm:$0xff]
        %v1080 = vld [vmem:[#allocation4 + $0xe8] sm:$0xff]
        %v1081 = vld [vmem:[#allocation4 + $0xf0] sm:$0xff]
        %v1082 = vld [vmem:[#allocation4 + $0xf8] sm:$0xff]
        %v1083 = vld [vmem:[#allocation4 + $0x100] sm:$0xff]
        %v1084 = vld [vmem:[#allocation4 + $0x108] sm:$0xff]
        %v1085 = vld [vmem:[#allocation4 + $0x110] sm:$0xff]
        %v1086 = vld [vmem:[#allocation4 + $0x118] sm:$0xff]
        %v1087 = vld [vmem:[#allocation4 + $0x120] sm:$0xff]
        %v1088 = vld [vmem:[#allocation4 + $0x128] sm:$0xff]
        %v1089 = vld [vmem:[#allocation4 + $0x130] sm:$0xff]
        %v1090 = vld [vmem:[#allocation4 + $0x138] sm:$0xff]
        %v1091 = vld [vmem:[#allocation4 + $0x140] sm:$0xff]
        %v1092 = vld [vmem:[#allocation4 + $0x148] sm:$0xff]
        %v1093 = vld [vmem:[#allocation4 + $0x150] sm:$0xff]
        %v1094 = vld [vmem:[#allocation4 + $0x158] sm:$0xff]
        %v1095 = vld [vmem:[#allocation4 + $0x160] sm:$0xff]
        %v1096 = vld [vmem:[#allocation4 + $0x168] sm:$0xff]
        %v1097 = vld [vmem:[#allocation4 + $0x170] sm:$0xff]
        %v1098 = vld [vmem:[#allocation4 + $0x178] sm:$0xff]
        %v1099 = vld [vmem:[#allocation4 + $0x180] sm:$0xff]
        %v1100 = vld [vmem:[#allocation4 + $0x188] sm:$0xff]
        %v1101 = vld [vmem:[#allocation4 + $0x190] sm:$0xff]
        %v1102 = vld [vmem:[#allocation4 + $0x198] sm:$0xff]
        %v1103 = vld [vmem:[#allocation4 + $0x1a0] sm:$0xff]
        %v1104 = vld [vmem:[#allocation4 + $0x1a8] sm:$0xff]
        %v1105 = vld [vmem:[#allocation4 + $0x1b0] sm:$0xff]
        %v1106 = vld [vmem:[#allocation4 + $0x1b8] sm:$0xff]
        %v1107 = vld [vmem:[#allocation4 + $0x1c0] sm:$0xff]
        %v1108 = vld [vmem:[#allocation4 + $0x1c8] sm:$0xff]
        %v1109 = vld [vmem:[#allocation4 + $0x1d0] sm:$0xff]
        %v1110 = vld [vmem:[#allocation4 + $0x1d8] sm:$0xff]
        %v1111 = vld [vmem:[#allocation4 + $0x1e0] sm:$0xff]
        %v1112 = vld [vmem:[#allocation4 + $0x1e8] sm:$0xff]
        %v1113 = vld [vmem:[#allocation4 + $0x1f0] sm:$0xff]
        %v1114 = vld [vmem:[#allocation4 + $0x1f8] sm:$0xff]
        %v1115 = vld [vmem:[#allocation4 + $0x200] sm:$0xff]
        %v1116 = vld [vmem:[#allocation4 + $0x208] sm:$0xff]
        %v1117 = vld [vmem:[#allocation4 + $0x210] sm:$0xff]
        %v1118 = vld [vmem:[#allocation4 + $0x218] sm:$0xff]
        %v1119 = vld [vmem:[#allocation4 + $0x220] sm:$0xff]
        %v1120 = vld [vmem:[#allocation4 + $0x228] sm:$0xff]
        %v1121 = vld [vmem:[#allocation4 + $0x230] sm:$0xff]
        %v1122 = vld [vmem:[#allocation4 + $0x238] sm:$0xff]
        %v1123 = vld [vmem:[#allocation4 + $0x240] sm:$0xff]
        %v1124 = vld [vmem:[#allocation4 + $0x248] sm:$0xff]
        %v1125 = vld [vmem:[#allocation4 + $0x250] sm:$0xff]
        %v1126 = vld [vmem:[#allocation4 + $0x258] sm:$0xff]
        %v1127 = vld [vmem:[#allocation4 + $0x260] sm:$0xff]
        %v1128 = vld [vmem:[#allocation4 + $0x268] sm:$0xff]
        %v1129 = vld [vmem:[#allocation4 + $0x270] sm:$0xff]
        %v1130 = vld [vmem:[#allocation4 + $0x278] sm:$0xff]
        %v1131 = vld [vmem:[#allocation4 + $0x280] sm:$0xff]
        %v1132 = vld [vmem:[#allocation4 + $0x288] sm:$0xff]
        %v1133 = vld [vmem:[#allocation4 + $0x290] sm:$0xff]
        %v1134 = vld [vmem:[#allocation4 + $0x298] sm:$0xff]
        %v1135 = vld [vmem:[#allocation4 + $0x2a0] sm:$0xff]
        %v1136 = vld [vmem:[#allocation4 + $0x2a8] sm:$0xff]
        %v1137 = vld [vmem:[#allocation4 + $0x2b0] sm:$0xff]
        %v1138 = vld [vmem:[#allocation4 + $0x2b8] sm:$0xff]
        %v1139 = vld [vmem:[#allocation4 + $0x2c0] sm:$0xff]
        %v1140 = vld [vmem:[#allocation4 + $0x2c8] sm:$0xff]
        %v1141 = vld [vmem:[#allocation4 + $0x2d0] sm:$0xff]
        %v1142 = vld [vmem:[#allocation4 + $0x2d8] sm:$0xff]
        %v1143 = vld [vmem:[#allocation4 + $0x2e0] sm:$0xff]
        %v1144 = vld [vmem:[#allocation4 + $0x2e8] sm:$0xff]
        %v1145 = vld [vmem:[#allocation4 + $0x2f0] sm:$0xff]
        %v1146 = vld [vmem:[#allocation4 + $0x2f8] sm:$0xff]
        %v1147 = vld [vmem:[#allocation4 + $0x300] sm:$0xff]
        %v1148 = vld [vmem:[#allocation4 + $0x308] sm:$0xff]
        %v1149 = vld [vmem:[#allocation4 + $0x310] sm:$0xff]
        %v1150 = vld [vmem:[#allocation4 + $0x318] sm:$0xff]
        %v1151 = vld [vmem:[#allocation4 + $0x320] sm:$0xff]
        %v1152 = vld [vmem:[#allocation4 + $0x328] sm:$0xff]
        %v1153 = vld [vmem:[#allocation4 + $0x330] sm:$0xff]
        %v1154 = vld [vmem:[#allocation4 + $0x338] sm:$0xff]
        %v1155 = vld [vmem:[#allocation4 + $0x340] sm:$0xff]
        %v1156 = vld [vmem:[#allocation4 + $0x348] sm:$0xff]
        %v1157 = vld [vmem:[#allocation4 + $0x350] sm:$0xff]
        %v1158 = vld [vmem:[#allocation4 + $0x358] sm:$0xff]
        %v1159 = vld [vmem:[#allocation4 + $0x360] sm:$0xff]
        %v1160 = vld [vmem:[#allocation4 + $0x368] sm:$0xff]
        %v1161 = vld [vmem:[#allocation4 + $0x370] sm:$0xff]
        %v1162 = vld [vmem:[#allocation4 + $0x378] sm:$0xff]
        %v1163 = vld [vmem:[#allocation4 + $0x380] sm:$0xff]
        %v1164 = vld [vmem:[#allocation4 + $0x388] sm:$0xff]
        %v1165 = vld [vmem:[#allocation4 + $0x390] sm:$0xff]
        %v1166 = vld [vmem:[#allocation4 + $0x398] sm:$0xff]
        %v1167 = vld [vmem:[#allocation4 + $0x3a0] sm:$0xff]
        %v1168 = vld [vmem:[#allocation4 + $0x3a8] sm:$0xff]
        %v1169 = vld [vmem:[#allocation4 + $0x3b0] sm:$0xff]
        %v1170 = vld [vmem:[#allocation4 + $0x3b8] sm:$0xff]
        %v1171 = vld [vmem:[#allocation4 + $0x3c0] sm:$0xff]
        %v1172 = vld [vmem:[#allocation4 + $0x3c8] sm:$0xff]
        %v1173 = vld [vmem:[#allocation4 + $0x3d0] sm:$0xff]
        %v1174 = vld [vmem:[#allocation4 + $0x3d8] sm:$0xff]
        %v1175 = vld [vmem:[#allocation4 + $0x3e0] sm:$0xff]
        %v1176 = vld [vmem:[#allocation4 + $0x3e8] sm:$0xff]
        %v1177 = vld [vmem:[#allocation4 + $0x3f0] sm:$0xff]
        %v1178 = vld [vmem:[#allocation4 + $0x3f8] sm:$0xff]
        %v1179 = vld [vmem:[#allocation4 + $0x400] sm:$0xff]
        %v1180 = vld [vmem:[#allocation4 + $0x408] sm:$0xff]
        %v1181 = vld [vmem:[#allocation4 + $0x410] sm:$0xff]
        %v1182 = vld [vmem:[#allocation4 + $0x418] sm:$0xff]
        %v1183 = vld [vmem:[#allocation4 + $0x420] sm:$0xff]
        %v1184 = vld [vmem:[#allocation4 + $0x428] sm:$0xff]
        %v1185 = vld [vmem:[#allocation4 + $0x430] sm:$0xff]
        %v1186 = vld [vmem:[#allocation4 + $0x438] sm:$0xff]
        %v1187 = vld [vmem:[#allocation4 + $0x440] sm:$0xff]
        %v1188 = vld [vmem:[#allocation4 + $0x448] sm:$0xff]
        %v1189 = vld [vmem:[#allocation4 + $0x450] sm:$0xff]
        %v1190 = vld [vmem:[#allocation4 + $0x458] sm:$0xff]
        %v1191 = vld [vmem:[#allocation4 + $0x460] sm:$0xff]
        %v1192 = vld [vmem:[#allocation4 + $0x468] sm:$0xff]
        %v1193 = vld [vmem:[#allocation4 + $0x470] sm:$0xff]
        %v1194 = vld [vmem:[#allocation4 + $0x478] sm:$0xff]
        %v1195 = vld [vmem:[#allocation4 + $0x480] sm:$0xff]
        %v1196 = vld [vmem:[#allocation4 + $0x488] sm:$0xff]
        %v1197 = vld [vmem:[#allocation4 + $0x490] sm:$0xff]
        %v1198 = vld [vmem:[#allocation4 + $0x498] sm:$0xff]
        %v1199 = vld [vmem:[#allocation4 + $0x4a0] sm:$0xff]
        %v1200 = vld [vmem:[#allocation4 + $0x4a8] sm:$0xff]
        %v1201 = vld [vmem:[#allocation4 + $0x4b0] sm:$0xff]
        %v1202 = vld [vmem:[#allocation4 + $0x4b8] sm:$0xff]
        %v1203 = vld [vmem:[#allocation4 + $0x4c0] sm:$0xff]
        %v1204 = vld [vmem:[#allocation4 + $0x4c8] sm:$0xff]
        %v1205 = vld [vmem:[#allocation4 + $0x4d0] sm:$0xff]
        %v1206 = vld [vmem:[#allocation4 + $0x4d8] sm:$0xff]
        %v1207 = vld [vmem:[#allocation4 + $0x4e0] sm:$0xff]
        %v1208 = vld [vmem:[#allocation4 + $0x4e8] sm:$0xff]
        %v1209 = vld [vmem:[#allocation4 + $0x4f0] sm:$0xff]
        %v1210 = vld [vmem:[#allocation4 + $0x4f8] sm:$0xff]
        %v1211 = vld [vmem:[#allocation4 + $0x500] sm:$0xff]
        %v1212 = vld [vmem:[#allocation4 + $0x508] sm:$0xff]
        %v1213 = vld [vmem:[#allocation4 + $0x510] sm:$0xff]
        %v1214 = vld [vmem:[#allocation4 + $0x518] sm:$0xff]
        %v1215 = vld [vmem:[#allocation4 + $0x520] sm:$0xff]
        %v1216 = vld [vmem:[#allocation4 + $0x528] sm:$0xff]
        %v1217 = vld [vmem:[#allocation4 + $0x530] sm:$0xff]
        %v1218 = vld [vmem:[#allocation4 + $0x538] sm:$0xff]
        %v1219 = vld [vmem:[#allocation4 + $0x540] sm:$0xff]
        %v1220 = vld [vmem:[#allocation4 + $0x548] sm:$0xff]
        %v1221 = vld [vmem:[#allocation4 + $0x550] sm:$0xff]
        %v1222 = vld [vmem:[#allocation4 + $0x558] sm:$0xff]
        %v1223 = vld [vmem:[#allocation4 + $0x560] sm:$0xff]
        %v1224 = vld [vmem:[#allocation4 + $0x568] sm:$0xff]
        %v1225 = vld [vmem:[#allocation4 + $0x570] sm:$0xff]
        %v1226 = vld [vmem:[#allocation4 + $0x578] sm:$0xff]
        %v1227 = vld [vmem:[#allocation4 + $0x580] sm:$0xff]
        %v1228 = vld [vmem:[#allocation4 + $0x588] sm:$0xff]
        %v1229 = vld [vmem:[#allocation4 + $0x590] sm:$0xff]
        %v1230 = vld [vmem:[#allocation4 + $0x598] sm:$0xff]
        %v1231 = vld [vmem:[#allocation4 + $0x5a0] sm:$0xff]
        %v1232 = vld [vmem:[#allocation4 + $0x5a8] sm:$0xff]
        %v1233 = vld [vmem:[#allocation4 + $0x5b0] sm:$0xff]
        %v1234 = vld [vmem:[#allocation4 + $0x5b8] sm:$0xff]
        %v1235 = vld [vmem:[#allocation4 + $0x5c0] sm:$0xff]
        %v1236 = vld [vmem:[#allocation4 + $0x5c8] sm:$0xff]
        %v1237 = vld [vmem:[#allocation4 + $0x5d0] sm:$0xff]
        %v1238 = vld [vmem:[#allocation4 + $0x5d8] sm:$0xff]
        %v1239 = vld [vmem:[#allocation4 + $0x5e0] sm:$0xff]
        %v1240 = vld [vmem:[#allocation4 + $0x5e8] sm:$0xff]
        %v1241 = vld [vmem:[#allocation4 + $0x5f0] sm:$0xff]
        %v1242 = vld [vmem:[#allocation4 + $0x5f8] sm:$0xff]
        %v1243 = vld [vmem:[#allocation4 + $0x600] sm:$0xff]
        %v1244 = vld [vmem:[#allocation4 + $0x608] sm:$0xff]
        %v1245 = vld [vmem:[#allocation4 + $0x610] sm:$0xff]
        %v1246 = vld [vmem:[#allocation4 + $0x618] sm:$0xff]
        %v1247 = vld [vmem:[#allocation4 + $0x620] sm:$0xff]
        %v1248 = vld [vmem:[#allocation4 + $0x628] sm:$0xff]
        %v1249 = vld [vmem:[#allocation4 + $0x630] sm:$0xff]
        %v1250 = vld [vmem:[#allocation4 + $0x638] sm:$0xff]
        %v1251 = vld [vmem:[#allocation4 + $0x640] sm:$0xff]
        %v1252 = vld [vmem:[#allocation4 + $0x648] sm:$0xff]
        %v1253 = vld [vmem:[#allocation4 + $0x650] sm:$0xff]
        %v1254 = vld [vmem:[#allocation4 + $0x658] sm:$0xff]
        %v1255 = vld [vmem:[#allocation4 + $0x660] sm:$0xff]
        %v1256 = vld [vmem:[#allocation4 + $0x668] sm:$0xff]
        %v1257 = vld [vmem:[#allocation4 + $0x670] sm:$0xff]
        %v1258 = vld [vmem:[#allocation4 + $0x678] sm:$0xff]
        %v1259 = vld [vmem:[#allocation4 + $0x680] sm:$0xff]
        %v1260 = vld [vmem:[#allocation4 + $0x688] sm:$0xff]
        %v1261 = vld [vmem:[#allocation4 + $0x690] sm:$0xff]
        %v1262 = vld [vmem:[#allocation4 + $0x698] sm:$0xff]
        %v1263 = vld [vmem:[#allocation4 + $0x6a0] sm:$0xff]
        %v1264 = vld [vmem:[#allocation4 + $0x6a8] sm:$0xff]
        %v1265 = vld [vmem:[#allocation4 + $0x6b0] sm:$0xff]
        %v1266 = vld [vmem:[#allocation4 + $0x6b8] sm:$0xff]
        %v1267 = vld [vmem:[#allocation4 + $0x6c0] sm:$0xff]
        %v1268 = vld [vmem:[#allocation4 + $0x6c8] sm:$0xff]
        %v1269 = vld [vmem:[#allocation4 + $0x6d0] sm:$0xff]
        %v1270 = vld [vmem:[#allocation4 + $0x6d8] sm:$0xff]
        %v1271 = vld [vmem:[#allocation4 + $0x6e0] sm:$0xff]
        %v1272 = vld [vmem:[#allocation4 + $0x6e8] sm:$0xff]
        %v1273 = vld [vmem:[#allocation4 + $0x6f0] sm:$0xff]
        %v1274 = vld [vmem:[#allocation4 + $0x6f8] sm:$0xff]
        %v1275 = vld [vmem:[#allocation4 + $0x700] sm:$0xff]
        %v1276 = vld [vmem:[#allocation4 + $0x708] sm:$0xff]
        %v1277 = vld [vmem:[#allocation4 + $0x710] sm:$0xff]
        %v1278 = vld [vmem:[#allocation4 + $0x718] sm:$0xff]
        %v1279 = vld [vmem:[#allocation4 + $0x720] sm:$0xff]
        %v1280 = vld [vmem:[#allocation4 + $0x728] sm:$0xff]
        %v1281 = vld [vmem:[#allocation4 + $0x730] sm:$0xff]
        %v1282 = vld [vmem:[#allocation4 + $0x738] sm:$0xff]
        %v1283 = vld [vmem:[#allocation4 + $0x740] sm:$0xff]
        %v1284 = vld [vmem:[#allocation4 + $0x748] sm:$0xff]
        %v1285 = vld [vmem:[#allocation4 + $0x750] sm:$0xff]
        %v1286 = vld [vmem:[#allocation4 + $0x758] sm:$0xff]
        %v1287 = vld [vmem:[#allocation4 + $0x760] sm:$0xff]
        %v1288 = vld [vmem:[#allocation4 + $0x768] sm:$0xff]
        %v1289 = vld [vmem:[#allocation4 + $0x770] sm:$0xff]
        %v1290 = vld [vmem:[#allocation4 + $0x778] sm:$0xff]
        %v1291 = vld [vmem:[#allocation4 + $0x780] sm:$0xff]
        %v1292 = vld [vmem:[#allocation4 + $0x788] sm:$0xff]
        %v1293 = vld [vmem:[#allocation4 + $0x790] sm:$0xff]
        %v1294 = vld [vmem:[#allocation4 + $0x798] sm:$0xff]
        %v1295 = vld [vmem:[#allocation4 + $0x7a0] sm:$0xff]
        %v1296 = vld [vmem:[#allocation4 + $0x7a8] sm:$0xff]
        %v1297 = vld [vmem:[#allocation4 + $0x7b0] sm:$0xff]
        %v1298 = vld [vmem:[#allocation4 + $0x7b8] sm:$0xff]
        %v1299 = vld [vmem:[#allocation4 + $0x7c0] sm:$0xff]
        %v1300 = vld [vmem:[#allocation4 + $0x7c8] sm:$0xff]
        %v1301 = vld [vmem:[#allocation4 + $0x7d0] sm:$0xff]
        %v1302 = vld [vmem:[#allocation4 + $0x7d8] sm:$0xff]
        %v1303 = vld [vmem:[#allocation4 + $0x7e0] sm:$0xff]
        %v1304 = vld [vmem:[#allocation4 + $0x7e8] sm:$0xff]
        %v1305 = vld [vmem:[#allocation4 + $0x7f0] sm:$0xff]
        %v1306 = vld [vmem:[#allocation4 + $0x7f8] sm:$0xff]
        %v1307 = vld [vmem:[#allocation4 + $0x800] sm:$0xff]
        %v1308 = vld [vmem:[#allocation4 + $0x808] sm:$0xff]
        %v1309 = vld [vmem:[#allocation4 + $0x810] sm:$0xff]
        %v1310 = vld [vmem:[#allocation4 + $0x818] sm:$0xff]
        %v1311 = vld [vmem:[#allocation4 + $0x820] sm:$0xff]
        %v1312 = vld [vmem:[#allocation4 + $0x828] sm:$0xff]
        %v1313 = vld [vmem:[#allocation4 + $0x830] sm:$0xff]
        %v1314 = vld [vmem:[#allocation4 + $0x838] sm:$0xff]
        %v1315 = vld [vmem:[#allocation4 + $0x840] sm:$0xff]
        %v1316 = vld [vmem:[#allocation4 + $0x848] sm:$0xff]
        %v1317 = vld [vmem:[#allocation4 + $0x850] sm:$0xff]
        %v1318 = vld [vmem:[#allocation4 + $0x858] sm:$0xff]
        %v1319 = vld [vmem:[#allocation4 + $0x860] sm:$0xff]
        %v1320 = vld [vmem:[#allocation4 + $0x868] sm:$0xff]
        %v1321 = vld [vmem:[#allocation4 + $0x870] sm:$0xff]
        %v1322 = vld [vmem:[#allocation4 + $0x878] sm:$0xff]
        %v1323 = vld [vmem:[#allocation4 + $0x880] sm:$0xff]
        %v1324 = vld [vmem:[#allocation4 + $0x888] sm:$0xff]
        %v1325 = vld [vmem:[#allocation4 + $0x890] sm:$0xff]
        %v1326 = vld [vmem:[#allocation4 + $0x898] sm:$0xff]
        %v1327 = vld [vmem:[#allocation4 + $0x8a0] sm:$0xff]
        %v1328 = vld [vmem:[#allocation4 + $0x8a8] sm:$0xff]
        %v1329 = vld [vmem:[#allocation4 + $0x8b0] sm:$0xff]
        %v1330 = vld [vmem:[#allocation4 + $0x8b8] sm:$0xff]
        %v1331 = vld [vmem:[#allocation4 + $0x8c0] sm:$0xff]
        %v1332 = vld [vmem:[#allocation4 + $0x8c8] sm:$0xff]
        %v1333 = vld [vmem:[#allocation4 + $0x8d0] sm:$0xff]
        %v1334 = vld [vmem:[#allocation4 + $0x8d8] sm:$0xff]
        %v1335 = vld [vmem:[#allocation4 + $0x8e0] sm:$0xff]
        %v1336 = vld [vmem:[#allocation4 + $0x8e8] sm:$0xff]
        %v1337 = vld [vmem:[#allocation4 + $0x8f0] sm:$0xff]
        %v1338 = vld [vmem:[#allocation4 + $0x8f8] sm:$0xff]
        %1339 = vmatprep.subr.mxu0 0.0
        %1340 = vmatpush1.msra.mxu0 %v875
        %1341 = vmatprep.subr.mxu0 0.0
        %1342 = vmatpush1.msra.mxu0 %v876
        %1343 = vmatprep.subr.mxu0 0.0
        %1344 = vmatpush1.msra.mxu0 %v877
        %1345 = vmatprep.subr.mxu0 0.0
        %1346 = vmatpush1.msra.mxu0 %v878
        %1347 = vmatprep.subr.mxu0 0.0
        %1348 = vmatpush1.msra.mxu0 %v879
        %1349 = vmatprep.subr.mxu0 0.0
        %1350 = vmatpush1.msra.mxu0 %v880
        %1351 = vmatprep.subr.mxu0 0.0
        %1352 = vmatpush1.msra.mxu0 %v881
        %1353 = vmatprep.subr.mxu0 0.0
        %1354 = vmatpush1.msra.mxu0 %v882
        %1355 = vmatprep.subr.mxu0 0.0
        %1356 = vmatpush1.msra.mxu0 %v883
        %1357 = vmatprep.subr.mxu0 0.0
        %1358 = vmatpush1.msra.mxu0 %v884
        %1359 = vmatprep.subr.mxu0 0.0
        %1360 = vmatpush1.msra.mxu0 %v885
        %1361 = vmatprep.subr.mxu0 0.0
        %1362 = vmatpush1.msra.mxu0 %v886
        %1363 = vmatprep.subr.mxu0 0.0
        %1364 = vmatpush1.msra.mxu0 %v887
        %1365 = vmatprep.subr.mxu0 0.0
        %1366 = vmatpush1.msra.mxu0 %v888
        %1367 = vmatprep.subr.mxu0 0.0
        %1368 = vmatpush1.msra.mxu0 %v889
        %1369 = vmatprep.subr.mxu0 0.0
        %1370 = vmatpush1.msra.mxu0 %v890
        %1371 = vmatprep.subr.mxu0 0.0
        %1372 = vmatpush1.msra.mxu0 %v891
        %1373 = vmatprep.subr.mxu0 0.0
        %1374 = vmatpush1.msra.mxu0 %v892
        %1375 = vmatprep.subr.mxu0 0.0
        %1376 = vmatpush1.msra.mxu0 %v893
        %1377 = vmatprep.subr.mxu0 0.0
        %1378 = vmatpush1.msra.mxu0 %v894
        %1379 = vmatprep.subr.mxu0 0.0
        %1380 = vmatpush1.msra.mxu0 %v895
        %1381 = vmatprep.subr.mxu0 0.0
        %1382 = vmatpush1.msra.mxu0 %v896
        %1383 = vmatprep.subr.mxu0 0.0
        %1384 = vmatpush1.msra.mxu0 %v897
        %1385 = vmatprep.subr.mxu0 0.0
        %1386 = vmatpush1.msra.mxu0 %v898
        %1387 = vmatprep.subr.mxu0 0.0
        %1388 = vmatpush1.msra.mxu0 %v899
        %1389 = vmatprep.subr.mxu0 0.0
        %1390 = vmatpush1.msra.mxu0 %v900
        %1391 = vmatprep.subr.mxu0 0.0
        %1392 = vmatpush1.msra.mxu0 %v901
        %1393 = vmatprep.subr.mxu0 0.0
        %1394 = vmatpush1.msra.mxu0 %v902
        %1395 = vmatprep.subr.mxu0 0.0
        %1396 = vmatpush1.msra.mxu0 %v903
        %1397 = vmatprep.subr.mxu0 0.0
        %1398 = vmatpush1.msra.mxu0 %v904
        %1399 = vmatprep.subr.mxu0 0.0
        %1400 = vmatpush1.msra.mxu0 %v905
        %1401 = vmatprep.subr.mxu0 0.0
        %1402 = vmatpush1.msra.mxu0 %v906
        %1403 = vmatprep.mubr.f32.mxu0 %v1052
        %1404 = vmatmul.mubr.f32.gmra.mrb[0].mxu0 %v1051
        %v1405 = vpop.f32.mrb[0].mxu0
        %v1406 = vadd.f32 0.0, %v1405
        %v1407 = vpop.f32.mrb[0].mxu0
        %1408 = vmatprep.mubr.f32.mxu0 %v1061
        %1409 = vmatmul.mubr.f32.gmra.mrb[0].mxu0 %v1060
        %v1410 = vpop.f32.mrb[0].mxu0
        %v1411 = vadd.f32 0.0, %v1410
        %v1412 = vpop.f32.mrb[0].mxu0
        %1413 = vmatprep.mubr.f32.mxu0 %v1070
        %1414 = vmatmul.mubr.f32.gmra.mrb[0].mxu0 %v1069
        %v1415 = vpop.f32.mrb[0].mxu0
        %v1416 = vadd.f32 0.0, %v1415
        %v1417 = vpop.f32.mrb[0].mxu0
        %1418 = vmatprep.mubr.f32.mxu0 %v1079
        %1419 = vmatmul.mubr.f32.gmra.mrb[0].mxu0 %v1078
        %v1420 = vpop.f32.mrb[0].mxu0
        %v1421 = vadd.f32 0.0, %v1420
        %v1422 = vpop.f32.mrb[0].mxu0
        %1423 = vmatprep.mubr.f32.mxu0 %v1088
        %1424 = vmatmul.mubr.f32.gmra.mrb[0].mxu0 %v1087
        %v1425 = vpop.f32.mrb[0].mxu0
        %v1426 = vadd.f32 0.0, %v1425
        %v1427 = vpop.f32.mrb[0].mxu0
        %1428 = vmatprep.mubr.f32.mxu0 %v1097
        %1429 = vmatmul.mubr.f32.gmra.mrb[0].mxu0 %v1096
        %v1430 = vpop.f32.mrb[0].mxu0
        %v1431 = vadd.f32 0.0, %v1430
        %v1432 = vpop.f32.mrb[0].mxu0
        %1433 = vmatprep.mubr.f32.mxu0 %v1106
        %1434 = vmatmul.mubr.f32.gmra.mrb[0].mxu0 %v1105
        %v1435 = vpop.f32.mrb[0].mxu0
        %v1436 = vadd.f32 0.0, %v1435
        %v1437 = vpop.f32.mrb[0].mxu0
        %1438 = vmatprep.mubr.f32.mxu0 %v1115
        %1439 = vmatmul.mubr.f32.gmra.mrb[0].mxu0 %v1114
        %v1440 = vpop.f32.mrb[0].mxu0
        %v1441 = vadd.f32 0.0, %v1440
        %v1442 = vpop.f32.mrb[0].mxu0
        %1443 = vmatprep.mubr.f32.mxu0 %v1124
        %1444 = vmatmul.mubr.f32.gmra.mrb[0].mxu0 %v1123
        %v1445 = vpop.f32.mrb[0].mxu0
        %v1446 = vadd.f32 0.0, %v1445
        %v1447 = vpop.f32.mrb[0].mxu0
        %1448 = vmatprep.mubr.f32.mxu0 %v1133
        %1449 = vmatmul.mubr.f32.gmra.mrb[0].mxu0 %v1132
        %v1450 = vpop.f32.mrb[0].mxu0
        %v1451 = vadd.f32 0.0, %v1450
        %v1452 = vpop.f32.mrb[0].mxu0
        %1453 = vmatprep.mubr.f32.mxu0 %v1142
        %1454 = vmatmul.mubr.f32.gmra.mrb[0].mxu0 %v1141
        %v1455 = vpop.f32.mrb[0].mxu0
        %v1456 = vadd.f32 0.0, %v1455
        %v1457 = vpop.f32.mrb[0].mxu0
        %1458 = vmatprep.mubr.f32.mxu0 %v1151
        %1459 = vmatmul.mubr.f32.gmra.mrb[0].mxu0 %v1150
        %v1460 = vpop.f32.mrb[0].mxu0
        %v1461 = vadd.f32 0.0, %v1460
        %v1462 = vpop.f32.mrb[0].mxu0
        %1463 = vmatprep.mubr.f32.mxu0 %v1160
        %1464 = vmatmul.mubr.f32.gmra.mrb[0].mxu0 %v1159
        %v1465 = vpop.f32.mrb[0].mxu0
        %v1466 = vadd.f32 0.0, %v1465
        %v1467 = vpop.f32.mrb[0].mxu0
        %1468 = vmatprep.mubr.f32.mxu0 %v1169
        %1469 = vmatmul.mubr.f32.gmra.mrb[0].mxu0 %v1168
        %v1470 = vpop.f32.mrb[0].mxu0
        %v1471 = vadd.f32 0.0, %v1470
        %v1472 = vpop.f32.mrb[0].mxu0
        %1473 = vmatprep.mubr.f32.mxu0 %v1178
        %1474 = vmatmul.mubr.f32.gmra.mrb[0].mxu0 %v1177
        %v1475 = vpop.f32.mrb[0].mxu0
        %v1476 = vadd.f32 0.0, %v1475
        %v1477 = vpop.f32.mrb[0].mxu0
        %1478 = vmatprep.mubr.f32.mxu0 %v1187
        %1479 = vmatmul.mubr.f32.gmra.mrb[0].mxu0 %v1186
        %v1480 = vpop.f32.mrb[0].mxu0
        %v1481 = vadd.f32 0.0, %v1480
        %v1482 = vpop.f32.mrb[0].mxu0
        %1483 = vmatprep.mubr.f32.mxu0 %v1196
        %1484 = vmatmul.mubr.f32.gmra.mrb[0].mxu0 %v1195
        %v1485 = vpop.f32.mrb[0].mxu0
        %v1486 = vadd.f32 0.0, %v1485
        %v1487 = vpop.f32.mrb[0].mxu0
        %1488 = vmatprep.mubr.f32.mxu0 %v1205
        %1489 = vmatmul.mubr.f32.gmra.mrb[0].mxu0 %v1204
        %v1490 = vpop.f32.mrb[0].mxu0
        %v1491 = vadd.f32 0.0, %v1490
        %v1492 = vpop.f32.mrb[0].mxu0
        %1493 = vmatprep.mubr.f32.mxu0 %v1214
        %1494 = vmatmul.mubr.f32.gmra.mrb[0].mxu0 %v1213
        %v1495 = vpop.f32.mrb[0].mxu0
        %v1496 = vadd.f32 0.0, %v1495
        %v1497 = vpop.f32.mrb[0].mxu0
        %1498 = vmatprep.mubr.f32.mxu0 %v1223
        %1499 = vmatmul.mubr.f32.gmra.mrb[0].mxu0 %v1222
        %v1500 = vpop.f32.mrb[0].mxu0
        %v1501 = vadd.f32 0.0, %v1500
        %v1502 = vpop.f32.mrb[0].mxu0
        %1503 = vmatprep.mubr.f32.mxu0 %v1232
        %1504 = vmatmul.mubr.f32.gmra.mrb[0].mxu0 %v1231
        %v1505 = vpop.f32.mrb[0].mxu0
        %v1506 = vadd.f32 0.0, %v1505
        %v1507 = vpop.f32.mrb[0].mxu0
        %1508 = vmatprep.mubr.f32.mxu0 %v1241
        %1509 = vmatmul.mubr.f32.gmra.mrb[0].mxu0 %v1240
        %v1510 = vpop.f32.mrb[0].mxu0
        %v1511 = vadd.f32 0.0, %v1510
        %v1512 = vpop.f32.mrb[0].mxu0
        %1513 = vmatprep.mubr.f32.mxu0 %v1250
        %1514 = vmatmul.mubr.f32.gmra.mrb[0].mxu0 %v1249
        %v1515 = vpop.f32.mrb[0].mxu0
        %v1516 = vadd.f32 0.0, %v1515
        %v1517 = vpop.f32.mrb[0].mxu0
        %1518 = vmatprep.mubr.f32.mxu0 %v1259
        %1519 = vmatmul.mubr.f32.gmra.mrb[0].mxu0 %v1258
        %v1520 = vpop.f32.mrb[0].mxu0
        %v1521 = vadd.f32 0.0, %v1520
        %v1522 = vpop.f32.mrb[0].mxu0
        %1523 = vmatprep.mubr.f32.mxu0 %v1268
        %1524 = vmatmul.mubr.f32.gmra.mrb[0].mxu0 %v1267
        %v1525 = vpop.f32.mrb[0].mxu0
        %v1526 = vadd.f32 0.0, %v1525
        %v1527 = vpop.f32.mrb[0].mxu0
        %1528 = vmatprep.mubr.f32.mxu0 %v1277
        %1529 = vmatmul.mubr.f32.gmra.mrb[0].mxu0 %v1276
        %v1530 = vpop.f32.mrb[0].mxu0
        %v1531 = vadd.f32 0.0, %v1530
        %v1532 = vpop.f32.mrb[0].mxu0
        %1533 = vmatprep.mubr.f32.mxu0 %v1286
        %1534 = vmatmul.mubr.f32.gmra.mrb[0].mxu0 %v1285
        %v1535 = vpop.f32.mrb[0].mxu0
        %v1536 = vadd.f32 0.0, %v1535
        %v1537 = vpop.f32.mrb[0].mxu0
        %1538 = vmatprep.mubr.f32.mxu0 %v1295
        %1539 = vmatmul.mubr.f32.gmra.mrb[0].mxu0 %v1294
        %v1540 = vpop.f32.mrb[0].mxu0
        %v1541 = vadd.f32 0.0, %v1540
        %v1542 = vpop.f32.mrb[0].mxu0
        %1543 = vmatprep.mubr.f32.mxu0 %v1304
        %1544 = vmatmul.mubr.f32.gmra.mrb[0].mxu0 %v1303
        %v1545 = vpop.f32.mrb[0].mxu0
        %v1546 = vadd.f32 0.0, %v1545
        %v1547 = vpop.f32.mrb[0].mxu0
        %1548 = vmatprep.mubr.f32.mxu0 %v1313
        %1549 = vmatmul.mubr.f32.gmra.mrb[0].mxu0 %v1312
        %v1550 = vpop.f32.mrb[0].mxu0
        %v1551 = vadd.f32 0.0, %v1550
        %v1552 = vpop.f32.mrb[0].mxu0
        %1553 = vmatprep.mubr.f32.mxu0 %v1322
        %1554 = vmatmul.mubr.f32.gmra.mrb[0].mxu0 %v1321
        %v1555 = vpop.f32.mrb[0].mxu0
        %v1556 = vadd.f32 0.0, %v1555
        %v1557 = vpop.f32.mrb[0].mxu0
        %1558 = vmatprep.mubr.f32.mxu0 %v1331
        %1559 = vmatmul.mubr.f32.gmra.mrb[0].mxu0 %v1330
        %v1560 = vpop.f32.mrb[0].mxu0
        %v1561 = vadd.f32 0.0, %v1560
        %v1562 = vpop.f32.mrb[0].mxu0
        %1563 = vdwg.mxu0
        %1564 = vmatprep.subr.mxu0 0.0
        %1565 = vmatpush1.msra.mxu0 %v907
        %1566 = vmatprep.subr.mxu0 0.0
        %1567 = vmatpush1.msra.mxu0 %v908
        %1568 = vmatprep.subr.mxu0 0.0
        %1569 = vmatpush1.msra.mxu0 %v909
        %1570 = vmatprep.subr.mxu0 0.0
        %1571 = vmatpush1.msra.mxu0 %v910
        %1572 = vmatprep.subr.mxu0 0.0
        %1573 = vmatpush1.msra.mxu0 %v911
        %1574 = vmatprep.subr.mxu0 0.0
        %1575 = vmatpush1.msra.mxu0 %v912
        %1576 = vmatprep.subr.mxu0 0.0
        %1577 = vmatpush1.msra.mxu0 %v913
        %1578 = vmatprep.subr.mxu0 0.0
        %1579 = vmatpush1.msra.mxu0 %v914
        %1580 = vmatprep.subr.mxu0 0.0
        %1581 = vmatpush1.msra.mxu0 %v915
        %1582 = vmatprep.subr.mxu0 0.0
        %1583 = vmatpush1.msra.mxu0 %v916
        %1584 = vmatprep.subr.mxu0 0.0
        %1585 = vmatpush1.msra.mxu0 %v917
        %1586 = vmatprep.subr.mxu0 0.0
        %1587 = vmatpush1.msra.mxu0 %v918
        %1588 = vmatprep.subr.mxu0 0.0
        %1589 = vmatpush1.msra.mxu0 %v919
        %1590 = vmatprep.subr.mxu0 0.0
        %1591 = vmatpush1.msra.mxu0 %v920
        %1592 = vmatprep.subr.mxu0 0.0
        %1593 = vmatpush1.msra.mxu0 %v921
        %1594 = vmatprep.subr.mxu0 0.0
        %1595 = vmatpush1.msra.mxu0 %v922
        %1596 = vmatprep.subr.mxu0 0.0
        %1597 = vmatpush1.msra.mxu0 %v923
        %1598 = vmatprep.subr.mxu0 0.0
        %1599 = vmatpush1.msra.mxu0 %v924
        %1600 = vmatprep.subr.mxu0 0.0
        %1601 = vmatpush1.msra.mxu0 %v925
        %1602 = vmatprep.subr.mxu0 0.0
        %1603 = vmatpush1.msra.mxu0 %v926
        %1604 = vmatprep.subr.mxu0 0.0
        %1605 = vmatpush1.msra.mxu0 %v927
        %1606 = vmatprep.subr.mxu0 0.0
        %1607 = vmatpush1.msra.mxu0 %v928
        %1608 = vmatprep.subr.mxu0 0.0
        %1609 = vmatpush1.msra.mxu0 %v929
        %1610 = vmatprep.subr.mxu0 0.0
        %1611 = vmatpush1.msra.mxu0 %v930
        %1612 = vmatprep.subr.mxu0 0.0
        %1613 = vmatpush1.msra.mxu0 %v931
        %1614 = vmatprep.subr.mxu0 0.0
        %1615 = vmatpush1.msra.mxu0 %v932
        %1616 = vmatprep.subr.mxu0 0.0
        %1617 = vmatpush1.msra.mxu0 %v933
        %1618 = vmatprep.subr.mxu0 0.0
        %1619 = vmatpush1.msra.mxu0 %v934
        %1620 = vmatprep.subr.mxu0 0.0
        %1621 = vmatpush1.msra.mxu0 %v935
        %1622 = vmatprep.subr.mxu0 0.0
        %1623 = vmatpush1.msra.mxu0 %v936
        %1624 = vmatprep.subr.mxu0 0.0
        %1625 = vmatpush1.msra.mxu0 %v937
        %1626 = vmatprep.subr.mxu0 0.0
        %1627 = vmatpush1.msra.mxu0 %v938
        %1628 = vmatprep.mubr.f32.mxu0 %v1054
        %1629 = vmatmul.mubr.f32.gmra.mrb[0].mxu0 %v1053
        %v1630 = vpop.f32.mrb[0].mxu0
        %v1631 = vadd.f32 %v1406, %v1630
        %v1632 = vpop.f32.mrb[0].mxu0
        %1633 = vmatprep.mubr.f32.mxu0 %v1063
        %1634 = vmatmul.mubr.f32.gmra.mrb[0].mxu0 %v1062
        %v1635 = vpop.f32.mrb[0].mxu0
        %v1636 = vadd.f32 %v1411, %v1635
        %v1637 = vpop.f32.mrb[0].mxu0
        %1638 = vmatprep.mubr.f32.mxu0 %v1072
        %1639 = vmatmul.mubr.f32.gmra.mrb[0].mxu0 %v1071
        %v1640 = vpop.f32.mrb[0].mxu0
        %v1641 = vadd.f32 %v1416, %v1640
        %v1642 = vpop.f32.mrb[0].mxu0
        %1643 = vmatprep.mubr.f32.mxu0 %v1081
        %1644 = vmatmul.mubr.f32.gmra.mrb[0].mxu0 %v1080
        %v1645 = vpop.f32.mrb[0].mxu0
        %v1646 = vadd.f32 %v1421, %v1645
        %v1647 = vpop.f32.mrb[0].mxu0
        %1648 = vmatprep.mubr.f32.mxu0 %v1090
        %1649 = vmatmul.mubr.f32.gmra.mrb[0].mxu0 %v1089
        %v1650 = vpop.f32.mrb[0].mxu0
        %v1651 = vadd.f32 %v1426, %v1650
        %v1652 = vpop.f32.mrb[0].mxu0
        %1653 = vmatprep.mubr.f32.mxu0 %v1099
        %1654 = vmatmul.mubr.f32.gmra.mrb[0].mxu0 %v1098
        %v1655 = vpop.f32.mrb[0].mxu0
        %v1656 = vadd.f32 %v1431, %v1655
        %v1657 = vpop.f32.mrb[0].mxu0
        %1658 = vmatprep.mubr.f32.mxu0 %v1108
        %1659 = vmatmul.mubr.f32.gmra.mrb[0].mxu0 %v1107
        %v1660 = vpop.f32.mrb[0].mxu0
        %v1661 = vadd.f32 %v1436, %v1660
        %v1662 = vpop.f32.mrb[0].mxu0
        %1663 = vmatprep.mubr.f32.mxu0 %v1117
        %1664 = vmatmul.mubr.f32.gmra.mrb[0].mxu0 %v1116
        %v1665 = vpop.f32.mrb[0].mxu0
        %v1666 = vadd.f32 %v1441, %v1665
        %v1667 = vpop.f32.mrb[0].mxu0
        %1668 = vmatprep.mubr.f32.mxu0 %v1126
        %1669 = vmatmul.mubr.f32.gmra.mrb[0].mxu0 %v1125
        %v1670 = vpop.f32.mrb[0].mxu0
        %v1671 = vadd.f32 %v1446, %v1670
        %v1672 = vpop.f32.mrb[0].mxu0
        %1673 = vmatprep.mubr.f32.mxu0 %v1135
        %1674 = vmatmul.mubr.f32.gmra.mrb[0].mxu0 %v1134
        %v1675 = vpop.f32.mrb[0].mxu0
        %v1676 = vadd.f32 %v1451, %v1675
        %v1677 = vpop.f32.mrb[0].mxu0
        %1678 = vmatprep.mubr.f32.mxu0 %v1144
        %1679 = vmatmul.mubr.f32.gmra.mrb[0].mxu0 %v1143
        %v1680 = vpop.f32.mrb[0].mxu0
        %v1681 = vadd.f32 %v1456, %v1680
        %v1682 = vpop.f32.mrb[0].mxu0
        %1683 = vmatprep.mubr.f32.mxu0 %v1153
        %1684 = vmatmul.mubr.f32.gmra.mrb[0].mxu0 %v1152
        %v1685 = vpop.f32.mrb[0].mxu0
        %v1686 = vadd.f32 %v1461, %v1685
        %v1687 = vpop.f32.mrb[0].mxu0
        %1688 = vmatprep.mubr.f32.mxu0 %v1162
        %1689 = vmatmul.mubr.f32.gmra.mrb[0].mxu0 %v1161
        %v1690 = vpop.f32.mrb[0].mxu0
        %v1691 = vadd.f32 %v1466, %v1690
        %v1692 = vpop.f32.mrb[0].mxu0
        %1693 = vmatprep.mubr.f32.mxu0 %v1171
        %1694 = vmatmul.mubr.f32.gmra.mrb[0].mxu0 %v1170
        %v1695 = vpop.f32.mrb[0].mxu0
        %v1696 = vadd.f32 %v1471, %v1695
        %v1697 = vpop.f32.mrb[0].mxu0
        %1698 = vmatprep.mubr.f32.mxu0 %v1180
        %1699 = vmatmul.mubr.f32.gmra.mrb[0].mxu0 %v1179
        %v1700 = vpop.f32.mrb[0].mxu0
        %v1701 = vadd.f32 %v1476, %v1700
        %v1702 = vpop.f32.mrb[0].mxu0
        %1703 = vmatprep.mubr.f32.mxu0 %v1189
        %1704 = vmatmul.mubr.f32.gmra.mrb[0].mxu0 %v1188
        %v1705 = vpop.f32.mrb[0].mxu0
        %v1706 = vadd.f32 %v1481, %v1705
        %v1707 = vpop.f32.mrb[0].mxu0
        %1708 = vmatprep.mubr.f32.mxu0 %v1198
        %1709 = vmatmul.mubr.f32.gmra.mrb[0].mxu0 %v1197
        %v1710 = vpop.f32.mrb[0].mxu0
        %v1711 = vadd.f32 %v1486, %v1710
        %v1712 = vpop.f32.mrb[0].mxu0
        %1713 = vmatprep.mubr.f32.mxu0 %v1207
        %1714 = vmatmul.mubr.f32.gmra.mrb[0].mxu0 %v1206
        %v1715 = vpop.f32.mrb[0].mxu0
        %v1716 = vadd.f32 %v1491, %v1715
        %v1717 = vpop.f32.mrb[0].mxu0
        %1718 = vmatprep.mubr.f32.mxu0 %v1216
        %1719 = vmatmul.mubr.f32.gmra.mrb[0].mxu0 %v1215
        %v1720 = vpop.f32.mrb[0].mxu0
        %v1721 = vadd.f32 %v1496, %v1720
        %v1722 = vpop.f32.mrb[0].mxu0
        %1723 = vmatprep.mubr.f32.mxu0 %v1225
        %1724 = vmatmul.mubr.f32.gmra.mrb[0].mxu0 %v1224
        %v1725 = vpop.f32.mrb[0].mxu0
        %v1726 = vadd.f32 %v1501, %v1725
        %v1727 = vpop.f32.mrb[0].mxu0
        %1728 = vmatprep.mubr.f32.mxu0 %v1234
        %1729 = vmatmul.mubr.f32.gmra.mrb[0].mxu0 %v1233
        %v1730 = vpop.f32.mrb[0].mxu0
        %v1731 = vadd.f32 %v1506, %v1730
        %v1732 = vpop.f32.mrb[0].mxu0
        %1733 = vmatprep.mubr.f32.mxu0 %v1243
        %1734 = vmatmul.mubr.f32.gmra.mrb[0].mxu0 %v1242
        %v1735 = vpop.f32.mrb[0].mxu0
        %v1736 = vadd.f32 %v1511, %v1735
        %v1737 = vpop.f32.mrb[0].mxu0
        %1738 = vmatprep.mubr.f32.mxu0 %v1252
        %1739 = vmatmul.mubr.f32.gmra.mrb[0].mxu0 %v1251
        %v1740 = vpop.f32.mrb[0].mxu0
        %v1741 = vadd.f32 %v1516, %v1740
        %v1742 = vpop.f32.mrb[0].mxu0
        %1743 = vmatprep.mubr.f32.mxu0 %v1261
        %1744 = vmatmul.mubr.f32.gmra.mrb[0].mxu0 %v1260
        %v1745 = vpop.f32.mrb[0].mxu0
        %v1746 = vadd.f32 %v1521, %v1745
        %v1747 = vpop.f32.mrb[0].mxu0
        %1748 = vmatprep.mubr.f32.mxu0 %v1270
        %1749 = vmatmul.mubr.f32.gmra.mrb[0].mxu0 %v1269
        %v1750 = vpop.f32.mrb[0].mxu0
        %v1751 = vadd.f32 %v1526, %v1750
        %v1752 = vpop.f32.mrb[0].mxu0
        %1753 = vmatprep.mubr.f32.mxu0 %v1279
        %1754 = vmatmul.mubr.f32.gmra.mrb[0].mxu0 %v1278
        %v1755 = vpop.f32.mrb[0].mxu0
        %v1756 = vadd.f32 %v1531, %v1755
        %v1757 = vpop.f32.mrb[0].mxu0
        %1758 = vmatprep.mubr.f32.mxu0 %v1288
        %1759 = vmatmul.mubr.f32.gmra.mrb[0].mxu0 %v1287
        %v1760 = vpop.f32.mrb[0].mxu0
        %v1761 = vadd.f32 %v1536, %v1760
        %v1762 = vpop.f32.mrb[0].mxu0
        %1763 = vmatprep.mubr.f32.mxu0 %v1297
        %1764 = vmatmul.mubr.f32.gmra.mrb[0].mxu0 %v1296
        %v1765 = vpop.f32.mrb[0].mxu0
        %v1766 = vadd.f32 %v1541, %v1765
        %v1767 = vpop.f32.mrb[0].mxu0
        %1768 = vmatprep.mubr.f32.mxu0 %v1306
        %1769 = vmatmul.mubr.f32.gmra.mrb[0].mxu0 %v1305
        %v1770 = vpop.f32.mrb[0].mxu0
        %v1771 = vadd.f32 %v1546, %v1770
        %v1772 = vpop.f32.mrb[0].mxu0
        %1773 = vmatprep.mubr.f32.mxu0 %v1315
        %1774 = vmatmul.mubr.f32.gmra.mrb[0].mxu0 %v1314
        %v1775 = vpop.f32.mrb[0].mxu0
        %v1776 = vadd.f32 %v1551, %v1775
        %v1777 = vpop.f32.mrb[0].mxu0
        %1778 = vmatprep.mubr.f32.mxu0 %v1324
        %1779 = vmatmul.mubr.f32.gmra.mrb[0].mxu0 %v1323
        %v1780 = vpop.f32.mrb[0].mxu0
        %v1781 = vadd.f32 %v1556, %v1780
        %v1782 = vpop.f32.mrb[0].mxu0
        %1783 = vmatprep.mubr.f32.mxu0 %v1333
        %1784 = vmatmul.mubr.f32.gmra.mrb[0].mxu0 %v1332
        %v1785 = vpop.f32.mrb[0].mxu0
        %v1786 = vadd.f32 %v1561, %v1785
        %v1787 = vpop.f32.mrb[0].mxu0
        %1788 = vdwg.mxu0
        %1789 = vmatprep.subr.mxu0 0.0
        %1790 = vmatpush1.msra.mxu0 %v939
        %1791 = vmatprep.subr.mxu0 0.0
        %1792 = vmatpush1.msra.mxu0 %v940
        %1793 = vmatprep.subr.mxu0 0.0
        %1794 = vmatpush1.msra.mxu0 %v941
        %1795 = vmatprep.subr.mxu0 0.0
        %1796 = vmatpush1.msra.mxu0 %v942
        %1797 = vmatprep.subr.mxu0 0.0
        %1798 = vmatpush1.msra.mxu0 %v943
        %1799 = vmatprep.subr.mxu0 0.0
        %1800 = vmatpush1.msra.mxu0 %v944
        %1801 = vmatprep.subr.mxu0 0.0
        %1802 = vmatpush1.msra.mxu0 %v945
        %1803 = vmatprep.subr.mxu0 0.0
        %1804 = vmatpush1.msra.mxu0 %v946
        %1805 = vmatprep.subr.mxu0 0.0
        %1806 = vmatpush1.msra.mxu0 %v947
        %1807 = vmatprep.subr.mxu0 0.0
        %1808 = vmatpush1.msra.mxu0 %v948
        %1809 = vmatprep.subr.mxu0 0.0
        %1810 = vmatpush1.msra.mxu0 %v949
        %1811 = vmatprep.subr.mxu0 0.0
        %1812 = vmatpush1.msra.mxu0 %v950
        %1813 = vmatprep.subr.mxu0 0.0
        %1814 = vmatpush1.msra.mxu0 %v951
        %1815 = vmatprep.subr.mxu0 0.0
        %1816 = vmatpush1.msra.mxu0 %v952
        %1817 = vmatprep.subr.mxu0 0.0
        %1818 = vmatpush1.msra.mxu0 %v953
        %1819 = vmatprep.subr.mxu0 0.0
        %1820 = vmatpush1.msra.mxu0 %v954
        %1821 = vmatprep.subr.mxu0 0.0
        %1822 = vmatpush1.msra.mxu0 %v955
        %1823 = vmatprep.subr.mxu0 0.0
        %1824 = vmatpush1.msra.mxu0 %v956
        %1825 = vmatprep.subr.mxu0 0.0
        %1826 = vmatpush1.msra.mxu0 %v957
        %1827 = vmatprep.subr.mxu0 0.0
        %1828 = vmatpush1.msra.mxu0 %v958
        %1829 = vmatprep.subr.mxu0 0.0
        %1830 = vmatpush1.msra.mxu0 %v959
        %1831 = vmatprep.subr.mxu0 0.0
        %1832 = vmatpush1.msra.mxu0 %v960
        %1833 = vmatprep.subr.mxu0 0.0
        %1834 = vmatpush1.msra.mxu0 %v961
        %1835 = vmatprep.subr.mxu0 0.0
        %1836 = vmatpush1.msra.mxu0 %v962
        %1837 = vmatprep.subr.mxu0 0.0
        %1838 = vmatpush1.msra.mxu0 %v963
        %1839 = vmatprep.subr.mxu0 0.0
        %1840 = vmatpush1.msra.mxu0 %v964
        %1841 = vmatprep.subr.mxu0 0.0
        %1842 = vmatpush1.msra.mxu0 %v965
        %1843 = vmatprep.subr.mxu0 0.0
        %1844 = vmatpush1.msra.mxu0 %v966
        %1845 = vmatprep.subr.mxu0 0.0
        %1846 = vmatpush1.msra.mxu0 %v967
        %1847 = vmatprep.subr.mxu0 0.0
        %1848 = vmatpush1.msra.mxu0 %v968
        %1849 = vmatprep.subr.mxu0 0.0
        %1850 = vmatpush1.msra.mxu0 %v969
        %1851 = vmatprep.subr.mxu0 0.0
        %1852 = vmatpush1.msra.mxu0 %v970
        %1853 = vmatprep.mubr.f32.mxu0 %v1056
        %1854 = vmatmul.mubr.f32.gmra.mrb[0].mxu0 %v1055
        %v1855 = vpop.f32.mrb[0].mxu0
        %v1856 = vadd.f32 %v1631, %v1855
        %v1857 = vpop.f32.mrb[0].mxu0
        %1858 = vmatprep.mubr.f32.mxu0 %v1065
        %1859 = vmatmul.mubr.f32.gmra.mrb[0].mxu0 %v1064
        %v1860 = vpop.f32.mrb[0].mxu0
        %v1861 = vadd.f32 %v1636, %v1860
        %v1862 = vpop.f32.mrb[0].mxu0
        %1863 = vmatprep.mubr.f32.mxu0 %v1074
        %1864 = vmatmul.mubr.f32.gmra.mrb[0].mxu0 %v1073
        %v1865 = vpop.f32.mrb[0].mxu0
        %v1866 = vadd.f32 %v1641, %v1865
        %v1867 = vpop.f32.mrb[0].mxu0
        %1868 = vmatprep.mubr.f32.mxu0 %v1083
        %1869 = vmatmul.mubr.f32.gmra.mrb[0].mxu0 %v1082
        %v1870 = vpop.f32.mrb[0].mxu0
        %v1871 = vadd.f32 %v1646, %v1870
        %v1872 = vpop.f32.mrb[0].mxu0
        %1873 = vmatprep.mubr.f32.mxu0 %v1092
        %1874 = vmatmul.mubr.f32.gmra.mrb[0].mxu0 %v1091
        %v1875 = vpop.f32.mrb[0].mxu0
        %v1876 = vadd.f32 %v1651, %v1875
        %v1877 = vpop.f32.mrb[0].mxu0
        %1878 = vmatprep.mubr.f32.mxu0 %v1101
        %1879 = vmatmul.mubr.f32.gmra.mrb[0].mxu0 %v1100
        %v1880 = vpop.f32.mrb[0].mxu0
        %v1881 = vadd.f32 %v1656, %v1880
        %v1882 = vpop.f32.mrb[0].mxu0
        %1883 = vmatprep.mubr.f32.mxu0 %v1110
        %1884 = vmatmul.mubr.f32.gmra.mrb[0].mxu0 %v1109
        %v1885 = vpop.f32.mrb[0].mxu0
        %v1886 = vadd.f32 %v1661, %v1885
        %v1887 = vpop.f32.mrb[0].mxu0
        %1888 = vmatprep.mubr.f32.mxu0 %v1119
        %1889 = vmatmul.mubr.f32.gmra.mrb[0].mxu0 %v1118
        %v1890 = vpop.f32.mrb[0].mxu0
        %v1891 = vadd.f32 %v1666, %v1890
        %v1892 = vpop.f32.mrb[0].mxu0
        %1893 = vmatprep.mubr.f32.mxu0 %v1128
        %1894 = vmatmul.mubr.f32.gmra.mrb[0].mxu0 %v1127
        %v1895 = vpop.f32.mrb[0].mxu0
        %v1896 = vadd.f32 %v1671, %v1895
        %v1897 = vpop.f32.mrb[0].mxu0
        %1898 = vmatprep.mubr.f32.mxu0 %v1137
        %1899 = vmatmul.mubr.f32.gmra.mrb[0].mxu0 %v1136
        %v1900 = vpop.f32.mrb[0].mxu0
        %v1901 = vadd.f32 %v1676, %v1900
        %v1902 = vpop.f32.mrb[0].mxu0
        %1903 = vmatprep.mubr.f32.mxu0 %v1146
        %1904 = vmatmul.mubr.f32.gmra.mrb[0].mxu0 %v1145
        %v1905 = vpop.f32.mrb[0].mxu0
        %v1906 = vadd.f32 %v1681, %v1905
        %v1907 = vpop.f32.mrb[0].mxu0
        %1908 = vmatprep.mubr.f32.mxu0 %v1155
        %1909 = vmatmul.mubr.f32.gmra.mrb[0].mxu0 %v1154
        %v1910 = vpop.f32.mrb[0].mxu0
        %v1911 = vadd.f32 %v1686, %v1910
        %v1912 = vpop.f32.mrb[0].mxu0
        %1913 = vmatprep.mubr.f32.mxu0 %v1164
        %1914 = vmatmul.mubr.f32.gmra.mrb[0].mxu0 %v1163
        %v1915 = vpop.f32.mrb[0].mxu0
        %v1916 = vadd.f32 %v1691, %v1915
        %v1917 = vpop.f32.mrb[0].mxu0
        %1918 = vmatprep.mubr.f32.mxu0 %v1173
        %1919 = vmatmul.mubr.f32.gmra.mrb[0].mxu0 %v1172
        %v1920 = vpop.f32.mrb[0].mxu0
        %v1921 = vadd.f32 %v1696, %v1920
        %v1922 = vpop.f32.mrb[0].mxu0
        %1923 = vmatprep.mubr.f32.mxu0 %v1182
        %1924 = vmatmul.mubr.f32.gmra.mrb[0].mxu0 %v1181
        %v1925 = vpop.f32.mrb[0].mxu0
        %v1926 = vadd.f32 %v1701, %v1925
        %v1927 = vpop.f32.mrb[0].mxu0
        %1928 = vmatprep.mubr.f32.mxu0 %v1191
        %1929 = vmatmul.mubr.f32.gmra.mrb[0].mxu0 %v1190
        %v1930 = vpop.f32.mrb[0].mxu0
        %v1931 = vadd.f32 %v1706, %v1930
        %v1932 = vpop.f32.mrb[0].mxu0
        %1933 = vmatprep.mubr.f32.mxu0 %v1200
        %1934 = vmatmul.mubr.f32.gmra.mrb[0].mxu0 %v1199
        %v1935 = vpop.f32.mrb[0].mxu0
        %v1936 = vadd.f32 %v1711, %v1935
        %v1937 = vpop.f32.mrb[0].mxu0
        %1938 = vmatprep.mubr.f32.mxu0 %v1209
        %1939 = vmatmul.mubr.f32.gmra.mrb[0].mxu0 %v1208
        %v1940 = vpop.f32.mrb[0].mxu0
        %v1941 = vadd.f32 %v1716, %v1940
        %v1942 = vpop.f32.mrb[0].mxu0
        %1943 = vmatprep.mubr.f32.mxu0 %v1218
        %1944 = vmatmul.mubr.f32.gmra.mrb[0].mxu0 %v1217
        %v1945 = vpop.f32.mrb[0].mxu0
        %v1946 = vadd.f32 %v1721, %v1945
        %v1947 = vpop.f32.mrb[0].mxu0
        %1948 = vmatprep.mubr.f32.mxu0 %v1227
        %1949 = vmatmul.mubr.f32.gmra.mrb[0].mxu0 %v1226
        %v1950 = vpop.f32.mrb[0].mxu0
        %v1951 = vadd.f32 %v1726, %v1950
        %v1952 = vpop.f32.mrb[0].mxu0
        %1953 = vmatprep.mubr.f32.mxu0 %v1236
        %1954 = vmatmul.mubr.f32.gmra.mrb[0].mxu0 %v1235
        %v1955 = vpop.f32.mrb[0].mxu0
        %v1956 = vadd.f32 %v1731, %v1955
        %v1957 = vpop.f32.mrb[0].mxu0
        %1958 = vmatprep.mubr.f32.mxu0 %v1245
        %1959 = vmatmul.mubr.f32.gmra.mrb[0].mxu0 %v1244
        %v1960 = vpop.f32.mrb[0].mxu0
        %v1961 = vadd.f32 %v1736, %v1960
        %v1962 = vpop.f32.mrb[0].mxu0
        %1963 = vmatprep.mubr.f32.mxu0 %v1254
        %1964 = vmatmul.mubr.f32.gmra.mrb[0].mxu0 %v1253
        %v1965 = vpop.f32.mrb[0].mxu0
        %v1966 = vadd.f32 %v1741, %v1965
        %v1967 = vpop.f32.mrb[0].mxu0
        %1968 = vmatprep.mubr.f32.mxu0 %v1263
        %1969 = vmatmul.mubr.f32.gmra.mrb[0].mxu0 %v1262
        %v1970 = vpop.f32.mrb[0].mxu0
        %v1971 = vadd.f32 %v1746, %v1970
        %v1972 = vpop.f32.mrb[0].mxu0
        %1973 = vmatprep.mubr.f32.mxu0 %v1272
        %1974 = vmatmul.mubr.f32.gmra.mrb[0].mxu0 %v1271
        %v1975 = vpop.f32.mrb[0].mxu0
        %v1976 = vadd.f32 %v1751, %v1975
        %v1977 = vpop.f32.mrb[0].mxu0
        %1978 = vmatprep.mubr.f32.mxu0 %v1281
        %1979 = vmatmul.mubr.f32.gmra.mrb[0].mxu0 %v1280
        %v1980 = vpop.f32.mrb[0].mxu0
        %v1981 = vadd.f32 %v1756, %v1980
        %v1982 = vpop.f32.mrb[0].mxu0
        %1983 = vmatprep.mubr.f32.mxu0 %v1290
        %1984 = vmatmul.mubr.f32.gmra.mrb[0].mxu0 %v1289
        %v1985 = vpop.f32.mrb[0].mxu0
        %v1986 = vadd.f32 %v1761, %v1985
        %v1987 = vpop.f32.mrb[0].mxu0
        %1988 = vmatprep.mubr.f32.mxu0 %v1299
        %1989 = vmatmul.mubr.f32.gmra.mrb[0].mxu0 %v1298
        %v1990 = vpop.f32.mrb[0].mxu0
        %v1991 = vadd.f32 %v1766, %v1990
        %v1992 = vpop.f32.mrb[0].mxu0
        %1993 = vmatprep.mubr.f32.mxu0 %v1308
        %1994 = vmatmul.mubr.f32.gmra.mrb[0].mxu0 %v1307
        %v1995 = vpop.f32.mrb[0].mxu0
        %v1996 = vadd.f32 %v1771, %v1995
        %v1997 = vpop.f32.mrb[0].mxu0
        %1998 = vmatprep.mubr.f32.mxu0 %v1317
        %1999 = vmatmul.mubr.f32.gmra.mrb[0].mxu0 %v1316
        %v2000 = vpop.f32.mrb[0].mxu0
        %v2001 = vadd.f32 %v1776, %v2000
        %v2002 = vpop.f32.mrb[0].mxu0
        %2003 = vmatprep.mubr.f32.mxu0 %v1326
        %2004 = vmatmul.mubr.f32.gmra.mrb[0].mxu0 %v1325
        %v2005 = vpop.f32.mrb[0].mxu0
        %v2006 = vadd.f32 %v1781, %v2005
        %v2007 = vpop.f32.mrb[0].mxu0
        %2008 = vmatprep.mubr.f32.mxu0 %v1335
        %2009 = vmatmul.mubr.f32.gmra.mrb[0].mxu0 %v1334
        %v2010 = vpop.f32.mrb[0].mxu0
        %v2011 = vadd.f32 %v1786, %v2010
        %v2012 = vpop.f32.mrb[0].mxu0
        %2013 = vdwg.mxu0
        %2014 = vmatprep.subr.mxu0 0.0
        %2015 = vmatpush1.msra.mxu0 %v971
        %2016 = vmatprep.subr.mxu0 0.0
        %2017 = vmatpush1.msra.mxu0 %v972
        %2018 = vmatprep.subr.mxu0 0.0
        %2019 = vmatpush1.msra.mxu0 %v973
        %2020 = vmatprep.subr.mxu0 0.0
        %2021 = vmatpush1.msra.mxu0 %v974
        %2022 = vmatprep.subr.mxu0 0.0
        %2023 = vmatpush1.msra.mxu0 %v975
        %2024 = vmatprep.subr.mxu0 0.0
        %2025 = vmatpush1.msra.mxu0 %v976
        %2026 = vmatprep.subr.mxu0 0.0
        %2027 = vmatpush1.msra.mxu0 %v977
        %2028 = vmatprep.subr.mxu0 0.0
        %2029 = vmatpush1.msra.mxu0 %v978
        %2030 = vmatprep.subr.mxu0 0.0
        %2031 = vmatpush1.msra.mxu0 %v979
        %2032 = vmatprep.subr.mxu0 0.0
        %2033 = vmatpush1.msra.mxu0 %v980
        %2034 = vmatprep.subr.mxu0 0.0
        %2035 = vmatpush1.msra.mxu0 %v981
        %2036 = vmatprep.subr.mxu0 0.0
        %2037 = vmatpush1.msra.mxu0 %v982
        %2038 = vmatprep.subr.mxu0 0.0
        %2039 = vmatpush1.msra.mxu0 %v983
        %2040 = vmatprep.subr.mxu0 0.0
        %2041 = vmatpush1.msra.mxu0 %v984
        %2042 = vmatprep.subr.mxu0 0.0
        %2043 = vmatpush1.msra.mxu0 %v985
        %2044 = vmatprep.subr.mxu0 0.0
        %2045 = vmatpush1.msra.mxu0 %v986
        %2046 = vmatprep.subr.mxu0 0.0
        %2047 = vmatpush1.msra.mxu0 %v987
        %2048 = vmatprep.subr.mxu0 0.0
        %2049 = vmatpush1.msra.mxu0 %v988
        %2050 = vmatprep.subr.mxu0 0.0
        %2051 = vmatpush1.msra.mxu0 %v989
        %2052 = vmatprep.subr.mxu0 0.0
        %2053 = vmatpush1.msra.mxu0 %v990
        %2054 = vmatprep.subr.mxu0 0.0
        %2055 = vmatpush1.msra.mxu0 %v991
        %2056 = vmatprep.subr.mxu0 0.0
        %2057 = vmatpush1.msra.mxu0 %v992
        %2058 = vmatprep.subr.mxu0 0.0
        %2059 = vmatpush1.msra.mxu0 %v993
        %2060 = vmatprep.subr.mxu0 0.0
        %2061 = vmatpush1.msra.mxu0 %v994
        %2062 = vmatprep.subr.mxu0 0.0
        %2063 = vmatpush1.msra.mxu0 %v995
        %2064 = vmatprep.subr.mxu0 0.0
        %2065 = vmatpush1.msra.mxu0 %v996
        %2066 = vmatprep.subr.mxu0 0.0
        %2067 = vmatpush1.msra.mxu0 %v997
        %2068 = vmatprep.subr.mxu0 0.0
        %2069 = vmatpush1.msra.mxu0 %v998
        %2070 = vmatprep.subr.mxu0 0.0
        %2071 = vmatpush1.msra.mxu0 %v999
        %2072 = vmatprep.subr.mxu0 0.0
        %2073 = vmatpush1.msra.mxu0 %v1000
        %2074 = vmatprep.subr.mxu0 0.0
        %2075 = vmatpush1.msra.mxu0 %v1001
        %2076 = vmatprep.subr.mxu0 0.0
        %2077 = vmatpush1.msra.mxu0 %v1002
        %2078 = vmatprep.mubr.f32.mxu0 %v1058
        %2079 = vmatmul.mubr.f32.gmra.mrb[0].mxu0 %v1057
        %v2080 = vpop.f32.mrb[0].mxu0
        %v2081 = vadd.f32 %v1856, %v2080
        %v2082 = vpop.f32.mrb[0].mxu0
        %2083 = vmatprep.mubr.f32.mxu0 %v1067
        %2084 = vmatmul.mubr.f32.gmra.mrb[0].mxu0 %v1066
        %v2085 = vpop.f32.mrb[0].mxu0
        %v2086 = vadd.f32 %v1861, %v2085
        %v2087 = vpop.f32.mrb[0].mxu0
        %2088 = vmatprep.mubr.f32.mxu0 %v1076
        %2089 = vmatmul.mubr.f32.gmra.mrb[0].mxu0 %v1075
        %v2090 = vpop.f32.mrb[0].mxu0
        %v2091 = vadd.f32 %v1866, %v2090
        %v2092 = vpop.f32.mrb[0].mxu0
        %2093 = vmatprep.mubr.f32.mxu0 %v1085
        %2094 = vmatmul.mubr.f32.gmra.mrb[0].mxu0 %v1084
        %v2095 = vpop.f32.mrb[0].mxu0
        %v2096 = vadd.f32 %v1871, %v2095
        %v2097 = vpop.f32.mrb[0].mxu0
        %2098 = vmatprep.mubr.f32.mxu0 %v1094
        %2099 = vmatmul.mubr.f32.gmra.mrb[0].mxu0 %v1093
        %v2100 = vpop.f32.mrb[0].mxu0
        %v2101 = vadd.f32 %v1876, %v2100
        %v2102 = vpop.f32.mrb[0].mxu0
        %2103 = vmatprep.mubr.f32.mxu0 %v1103
        %2104 = vmatmul.mubr.f32.gmra.mrb[0].mxu0 %v1102
        %v2105 = vpop.f32.mrb[0].mxu0
        %v2106 = vadd.f32 %v1881, %v2105
        %v2107 = vpop.f32.mrb[0].mxu0
        %2108 = vmatprep.mubr.f32.mxu0 %v1112
        %2109 = vmatmul.mubr.f32.gmra.mrb[0].mxu0 %v1111
        %v2110 = vpop.f32.mrb[0].mxu0
        %v2111 = vadd.f32 %v1886, %v2110
        %v2112 = vpop.f32.mrb[0].mxu0
        %2113 = vmatprep.mubr.f32.mxu0 %v1121
        %2114 = vmatmul.mubr.f32.gmra.mrb[0].mxu0 %v1120
        %v2115 = vpop.f32.mrb[0].mxu0
        %v2116 = vadd.f32 %v1891, %v2115
        %v2117 = vpop.f32.mrb[0].mxu0
        %2118 = vmatprep.mubr.f32.mxu0 %v1130
        %2119 = vmatmul.mubr.f32.gmra.mrb[0].mxu0 %v1129
        %v2120 = vpop.f32.mrb[0].mxu0
        %v2121 = vadd.f32 %v1896, %v2120
        %v2122 = vpop.f32.mrb[0].mxu0
        %2123 = vmatprep.mubr.f32.mxu0 %v1139
        %2124 = vmatmul.mubr.f32.gmra.mrb[0].mxu0 %v1138
        %v2125 = vpop.f32.mrb[0].mxu0
        %v2126 = vadd.f32 %v1901, %v2125
        %v2127 = vpop.f32.mrb[0].mxu0
        %2128 = vmatprep.mubr.f32.mxu0 %v1148
        %2129 = vmatmul.mubr.f32.gmra.mrb[0].mxu0 %v1147
        %v2130 = vpop.f32.mrb[0].mxu0
        %v2131 = vadd.f32 %v1906, %v2130
        %v2132 = vpop.f32.mrb[0].mxu0
        %2133 = vmatprep.mubr.f32.mxu0 %v1157
        %2134 = vmatmul.mubr.f32.gmra.mrb[0].mxu0 %v1156
        %v2135 = vpop.f32.mrb[0].mxu0
        %v2136 = vadd.f32 %v1911, %v2135
        %v2137 = vpop.f32.mrb[0].mxu0
        %2138 = vmatprep.mubr.f32.mxu0 %v1166
        %2139 = vmatmul.mubr.f32.gmra.mrb[0].mxu0 %v1165
        %v2140 = vpop.f32.mrb[0].mxu0
        %v2141 = vadd.f32 %v1916, %v2140
        %v2142 = vpop.f32.mrb[0].mxu0
        %2143 = vmatprep.mubr.f32.mxu0 %v1175
        %2144 = vmatmul.mubr.f32.gmra.mrb[0].mxu0 %v1174
        %v2145 = vpop.f32.mrb[0].mxu0
        %v2146 = vadd.f32 %v1921, %v2145
        %v2147 = vpop.f32.mrb[0].mxu0
        %2148 = vmatprep.mubr.f32.mxu0 %v1184
        %2149 = vmatmul.mubr.f32.gmra.mrb[0].mxu0 %v1183
        %v2150 = vpop.f32.mrb[0].mxu0
        %v2151 = vadd.f32 %v1926, %v2150
        %v2152 = vpop.f32.mrb[0].mxu0
        %2153 = vmatprep.mubr.f32.mxu0 %v1193
        %2154 = vmatmul.mubr.f32.gmra.mrb[0].mxu0 %v1192
        %v2155 = vpop.f32.mrb[0].mxu0
        %v2156 = vadd.f32 %v1931, %v2155
        %v2157 = vpop.f32.mrb[0].mxu0
        %2158 = vmatprep.mubr.f32.mxu0 %v1202
        %2159 = vmatmul.mubr.f32.gmra.mrb[0].mxu0 %v1201
        %v2160 = vpop.f32.mrb[0].mxu0
        %v2161 = vadd.f32 %v1936, %v2160
        %v2162 = vpop.f32.mrb[0].mxu0
        %2163 = vmatprep.mubr.f32.mxu0 %v1211
        %2164 = vmatmul.mubr.f32.gmra.mrb[0].mxu0 %v1210
        %v2165 = vpop.f32.mrb[0].mxu0
        %v2166 = vadd.f32 %v1941, %v2165
        %v2167 = vpop.f32.mrb[0].mxu0
        %2168 = vmatprep.mubr.f32.mxu0 %v1220
        %2169 = vmatmul.mubr.f32.gmra.mrb[0].mxu0 %v1219
        %v2170 = vpop.f32.mrb[0].mxu0
        %v2171 = vadd.f32 %v1946, %v2170
        %v2172 = vpop.f32.mrb[0].mxu0
        %2173 = vmatprep.mubr.f32.mxu0 %v1229
        %2174 = vmatmul.mubr.f32.gmra.mrb[0].mxu0 %v1228
        %v2175 = vpop.f32.mrb[0].mxu0
        %v2176 = vadd.f32 %v1951, %v2175
        %v2177 = vpop.f32.mrb[0].mxu0
        %2178 = vmatprep.mubr.f32.mxu0 %v1238
        %2179 = vmatmul.mubr.f32.gmra.mrb[0].mxu0 %v1237
        %v2180 = vpop.f32.mrb[0].mxu0
        %v2181 = vadd.f32 %v1956, %v2180
        %v2182 = vpop.f32.mrb[0].mxu0
        %2183 = vmatprep.mubr.f32.mxu0 %v1247
        %2184 = vmatmul.mubr.f32.gmra.mrb[0].mxu0 %v1246
        %v2185 = vpop.f32.mrb[0].mxu0
        %v2186 = vadd.f32 %v1961, %v2185
        %v2187 = vpop.f32.mrb[0].mxu0
        %2188 = vmatprep.mubr.f32.mxu0 %v1256
        %2189 = vmatmul.mubr.f32.gmra.mrb[0].mxu0 %v1255
        %v2190 = vpop.f32.mrb[0].mxu0
        %v2191 = vadd.f32 %v1966, %v2190
        %v2192 = vpop.f32.mrb[0].mxu0
        %2193 = vmatprep.mubr.f32.mxu0 %v1265
        %2194 = vmatmul.mubr.f32.gmra.mrb[0].mxu0 %v1264
        %v2195 = vpop.f32.mrb[0].mxu0
        %v2196 = vadd.f32 %v1971, %v2195
        %v2197 = vpop.f32.mrb[0].mxu0
        %2198 = vmatprep.mubr.f32.mxu0 %v1274
        %2199 = vmatmul.mubr.f32.gmra.mrb[0].mxu0 %v1273
        %v2200 = vpop.f32.mrb[0].mxu0
        %v2201 = vadd.f32 %v1976, %v2200
        %v2202 = vpop.f32.mrb[0].mxu0
        %2203 = vmatprep.mubr.f32.mxu0 %v1283
        %2204 = vmatmul.mubr.f32.gmra.mrb[0].mxu0 %v1282
        %v2205 = vpop.f32.mrb[0].mxu0
        %v2206 = vadd.f32 %v1981, %v2205
        %v2207 = vpop.f32.mrb[0].mxu0
        %2208 = vmatprep.mubr.f32.mxu0 %v1292
        %2209 = vmatmul.mubr.f32.gmra.mrb[0].mxu0 %v1291
        %v2210 = vpop.f32.mrb[0].mxu0
        %v2211 = vadd.f32 %v1986, %v2210
        %v2212 = vpop.f32.mrb[0].mxu0
        %2213 = vmatprep.mubr.f32.mxu0 %v1301
        %2214 = vmatmul.mubr.f32.gmra.mrb[0].mxu0 %v1300
        %v2215 = vpop.f32.mrb[0].mxu0
        %v2216 = vadd.f32 %v1991, %v2215
        %v2217 = vpop.f32.mrb[0].mxu0
        %2218 = vmatprep.mubr.f32.mxu0 %v1310
        %2219 = vmatmul.mubr.f32.gmra.mrb[0].mxu0 %v1309
        %v2220 = vpop.f32.mrb[0].mxu0
        %v2221 = vadd.f32 %v1996, %v2220
        %v2222 = vpop.f32.mrb[0].mxu0
        %2223 = vmatprep.mubr.f32.mxu0 %v1319
        %2224 = vmatmul.mubr.f32.gmra.mrb[0].mxu0 %v1318
        %v2225 = vpop.f32.mrb[0].mxu0
        %v2226 = vadd.f32 %v2001, %v2225
        %v2227 = vpop.f32.mrb[0].mxu0
        %2228 = vmatprep.mubr.f32.mxu0 %v1328
        %2229 = vmatmul.mubr.f32.gmra.mrb[0].mxu0 %v1327
        %v2230 = vpop.f32.mrb[0].mxu0
        %v2231 = vadd.f32 %v2006, %v2230
        %v2232 = vpop.f32.mrb[0].mxu0
        %2233 = vmatprep.mubr.f32.mxu0 %v1337
        %2234 = vmatmul.mubr.f32.gmra.mrb[0].mxu0 %v1336
        %v2235 = vpop.f32.mrb[0].mxu0
        %v2236 = vadd.f32 %v2011, %v2235
        %v2237 = vpop.f32.mrb[0].mxu0
        %2238 = vdwg.mxu0
        %2239 = vmatprep.subr.mxu0 0.0
        %2240 = vmatpush1.msra.mxu0 %v1003
        %2241 = vmatprep.subr.mxu0 0.0
        %2242 = vmatpush1.msra.mxu0 %v1004
        %2243 = vmatprep.subr.mxu0 0.0
        %2244 = vmatpush1.msra.mxu0 %v1005
        %2245 = vmatprep.subr.mxu0 0.0
        %2246 = vmatpush1.msra.mxu0 %v1006
        %2247 = vmatprep.subr.mxu0 0.0
        %2248 = vmatpush1.msra.mxu0 %v1007
        %2249 = vmatprep.subr.mxu0 0.0
        %2250 = vmatpush1.msra.mxu0 %v1008
        %2251 = vmatprep.subr.mxu0 0.0
        %2252 = vmatpush1.msra.mxu0 %v1009
        %2253 = vmatprep.subr.mxu0 0.0
        %2254 = vmatpush1.msra.mxu0 %v1010
        %2255 = vmatprep.subr.mxu0 0.0
        %2256 = vmatpush1.msra.mxu0 %v1011
        %2257 = vmatprep.subr.mxu0 0.0
        %2258 = vmatpush1.msra.mxu0 %v1012
        %2259 = vmatprep.subr.mxu0 0.0
        %2260 = vmatpush1.msra.mxu0 %v1013
        %2261 = vmatprep.subr.mxu0 0.0
        %2262 = vmatpush1.msra.mxu0 %v1014
        %2263 = vmatprep.subr.mxu0 0.0
        %2264 = vmatpush1.msra.mxu0 %v1015
        %2265 = vmatprep.subr.mxu0 0.0
        %2266 = vmatpush1.msra.mxu0 %v1016
        %2267 = vmatprep.subr.mxu0 0.0
        %2268 = vmatpush1.msra.mxu0 %v1017
        %2269 = vmatprep.subr.mxu0 0.0
        %2270 = vmatpush1.msra.mxu0 %v1018
        %2271 = vmatprep.subr.mxu0 0.0
        %2272 = vmatpush1.msra.mxu0 0.0
        %2273 = vmatprep.subr.mxu0 0.0
        %2274 = vmatpush1.msra.mxu0 0.0
        %2275 = vmatprep.subr.mxu0 0.0
        %2276 = vmatpush1.msra.mxu0 0.0
        %2277 = vmatprep.subr.mxu0 0.0
        %2278 = vmatpush1.msra.mxu0 0.0
        %2279 = vmatprep.subr.mxu0 0.0
        %2280 = vmatpush1.msra.mxu0 0.0
        %2281 = vmatprep.subr.mxu0 0.0
        %2282 = vmatpush1.msra.mxu0 0.0
        %2283 = vmatprep.subr.mxu0 0.0
        %2284 = vmatpush1.msra.mxu0 0.0
        %2285 = vmatprep.subr.mxu0 0.0
        %2286 = vmatpush1.msra.mxu0 0.0
        %2287 = vmatprep.subr.mxu0 0.0
        %2288 = vmatpush1.msra.mxu0 0.0
        %2289 = vmatprep.subr.mxu0 0.0
        %2290 = vmatpush1.msra.mxu0 0.0
        %2291 = vmatprep.subr.mxu0 0.0
        %2292 = vmatpush1.msra.mxu0 0.0
        %2293 = vmatprep.subr.mxu0 0.0
        %2294 = vmatpush1.msra.mxu0 0.0
        %2295 = vmatprep.subr.mxu0 0.0
        %2296 = vmatpush1.msra.mxu0 0.0
        %2297 = vmatprep.subr.mxu0 0.0
        %2298 = vmatpush1.msra.mxu0 0.0
        %2299 = vmatprep.subr.mxu0 0.0
        %2300 = vmatpush1.msra.mxu0 0.0
        %2301 = vmatprep.subr.mxu0 0.0
        %2302 = vmatpush1.msra.mxu0 0.0
        %2303 = vmatprep.mubr.f32.mxu0 0.0
        %2304 = vmatmul.mubr.f32.gmra.mrb[0].mxu0 %v1059
        %v2305 = vpop.f32.mrb[0].mxu0
        %v2306 = vadd.f32 %v2081, %v2305
        %v2307 = vpop.f32.mrb[0].mxu0
        %2308 = vmatprep.mubr.f32.mxu0 0.0
        %2309 = vmatmul.mubr.f32.gmra.mrb[0].mxu0 %v1068
        %v2310 = vpop.f32.mrb[0].mxu0
        %v2311 = vadd.f32 %v2086, %v2310
        %v2312 = vpop.f32.mrb[0].mxu0
        %2313 = vmatprep.mubr.f32.mxu0 0.0
        %2314 = vmatmul.mubr.f32.gmra.mrb[0].mxu0 %v1077
        %v2315 = vpop.f32.mrb[0].mxu0
        %v2316 = vadd.f32 %v2091, %v2315
        %v2317 = vpop.f32.mrb[0].mxu0
        %2318 = vmatprep.mubr.f32.mxu0 0.0
        %2319 = vmatmul.mubr.f32.gmra.mrb[0].mxu0 %v1086
        %v2320 = vpop.f32.mrb[0].mxu0
        %v2321 = vadd.f32 %v2096, %v2320
        %v2322 = vpop.f32.mrb[0].mxu0
        %2323 = vmatprep.mubr.f32.mxu0 0.0
        %2324 = vmatmul.mubr.f32.gmra.mrb[0].mxu0 %v1095
        %v2325 = vpop.f32.mrb[0].mxu0
        %v2326 = vadd.f32 %v2101, %v2325
        %v2327 = vpop.f32.mrb[0].mxu0
        %2328 = vmatprep.mubr.f32.mxu0 0.0
        %2329 = vmatmul.mubr.f32.gmra.mrb[0].mxu0 %v1104
        %v2330 = vpop.f32.mrb[0].mxu0
        %v2331 = vadd.f32 %v2106, %v2330
        %v2332 = vpop.f32.mrb[0].mxu0
        %2333 = vmatprep.mubr.f32.mxu0 0.0
        %2334 = vmatmul.mubr.f32.gmra.mrb[0].mxu0 %v1113
        %v2335 = vpop.f32.mrb[0].mxu0
        %v2336 = vadd.f32 %v2111, %v2335
        %v2337 = vpop.f32.mrb[0].mxu0
        %2338 = vmatprep.mubr.f32.mxu0 0.0
        %2339 = vmatmul.mubr.f32.gmra.mrb[0].mxu0 %v1122
        %v2340 = vpop.f32.mrb[0].mxu0
        %v2341 = vadd.f32 %v2116, %v2340
        %v2342 = vpop.f32.mrb[0].mxu0
        %2343 = vmatprep.mubr.f32.mxu0 0.0
        %2344 = vmatmul.mubr.f32.gmra.mrb[0].mxu0 %v1131
        %v2345 = vpop.f32.mrb[0].mxu0
        %v2346 = vadd.f32 %v2121, %v2345
        %v2347 = vpop.f32.mrb[0].mxu0
        %2348 = vmatprep.mubr.f32.mxu0 0.0
        %2349 = vmatmul.mubr.f32.gmra.mrb[0].mxu0 %v1140
        %v2350 = vpop.f32.mrb[0].mxu0
        %v2351 = vadd.f32 %v2126, %v2350
        %v2352 = vpop.f32.mrb[0].mxu0
        %2353 = vmatprep.mubr.f32.mxu0 0.0
        %2354 = vmatmul.mubr.f32.gmra.mrb[0].mxu0 %v1149
        %v2355 = vpop.f32.mrb[0].mxu0
        %v2356 = vadd.f32 %v2131, %v2355
        %v2357 = vpop.f32.mrb[0].mxu0
        %2358 = vmatprep.mubr.f32.mxu0 0.0
        %2359 = vmatmul.mubr.f32.gmra.mrb[0].mxu0 %v1158
        %v2360 = vpop.f32.mrb[0].mxu0
        %v2361 = vadd.f32 %v2136, %v2360
        %v2362 = vpop.f32.mrb[0].mxu0
        %2363 = vmatprep.mubr.f32.mxu0 0.0
        %2364 = vmatmul.mubr.f32.gmra.mrb[0].mxu0 %v1167
        %v2365 = vpop.f32.mrb[0].mxu0
        %v2366 = vadd.f32 %v2141, %v2365
        %v2367 = vpop.f32.mrb[0].mxu0
        %2368 = vmatprep.mubr.f32.mxu0 0.0
        %2369 = vmatmul.mubr.f32.gmra.mrb[0].mxu0 %v1176
        %v2370 = vpop.f32.mrb[0].mxu0
        %v2371 = vadd.f32 %v2146, %v2370
        %v2372 = vpop.f32.mrb[0].mxu0
        %2373 = vmatprep.mubr.f32.mxu0 0.0
        %2374 = vmatmul.mubr.f32.gmra.mrb[0].mxu0 %v1185
        %v2375 = vpop.f32.mrb[0].mxu0
        %v2376 = vadd.f32 %v2151, %v2375
        %v2377 = vpop.f32.mrb[0].mxu0
        %2378 = vmatprep.mubr.f32.mxu0 0.0
        %2379 = vmatmul.mubr.f32.gmra.mrb[0].mxu0 %v1194
        %v2380 = vpop.f32.mrb[0].mxu0
        %v2381 = vadd.f32 %v2156, %v2380
        %v2382 = vpop.f32.mrb[0].mxu0
        %2383 = vmatprep.mubr.f32.mxu0 0.0
        %2384 = vmatmul.mubr.f32.gmra.mrb[0].mxu0 %v1203
        %v2385 = vpop.f32.mrb[0].mxu0
        %v2386 = vadd.f32 %v2161, %v2385
        %v2387 = vpop.f32.mrb[0].mxu0
        %2388 = vmatprep.mubr.f32.mxu0 0.0
        %2389 = vmatmul.mubr.f32.gmra.mrb[0].mxu0 %v1212
        %v2390 = vpop.f32.mrb[0].mxu0
        %v2391 = vadd.f32 %v2166, %v2390
        %v2392 = vpop.f32.mrb[0].mxu0
        %2393 = vmatprep.mubr.f32.mxu0 0.0
        %2394 = vmatmul.mubr.f32.gmra.mrb[0].mxu0 %v1221
        %v2395 = vpop.f32.mrb[0].mxu0
        %v2396 = vadd.f32 %v2171, %v2395
        %v2397 = vpop.f32.mrb[0].mxu0
        %2398 = vmatprep.mubr.f32.mxu0 0.0
        %2399 = vmatmul.mubr.f32.gmra.mrb[0].mxu0 %v1230
        %v2400 = vpop.f32.mrb[0].mxu0
        %v2401 = vadd.f32 %v2176, %v2400
        %v2402 = vpop.f32.mrb[0].mxu0
        %2403 = vmatprep.mubr.f32.mxu0 0.0
        %2404 = vmatmul.mubr.f32.gmra.mrb[0].mxu0 %v1239
        %v2405 = vpop.f32.mrb[0].mxu0
        %v2406 = vadd.f32 %v2181, %v2405
        %v2407 = vpop.f32.mrb[0].mxu0
        %2408 = vmatprep.mubr.f32.mxu0 0.0
        %2409 = vmatmul.mubr.f32.gmra.mrb[0].mxu0 %v1248
        %v2410 = vpop.f32.mrb[0].mxu0
        %v2411 = vadd.f32 %v2186, %v2410
        %v2412 = vpop.f32.mrb[0].mxu0
        %2413 = vmatprep.mubr.f32.mxu0 0.0
        %2414 = vmatmul.mubr.f32.gmra.mrb[0].mxu0 %v1257
        %v2415 = vpop.f32.mrb[0].mxu0
        %v2416 = vadd.f32 %v2191, %v2415
        %v2417 = vpop.f32.mrb[0].mxu0
        %2418 = vmatprep.mubr.f32.mxu0 0.0
        %2419 = vmatmul.mubr.f32.gmra.mrb[0].mxu0 %v1266
        %v2420 = vpop.f32.mrb[0].mxu0
        %v2421 = vadd.f32 %v2196, %v2420
        %v2422 = vpop.f32.mrb[0].mxu0
        %2423 = vmatprep.mubr.f32.mxu0 0.0
        %2424 = vmatmul.mubr.f32.gmra.mrb[0].mxu0 %v1275
        %v2425 = vpop.f32.mrb[0].mxu0
        %v2426 = vadd.f32 %v2201, %v2425
        %v2427 = vpop.f32.mrb[0].mxu0
        %2428 = vmatprep.mubr.f32.mxu0 0.0
        %2429 = vmatmul.mubr.f32.gmra.mrb[0].mxu0 %v1284
        %v2430 = vpop.f32.mrb[0].mxu0
        %v2431 = vadd.f32 %v2206, %v2430
        %v2432 = vpop.f32.mrb[0].mxu0
        %2433 = vmatprep.mubr.f32.mxu0 0.0
        %2434 = vmatmul.mubr.f32.gmra.mrb[0].mxu0 %v1293
        %v2435 = vpop.f32.mrb[0].mxu0
        %v2436 = vadd.f32 %v2211, %v2435
        %v2437 = vpop.f32.mrb[0].mxu0
        %2438 = vmatprep.mubr.f32.mxu0 0.0
        %2439 = vmatmul.mubr.f32.gmra.mrb[0].mxu0 %v1302
        %v2440 = vpop.f32.mrb[0].mxu0
        %v2441 = vadd.f32 %v2216, %v2440
        %v2442 = vpop.f32.mrb[0].mxu0
        %2443 = vmatprep.mubr.f32.mxu0 0.0
        %2444 = vmatmul.mubr.f32.gmra.mrb[0].mxu0 %v1311
        %v2445 = vpop.f32.mrb[0].mxu0
        %v2446 = vadd.f32 %v2221, %v2445
        %v2447 = vpop.f32.mrb[0].mxu0
        %2448 = vmatprep.mubr.f32.mxu0 0.0
        %2449 = vmatmul.mubr.f32.gmra.mrb[0].mxu0 %v1320
        %v2450 = vpop.f32.mrb[0].mxu0
        %v2451 = vadd.f32 %v2226, %v2450
        %v2452 = vpop.f32.mrb[0].mxu0
        %2453 = vmatprep.mubr.f32.mxu0 0.0
        %2454 = vmatmul.mubr.f32.gmra.mrb[0].mxu0 %v1329
        %v2455 = vpop.f32.mrb[0].mxu0
        %v2456 = vadd.f32 %v2231, %v2455
        %v2457 = vpop.f32.mrb[0].mxu0
        %2458 = vmatprep.mubr.f32.mxu0 0.0
        %2459 = vmatmul.mubr.f32.gmra.mrb[0].mxu0 %v1338
        %v2460 = vpop.f32.mrb[0].mxu0
        %v2461 = vadd.f32 %v2236, %v2460
        %v2462 = vpop.f32.mrb[0].mxu0
        %2463 = vdwg.mxu0
        %v2464 = vadd.f32 %v1019, %v2306
        %v2465 = vadd.f32 %v1020, %v2311
        %v2466 = vadd.f32 %v1021, %v2316
        %v2467 = vadd.f32 %v1022, %v2321
        %v2468 = vadd.f32 %v1023, %v2326
        %v2469 = vadd.f32 %v1024, %v2331
        %v2470 = vadd.f32 %v1025, %v2336
        %v2471 = vadd.f32 %v1026, %v2341
        %v2472 = vadd.f32 %v1027, %v2346
        %v2473 = vadd.f32 %v1028, %v2351
        %v2474 = vadd.f32 %v1029, %v2356
        %v2475 = vadd.f32 %v1030, %v2361
        %v2476 = vadd.f32 %v1031, %v2366
        %v2477 = vadd.f32 %v1032, %v2371
        %v2478 = vadd.f32 %v1033, %v2376
        %v2479 = vadd.f32 %v1034, %v2381
        %v2480 = vadd.f32 %v1035, %v2386
        %v2481 = vadd.f32 %v1036, %v2391
        %v2482 = vadd.f32 %v1037, %v2396
        %v2483 = vadd.f32 %v1038, %v2401
        %v2484 = vadd.f32 %v1039, %v2406
        %v2485 = vadd.f32 %v1040, %v2411
        %v2486 = vadd.f32 %v1041, %v2416
        %v2487 = vadd.f32 %v1042, %v2421
        %v2488 = vadd.f32 %v1043, %v2426
        %v2489 = vadd.f32 %v1044, %v2431
        %v2490 = vadd.f32 %v1045, %v2436
        %v2491 = vadd.f32 %v1046, %v2441
        %v2492 = vadd.f32 %v1047, %v2446
        %v2493 = vadd.f32 %v1048, %v2451
        %v2494 = vadd.f32 %v1049, %v2456
        %v2495 = vadd.f32 %v1050, %v2461
        %2496 = vst [vmem:[#allocation5] sm:$0xff] %v2464
        %2497 = vst [vmem:[#allocation5 + $0x8] sm:$0xff] %v2465
        %2498 = vst [vmem:[#allocation5 + $0x10] sm:$0xff] %v2466
        %2499 = vst [vmem:[#allocation5 + $0x18] sm:$0xff] %v2467
        %2500 = vst [vmem:[#allocation5 + $0x20] sm:$0xff] %v2468
        %2501 = vst [vmem:[#allocation5 + $0x28] sm:$0xff] %v2469
        %2502 = vst [vmem:[#allocation5 + $0x30] sm:$0xff] %v2470
        %2503 = vst [vmem:[#allocation5 + $0x38] sm:$0xff] %v2471
        %2504 = vst [vmem:[#allocation5 + $0x40] sm:$0xff] %v2472
        %2505 = vst [vmem:[#allocation5 + $0x48] sm:$0xff] %v2473
        %2506 = vst [vmem:[#allocation5 + $0x50] sm:$0xff] %v2474
        %2507 = vst [vmem:[#allocation5 + $0x58] sm:$0xff] %v2475
        %2508 = vst [vmem:[#allocation5 + $0x60] sm:$0xff] %v2476
        %2509 = vst [vmem:[#allocation5 + $0x68] sm:$0xff] %v2477
        %2510 = vst [vmem:[#allocation5 + $0x70] sm:$0xff] %v2478
        %2511 = vst [vmem:[#allocation5 + $0x78] sm:$0xff] %v2479
        %2512 = vst [vmem:[#allocation5 + $0x80] sm:$0xff] %v2480
        %2513 = vst [vmem:[#allocation5 + $0x88] sm:$0xff] %v2481
        %2514 = vst [vmem:[#allocation5 + $0x90] sm:$0xff] %v2482
        %2515 = vst [vmem:[#allocation5 + $0x98] sm:$0xff] %v2483
        %2516 = vst [vmem:[#allocation5 + $0xa0] sm:$0xff] %v2484
        %2517 = vst [vmem:[#allocation5 + $0xa8] sm:$0xff] %v2485
        %2518 = vst [vmem:[#allocation5 + $0xb0] sm:$0xff] %v2486
        %2519 = vst [vmem:[#allocation5 + $0xb8] sm:$0xff] %v2487
        %2520 = vst [vmem:[#allocation5 + $0xc0] sm:$0xff] %v2488
        %2521 = vst [vmem:[#allocation5 + $0xc8] sm:$0xff] %v2489
        %2522 = vst [vmem:[#allocation5 + $0xd0] sm:$0xff] %v2490
        %2523 = vst [vmem:[#allocation5 + $0xd8] sm:$0xff] %v2491
        %2524 = vst [vmem:[#allocation5 + $0xe0] sm:$0xff] %v2492
        %2525 = vst [vmem:[#allocation5 + $0xe8] sm:$0xff] %v2493
        %2526 = vst [vmem:[#allocation5 + $0xf0] sm:$0xff] %v2494
        %2527 = vst [vmem:[#allocation5 + $0xf8] sm:$0xff] %v2495
        %p2528 = scmp.eq.s32.totalorder %s35, 2
        // Predicated region
        $region45: #{tpu_custom_call.1} parent=27 // pred_check
          %p2529 = pneg %p2528
        $region46: #{tpu_custom_call.1} parent=27 // pred_check_branch
          %2531 = sbr.rel (%p2529) target = $region48
        $region47: #{tpu_custom_call.1} parent=27 // pred_region
          %v2532 = vld [vmem:[#allocation5] sm:$0xff]
          %v2533 = vld [vmem:[#allocation5 + $0x8] sm:$0xff]
          %v2534 = vld [vmem:[#allocation5 + $0x10] sm:$0xff]
          %v2535 = vld [vmem:[#allocation5 + $0x18] sm:$0xff]
          %v2536 = vld [vmem:[#allocation5 + $0x20] sm:$0xff]
          %v2537 = vld [vmem:[#allocation5 + $0x28] sm:$0xff]
          %v2538 = vld [vmem:[#allocation5 + $0x30] sm:$0xff]
          %v2539 = vld [vmem:[#allocation5 + $0x38] sm:$0xff]
          %v2540 = vld [vmem:[#allocation5 + $0x40] sm:$0xff]
          %v2541 = vld [vmem:[#allocation5 + $0x48] sm:$0xff]
          %v2542 = vld [vmem:[#allocation5 + $0x50] sm:$0xff]
          %v2543 = vld [vmem:[#allocation5 + $0x58] sm:$0xff]
          %v2544 = vld [vmem:[#allocation5 + $0x60] sm:$0xff]
          %v2545 = vld [vmem:[#allocation5 + $0x68] sm:$0xff]
          %v2546 = vld [vmem:[#allocation5 + $0x70] sm:$0xff]
          %v2547 = vld [vmem:[#allocation5 + $0x78] sm:$0xff]
          %v2548 = vld [vmem:[#allocation5 + $0x80] sm:$0xff]
          %v2549 = vld [vmem:[#allocation5 + $0x88] sm:$0xff]
          %v2550 = vld [vmem:[#allocation5 + $0x90] sm:$0xff]
          %v2551 = vld [vmem:[#allocation5 + $0x98] sm:$0xff]
          %v2552 = vld [vmem:[#allocation5 + $0xa0] sm:$0xff]
          %v2553 = vld [vmem:[#allocation5 + $0xa8] sm:$0xff]
          %v2554 = vld [vmem:[#allocation5 + $0xb0] sm:$0xff]
          %v2555 = vld [vmem:[#allocation5 + $0xb8] sm:$0xff]
          %v2556 = vld [vmem:[#allocation5 + $0xc0] sm:$0xff]
          %v2557 = vld [vmem:[#allocation5 + $0xc8] sm:$0xff]
          %v2558 = vld [vmem:[#allocation5 + $0xd0] sm:$0xff]
          %v2559 = vld [vmem:[#allocation5 + $0xd8] sm:$0xff]
          %v2560 = vld [vmem:[#allocation5 + $0xe0] sm:$0xff]
          %v2561 = vld [vmem:[#allocation5 + $0xe8] sm:$0xff]
          %v2562 = vld [vmem:[#allocation5 + $0xf0] sm:$0xff]
          %v2563 = vld [vmem:[#allocation5 + $0xf8] sm:$0xff]
          %v2564 = vld [vmem:[#allocation11] sm:$0x1]
          %v2566 = vlaneseq
          %v2567 = vshrl.u32 %v2566, 7
          %v2568 = vsub.s32 0, %v2567
          %v2569 = vrot.slane %v2564, %v2568
          %v2571 = vadd.f32 %v2532, %v2569
          %v2572 = vadd.f32 %v2533, %v2569
          %v2573 = vadd.f32 %v2534, %v2569
          %v2574 = vadd.f32 %v2535, %v2569
          %v2575 = vadd.f32 %v2536, %v2569
          %v2576 = vadd.f32 %v2537, %v2569
          %v2577 = vadd.f32 %v2538, %v2569
          %v2578 = vadd.f32 %v2539, %v2569
          %v2579 = vadd.f32 %v2540, %v2569
          %v2580 = vadd.f32 %v2541, %v2569
          %v2581 = vadd.f32 %v2542, %v2569
          %v2582 = vadd.f32 %v2543, %v2569
          %v2583 = vadd.f32 %v2544, %v2569
          %v2584 = vadd.f32 %v2545, %v2569
          %v2585 = vadd.f32 %v2546, %v2569
          %v2586 = vadd.f32 %v2547, %v2569
          %v2587 = vadd.f32 %v2548, %v2569
          %v2588 = vadd.f32 %v2549, %v2569
          %v2589 = vadd.f32 %v2550, %v2569
          %v2590 = vadd.f32 %v2551, %v2569
          %v2591 = vadd.f32 %v2552, %v2569
          %v2592 = vadd.f32 %v2553, %v2569
          %v2593 = vadd.f32 %v2554, %v2569
          %v2594 = vadd.f32 %v2555, %v2569
          %v2595 = vadd.f32 %v2556, %v2569
          %v2596 = vadd.f32 %v2557, %v2569
          %v2597 = vadd.f32 %v2558, %v2569
          %v2598 = vadd.f32 %v2559, %v2569
          %v2599 = vadd.f32 %v2560, %v2569
          %v2600 = vadd.f32 %v2561, %v2569
          %v2601 = vadd.f32 %v2562, %v2569
          %v2602 = vadd.f32 %v2563, %v2569
          %2603 = vst [vmem:[%s220] sm:$0xff] %v2571
          %2604 = vst [vmem:[%s220 + $0x8] sm:$0xff] %v2572
          %2605 = vst [vmem:[%s220 + $0x10] sm:$0xff] %v2573
          %2606 = vst [vmem:[%s220 + $0x18] sm:$0xff] %v2574
          %2607 = vst [vmem:[%s220 + $0x20] sm:$0xff] %v2575
          %2608 = vst [vmem:[%s220 + $0x28] sm:$0xff] %v2576
          %2609 = vst [vmem:[%s220 + $0x30] sm:$0xff] %v2577
          %2610 = vst [vmem:[%s220 + $0x38] sm:$0xff] %v2578
          %2611 = vst [vmem:[%s220 + $0x40] sm:$0xff] %v2579
          %2612 = vst [vmem:[%s220 + $0x48] sm:$0xff] %v2580
          %2613 = vst [vmem:[%s220 + $0x50] sm:$0xff] %v2581
          %2614 = vst [vmem:[%s220 + $0x58] sm:$0xff] %v2582
          %2615 = vst [vmem:[%s220 + $0x60] sm:$0xff] %v2583
          %2616 = vst [vmem:[%s220 + $0x68] sm:$0xff] %v2584
          %2617 = vst [vmem:[%s220 + $0x70] sm:$0xff] %v2585
          %2618 = vst [vmem:[%s220 + $0x78] sm:$0xff] %v2586
          %2619 = vst [vmem:[%s220 + $0x80] sm:$0xff] %v2587
          %2620 = vst [vmem:[%s220 + $0x88] sm:$0xff] %v2588
          %2621 = vst [vmem:[%s220 + $0x90] sm:$0xff] %v2589
          %2622 = vst [vmem:[%s220 + $0x98] sm:$0xff] %v2590
          %2623 = vst [vmem:[%s220 + $0xa0] sm:$0xff] %v2591
          %2624 = vst [vmem:[%s220 + $0xa8] sm:$0xff] %v2592
          %2625 = vst [vmem:[%s220 + $0xb0] sm:$0xff] %v2593
          %2626 = vst [vmem:[%s220 + $0xb8] sm:$0xff] %v2594
          %2627 = vst [vmem:[%s220 + $0xc0] sm:$0xff] %v2595
          %2628 = vst [vmem:[%s220 + $0xc8] sm:$0xff] %v2596
          %2629 = vst [vmem:[%s220 + $0xd0] sm:$0xff] %v2597
          %2630 = vst [vmem:[%s220 + $0xd8] sm:$0xff] %v2598
          %2631 = vst [vmem:[%s220 + $0xe0] sm:$0xff] %v2599
          %2632 = vst [vmem:[%s220 + $0xe8] sm:$0xff] %v2600
          %2633 = vst [vmem:[%s220 + $0xf0] sm:$0xff] %v2601
          %2634 = vst [vmem:[%s220 + $0xf8] sm:$0xff] %v2602
        $region48: #{tpu_custom_call.1} parent=27 // pred_fallthru
          _
        %s2635 = sand.u32 %s118, 1
        %s2636 = scalar_lea.sflag [#allocation10], %s2635
        %s2637 = sand.u32 %s118, 1
        %s2638 = smul.addr %s2637, 256
        %s2639 = scalar_lea.vmem [#allocation13], %s2638
        // Predicated region
        $region49: #{tpu_custom_call.1} parent=27 // pred_check
          %p2640 = pneg %p128
        $region50: #{tpu_custom_call.1} parent=27 // pred_check_branch
          %2642 = sbr.rel (%p2640) target = $region52
        $region51: #{tpu_custom_call.1} parent=27 // pred_region
          %s2643 = smul.u32 16, %s33
          %s2645 = ssub.s32 4096, 4096
          %2646 = vsyncadd %s2636, %s2645
          %s2647 = smul.addr %s2643, 2
          %s2648 = sadd.s32 %s34, %s2647
          %s2649 = smul.addr %s32, 32
          %s2650 = sadd.s32 %s2648, %s2649
          %s2651 = smul.addr %s2650, 128
          %s2652 = scalar_lea.hbm %s4, %s2651
          %s2653 = sshll.u32 %s2639, 4
          %s2654 = int_to_ptr.vmem [resolvable:$true] %s2653
          %2659 = dma.vmem_to_hbm [thread:$0]  %s2654, 4096, %s2652, %s2636, 128, 128, 8
        $region52: #{tpu_custom_call.1} parent=27 // pred_fallthru
          _
      $region28: #{tpu_custom_call.1} parent=5 // pred_fallthru
        _
      %p2660 = scmp.le.s32.totalorder 2, %s21
      // Predicated region
      $region53: #{tpu_custom_call.1} parent=5 // pred_check
        %p2661 = pneg %p2660
      $region54: #{tpu_custom_call.1} parent=5 // pred_check_branch
        %2663 = sbr.rel (%p2661) target = $region56
      $region55: #{tpu_custom_call.1} parent=5 // pred_region
        %s2664 = ssub.s32 %s21, 2
        // Predicated region
        $region57: #{tpu_custom_call.1} parent=55 // pred_check
          %p2665 = pneg %p134
        $region58: #{tpu_custom_call.1} parent=55 // pred_check_branch
          %2667 = sbr.rel (%p2665) target = $region60
        $region59: #{tpu_custom_call.1} parent=55 // pred_region
          %s2668 = sand.u32 %s119, 1
          %s2669 = scalar_lea.sflag [#allocation10], %s2668
          %s2670 = sand.u32 %s119, 1
          %s2671 = smul.addr %s2670, 256
          %s2672 = scalar_lea.vmem [#allocation13], %s2671
          %2673 = dma.done %s2669, 4096
        $region60: #{tpu_custom_call.1} parent=55 // pred_fallthru
          _
      $region56: #{tpu_custom_call.1} parent=5 // pred_fallthru
        _
    $region6: #{tpu_custom_call.1} parent=1 // loop_footer
      %s25 = sadd.s32 1, %s21
    $region7: #{tpu_custom_call.1} parent=1 // loop_footer_branch
      %20 = sbr.rel target = $region3
    $region8: #{tpu_custom_call.1} parent=1 // loop_exit
      _
    %2674 = vsyncpa [#allocation9], 1
    %s2675 = scalar_lea.sflag [#allocation9], 1
    %2676 = vsyncpa %s2675, 1
    %2677 = vsyncpa [#allocation12], 1
    %2678 = vsyncpa [#allocation10], 1
    %s2679 = scalar_lea.sflag [#allocation10], 1
    %2680 = vsyncpa %s2679, 1
  %2681 = vsyncmov [#allocation3]
  %s2682 = vpop.sfrf %2681
  %p2683 = scmp.eq.s32.totalorder %s2682, 0
  %p2684 = pneg %p2683
  %2686 = shalt.err (%p2684)

</llo_original>
